<compile_context>
chip_gen: v7x
topology: tpu7x:2x2x1
jax: 0.10.0
libtpu: 0.0.40
codegen_flags: <defaults>
</compile_context>

<pallas_src>
import math
import functools

import numpy as np
import jax
import jax.numpy as jnp
from jax.experimental import pallas as pl
from jax.experimental.pallas import tpu as pltpu


# ---------------------------------------------------------------------------
# DFT matrix construction (host side, numpy).
# ---------------------------------------------------------------------------
def _make_kron_dft_mats(H, W, HF, WF, hs, ws, h0, w0, Ho, Wo, r0, c0, dtype):
    """Kronecker DFT matrices with zero-padding and both crops folded in.

    Forward  F[(h,w), (ph,pw)] = exp(-2j*pi*((h0+ph)*h/HF + (w0+pw)*w/WF))   (H*W, hs*ws)
    Inverse  G[(ph,pw), (i,j)] = exp(+2j*pi*(ph*(r0+i)/hs + pw*(c0+j)/ws))   (hs*ws, Ho*Wo)
    The 1/(hs*ws) ifft normalization is applied inside the kernel.
    """
    ph = np.arange(hs)
    pw = np.arange(ws)
    ang_fh = -2.0 * np.pi * np.outer(np.arange(H), h0 + ph) / HF          # (H, hs)
    ang_fw = -2.0 * np.pi * np.outer(np.arange(W), w0 + pw) / WF          # (W, ws)
    ang_f = (ang_fh[:, None, :, None] + ang_fw[None, :, None, :]).reshape(H * W, hs * ws)
    ang_gh = 2.0 * np.pi * np.outer(ph, r0 + np.arange(Ho)) / hs          # (hs, Ho)
    ang_gw = 2.0 * np.pi * np.outer(pw, c0 + np.arange(Wo)) / ws          # (ws, Wo)
    ang_g = (ang_gh[:, None, :, None] + ang_gw[None, :, None, :]).reshape(hs * ws, Ho * Wo)
    to = lambda a: jnp.asarray(a, dtype=dtype)
    return to(np.cos(ang_f)), to(np.sin(ang_f)), to(np.cos(ang_g)), to(np.sin(ang_g))


# ---------------------------------------------------------------------------
# Fused kernel: one grid step handles b_block batch elements for ALL scales.
# ---------------------------------------------------------------------------
def _multiscale_fourier_conv_kernel(x_ref, *refs, num_scales, C, b_block, inv_ns):
    f32 = jnp.float32
    scale_refs = refs[:7 * num_scales]
    out_refs = refs[7 * num_scales:]
    HW = x_ref.shape[-1]

    # One load of the input block, shared by every scale: (b_block*C, H*W).
    x2 = x_ref[...].reshape(b_block * C, HW)

    for si in range(num_scales):
        (wr_ref, wi_ref, fr_ref, fi_ref,
         gr_ref, gi_ref, bias_ref) = scale_refs[7 * si:7 * si + 7]
        out_ref = out_refs[si]

        P = fr_ref.shape[1]        # hs*ws (lane-dense)
        O = wr_ref.shape[1]
        HoWo = gr_ref.shape[1]

        # ---- forward cropped DFT: two lane-dense MXU matmuls, K = H*W ------
        xc_re = jnp.dot(x2, fr_ref[...], preferred_element_type=f32)     # (b*C, P)
        xc_im = jnp.dot(x2, fi_ref[...], preferred_element_type=f32)
        xc_re = xc_re.reshape(b_block, C, P)
        xc_im = xc_im.reshape(b_block, C, P)

        # ---- complex multiply with weights + channel reduction (VPU, f32) --
        # Accumulate over C with bounded live temporaries; never materializes
        # an (O, C, hs, ws) product.
        acc_re = jnp.zeros((b_block, O, P), f32)
        acc_im = jnp.zeros((b_block, O, P), f32)
        for c in range(C):         # static & small; see TODO for large C
            xr = xc_re[:, c:c + 1, :]                  # (b_block, 1, P)
            xi = xc_im[:, c:c + 1, :]
            wrc = wr_ref[c][None]                      # (1, O, P)
            wic = wi_ref[c][None]
            acc_re = acc_re + (xr * wrc - xi * wic)
            acc_im = acc_im + (xr * wic + xi * wrc)

        # ---- inverse cropped DFT, real part: two lane-dense MXU matmuls ----
        a_re = acc_re.reshape(b_block * O, P)
        a_im = acc_im.reshape(b_block * O, P)
        y = (jnp.dot(a_re, gr_ref[...], preferred_element_type=f32)
             - jnp.dot(a_im, gi_ref[...], preferred_element_type=f32)) * inv_ns[si]

        # ---- bias + single full-block, lane-dense store ---------------------
        y3 = y.reshape(b_block, O, HoWo)
        out_ref[...] = (y3 + bias_ref[...]).astype(out_ref.dtype)


def _padded_block_bytes(shape, dtype=jnp.float32):
    """Approximate VMEM bytes of one block after (8,128) tile padding."""
    s = list(shape)
    if len(s) >= 1:
        s[-1] = -(-s[-1] // 128) * 128
    if len(s) >= 2:
        s[-2] = -(-s[-2] // 8) * 8
    return int(np.prod(s)) * jnp.dtype(dtype).itemsize


def _multiscale_fourier_conv(x_flat, scale_inputs, out_channels, out_howo, inv_ns,
                             b_block):
    """One fused pallas_call for all scales.  x_flat: (B, C, H*W) f32."""
    B, C, HW = x_flat.shape
    assert B % b_block == 0
    G = B // b_block
    num_scales = len(scale_inputs)

    in_specs = [pl.BlockSpec((b_block, C, HW), lambda g: (g, 0, 0))]
    flat_in = [x_flat]
    for arrs in scale_inputs:
        for a in arrs:
            # full-array block + constant index -> fetched once, stays resident
            in_specs.append(pl.BlockSpec(a.shape, lambda g, nd=a.ndim: (0,) * nd))
            flat_in.append(a)

    out_specs, out_shape = [], []
    for O_s, HoWo_s in zip(out_channels, out_howo):
        out_specs.append(pl.BlockSpec((b_block, O_s, HoWo_s), lambda g: (g, 0, 0)))
        out_shape.append(jax.ShapeDtypeStruct((B, O_s, HoWo_s), jnp.float32))

    # Derive the VMEM limit from the actual (double-buffered) block footprints.
    est = 2 * _padded_block_bytes((b_block, C, HW))
    for arrs in scale_inputs:
        est += sum(2 * _padded_block_bytes(a.shape, a.dtype) for a in arrs)
    for O_s, HoWo_s in zip(out_channels, out_howo):
        est += 2 * _padded_block_bytes((b_block, O_s, HoWo_s))
    vmem_limit = int(min(max(est + (16 << 20), 32 << 20), 60 << 20))

    kernel = functools.partial(
        _multiscale_fourier_conv_kernel,
        num_scales=num_scales, C=C, b_block=b_block,
        inv_ns=tuple(float(v) for v in inv_ns))

    grid_spec = pltpu.PrefetchScalarGridSpec(
        num_scalar_prefetch=0,
        grid=(G,),
        in_specs=in_specs,
        out_specs=out_specs,
    )
    return pl.pallas_call(
        kernel,
        out_shape=tuple(out_shape),
        grid_spec=grid_spec,
        compiler_params=pltpu.CompilerParams(
            dimension_semantics=("parallel",),
            vmem_limit_bytes=vmem_limit,
        ),
    )(*flat_in)


# ---------------------------------------------------------------------------
# Module (parameter setup + glue), mirroring the PyTorch __init__ / forward.
# ---------------------------------------------------------------------------
class MultiscaleFourierConv2D:
    def __init__(self, in_channels, out_channels, in_shape, key,
                 stride=1, padding=True, bias=True, scale_factors=1,
                 reduce_channels=True, real_feats_mode='index'):
        out_channels = list(out_channels) if isinstance(out_channels, (list, tuple)) else [out_channels]
        scale_factors = list(scale_factors) if isinstance(scale_factors, (list, tuple)) else [scale_factors]
        in_shape = tuple(in_shape) if isinstance(in_shape, (list, tuple)) else (in_shape, in_shape)
        stride = tuple(stride) if isinstance(stride, (list, tuple)) else (stride, stride)
        assert stride == (1, 1), "stride != (1,1) not implemented"          # TODO(synk)
        assert reduce_channels, "reduce_channels=False not implemented"     # TODO(synk)
        assert real_feats_mode == 'index', "'abs' mode not implemented"     # TODO(synk)

        self.in_channels = in_channels
        self.out_channels = out_channels
        self.stride = stride
        self.padding = padding
        self.scale_factors = scale_factors
        H, W = in_shape
        self._img_shape = (H, W)
        if self.padding and self.stride == (1, 1):
            self.in_shape = (2 * H - 1, 2 * W - 1)
        else:
            self.in_shape = (H, W)
        HF, WF = self.in_shape
        self.out_shapes = [tuple(int(self.in_shape[d] / s) for d in range(2))
                           for s in self.scale_factors]

        # Deterministic init, same distribution as reset_parameters():
        # kaiming_uniform_(a=sqrt(5)) on (O, C, hs, ws, 2)
        #   -> U(-1/sqrt(fan_in), 1/sqrt(fan_in)), fan_in = C*hs*ws*2.
        self.weights = []
        self.biases = [] if bias else None
        self._scale_inputs, self._inv_ns = [], []
        self._out_howo, self._out_hw = [], []
        for scale_idx, s in enumerate(self.scale_factors):
            hs, ws = self.out_shapes[scale_idx]
            o = self.out_channels[scale_idx]
            fan_in = in_channels * hs * ws * 2
            bound = 1.0 / math.sqrt(fan_in)
            key, k_w, k_b = jax.random.split(key, 3)
            w = jax.random.uniform(k_w, (o, in_channels, hs, ws, 2),
                                   jnp.float32, -bound, bound)
            self.weights.append(w)
            # kernel layout: (C, O, hs*ws) -- lane-dense, c-major for the C loop
            w_re = jnp.transpose(w[..., 0], (1, 0, 2, 3)).reshape(in_channels, o, hs * ws)
            w_im = jnp.transpose(w[..., 1], (1, 0, 2, 3)).reshape(in_channels, o, hs * ws)
            if bias:
                b = jax.random.uniform(k_b, (o, 1, 1), jnp.float32, -bound, bound)
                self.biases.append(b)
                bias2 = b.reshape(o, 1)
            else:
                bias2 = jnp.zeros((o, 1), jnp.float32)

            # crop offsets in the (unshifted) Fourier plane  (see TODO above)
            h0, w0 = (HF - hs) // 2, (WF - ws) // 2
            if self.padding and self.stride == (1, 1):
                cl_h, cr_h = (HF - H) // 2, (HF - H + 1) // 2
                cl_w, cr_w = (WF - W) // 2, (WF - W + 1) // 2
                r0, c0 = cl_h, cl_w
                Ho, Wo = hs - cl_h - cr_h, ws - cl_w - cr_w
            else:
                r0 = c0 = 0
                Ho, Wo = hs, ws

            f_re, f_im, g_re, g_im = _make_kron_dft_mats(
                H, W, HF, WF, hs, ws, h0, w0, Ho, Wo, r0, c0, jnp.float32)
            self._scale_inputs.append((w_re, w_im, f_re, f_im, g_re, g_im, bias2))
            self._inv_ns.append(1.0 / (hs * ws))
            self._out_howo.append(Ho * Wo)
            self._out_hw.append((Ho, Wo))

    def __call__(self, im):
        B, C, H, W = im.shape
        assert (H, W) == self._img_shape and C == self.in_channels
        # Even 2-step parallel grid when possible (keeps both v7x TCs busy);
        # otherwise a single step with the full batch merged into the matmuls.
        b_block = B // 2 if (B % 2 == 0 and B >= 2) else B
        x_flat = im.reshape(B, C, H * W)
        outs = _multiscale_fourier_conv(
            x_flat, self._scale_inputs, self.out_channels, self._out_howo,
            self._inv_ns, b_block)
        feats = []
        for o_flat, (Ho, Wo) in zip(outs, self._out_hw):
            feats.append(o_flat.reshape(B, o_flat.shape[1], Ho, Wo))
        return feats


# ---------------------------------------------------------------------------
# Pure-JAX reference (jnp.fft) replicating the torch forward, for validation.
# ---------------------------------------------------------------------------
def reference_forward(module, im):
    B, C, H, W = im.shape
    fft_h, fft_w = H * 2 - 1, W * 2 - 1
    if module.padding:
        x = jnp.pad(im, ((0, 0), (0, 0), (0, fft_h - H), (0, fft_w - W)))
    else:
        x = im
    xf = jnp.fft.fft2(x.astype(jnp.complex64), axes=(-2, -1))
    HF, WF = xf.shape[-2:]
    feats = []
    for i, s in enumerate(module.scale_factors):
        hs, ws = module.out_shapes[i]
        h0, w0 = (HF - hs) // 2, (WF - ws) // 2
        xc = xf[:, :, h0:h0 + hs, w0:w0 + ws]
        wc = module.weights[i][..., 0] + 1j * module.weights[i][..., 1]
        ff = xc[:, None] * wc[None]                                   # (B,O,C,hs,ws)
        rf = jnp.real(jnp.fft.ifft2(ff, axes=(-2, -1)))
        if module.padding and module.stride == (1, 1):
            cl_h, cl_w = (fft_h - H) // 2, (fft_w - W) // 2
            cr_h, cr_w = (fft_h - H + 1) // 2, (fft_w - W + 1) // 2
            rf = rf[..., cl_h:hs - cr_h, cl_w:ws - cr_w]
        rf = rf.sum(2)
        if module.biases is not None:
            rf = rf + module.biases[i][None]
        feats.append(rf.astype(jnp.float32))
    return feats


if __name__ == "__main__":
    key = jax.random.PRNGKey(0)
    key, k_im, k_m1, k_m2 = jax.random.split(key, 4)

    B, C, H, W = 2, 4, 16, 16
    im = jax.random.normal(k_im, (B, C, H, W), dtype=jnp.float32)

    # Config 1: default-style padded Fourier convolution, single scale.
    m1 = MultiscaleFourierConv2D(C, [3], (H, W), k_m1,
                                 padding=True, bias=True, scale_factors=[1])
    out1 = m1(im)

    # Config 2: multiscale (padding=False), two output resolutions fused in one call.
    m2 = MultiscaleFourierConv2D(C, [3, 5], (H, W), k_m2,
                                 padding=False, bias=True, scale_factors=[1, 2])
    out2 = m2(im)

    outs = list(out1) + list(out2)
    for o in outs:
        jax.block_until_ready(o)

    refs = reference_forward(m1, im) + reference_forward(m2, im)
    expected_shapes = [(B, 3, H, W), (B, 3, H, W), (B, 5, H // 2, W // 2)]

    # Generous tolerances (kernel is f32 end-to-end; MXU matmul precision may
    # still differ slightly from jnp.fft's summation order).
    ok = True
    for o, r, es in zip(outs, refs, expected_shapes):
        if tuple(o.shape) != es or tuple(r.shape) != es:
            ok = False
        if not np.allclose(np.asarray(o), np.asarray(r), rtol=2e-2, atol=5e-3):
            ok = False

    if ok:
        print("KERNEL_OK")
    else:
        for o, r in zip(outs, refs):
            print("shape", o.shape, "max|diff|",
                  float(np.max(np.abs(np.asarray(o) - np.asarray(r)))))
</pallas_src>

<mosaic_0001>
module attributes {stable_mosaic.version = 11 : i64} {
  func.func @_multiscale_fourier_conv_kernel(%arg0: i32, %arg1: memref<1x4x256xf32, #tpu.memory_space<vmem>>, %arg2: memref<4x3x961xf32, #tpu.memory_space<vmem>>, %arg3: memref<4x3x961xf32, #tpu.memory_space<vmem>>, %arg4: memref<256x961xf32, #tpu.memory_space<vmem>>, %arg5: memref<256x961xf32, #tpu.memory_space<vmem>>, %arg6: memref<961x256xf32, #tpu.memory_space<vmem>>, %arg7: memref<961x256xf32, #tpu.memory_space<vmem>>, %arg8: memref<3x1xf32, #tpu.memory_space<vmem>>, %arg9: memref<1x3x256xf32, #tpu.memory_space<vmem>>) attributes {dimension_semantics = [#tpu.dimension_semantics<parallel>], iteration_bounds = array<i64: 2>, scalar_prefetch = 0 : i64, scratch_operands = 0 : i64, tpu.core_type = #tpu.core_type<tc>, window_params = [{transform_indices = @transform_0, window_bounds = array<i64: 1, 4, 256>}, {pipeline_mode = #tpu.pipeline_mode<synchronous>, transform_indices = @transform_1, window_bounds = array<i64: 4, 3, 961>}, {pipeline_mode = #tpu.pipeline_mode<synchronous>, transform_indices = @transform_2, window_bounds = array<i64: 4, 3, 961>}, {pipeline_mode = #tpu.pipeline_mode<synchronous>, transform_indices = @transform_3, window_bounds = array<i64: 256, 961>}, {pipeline_mode = #tpu.pipeline_mode<synchronous>, transform_indices = @transform_4, window_bounds = array<i64: 256, 961>}, {pipeline_mode = #tpu.pipeline_mode<synchronous>, transform_indices = @transform_5, window_bounds = array<i64: 961, 256>}, {pipeline_mode = #tpu.pipeline_mode<synchronous>, transform_indices = @transform_6, window_bounds = array<i64: 961, 256>}, {pipeline_mode = #tpu.pipeline_mode<synchronous>, transform_indices = @transform_7, window_bounds = array<i64: 3, 1>}, {transform_indices = @transform_8, window_bounds = array<i64: 1, 3, 256>}]} {
    %c0 = arith.constant 0 : index
    %c0_0 = arith.constant 0 : index
    %c0_1 = arith.constant 0 : index
    %0 = vector.load %arg1[%c0, %c0_0, %c0_1] : memref<1x4x256xf32, #tpu.memory_space<vmem>>, vector<1x4x256xf32>
    %1 = vector.shape_cast %0 : vector<1x4x256xf32> to vector<4x256xf32>
    %c0_2 = arith.constant 0 : index
    %c0_3 = arith.constant 0 : index
    %2 = vector.load %arg4[%c0_2, %c0_3] : memref<256x961xf32, #tpu.memory_space<vmem>>, vector<256x961xf32>
    %cst = arith.constant dense<0.000000e+00> : vector<4x961xf32>
    %3 = tpu.matmul %1, %2, %cst {dimension_numbers = #tpu.dot_dimension_numbers<[1], [0], [0], [1], [0, 0, 1, 1], [], []>} : vector<4x256xf32>, vector<256x961xf32>, vector<4x961xf32> -> vector<4x961xf32>
    %c0_4 = arith.constant 0 : index
    %c0_5 = arith.constant 0 : index
    %4 = vector.load %arg5[%c0_4, %c0_5] : memref<256x961xf32, #tpu.memory_space<vmem>>, vector<256x961xf32>
    %cst_6 = arith.constant dense<0.000000e+00> : vector<4x961xf32>
    %5 = tpu.matmul %1, %4, %cst_6 {dimension_numbers = #tpu.dot_dimension_numbers<[1], [0], [0], [1], [0, 0, 1, 1], [], []>} : vector<4x256xf32>, vector<256x961xf32>, vector<4x961xf32> -> vector<4x961xf32>
    %6 = vector.shape_cast %3 : vector<4x961xf32> to vector<1x4x961xf32>
    %7 = vector.shape_cast %5 : vector<4x961xf32> to vector<1x4x961xf32>
    %cst_7 = arith.constant 0.000000e+00 : f32
    %8 = vector.broadcast %cst_7 : f32 to vector<1x3x961xf32>
    %cst_8 = arith.constant 0.000000e+00 : f32
    %9 = vector.broadcast %cst_8 : f32 to vector<1x3x961xf32>
    %10 = vector.extract_strided_slice %6 {offsets = [0, 0, 0], sizes = [1, 1, 961], strides = [1, 1, 1]} : vector<1x4x961xf32> to vector<1x1x961xf32>
    %11 = vector.extract_strided_slice %7 {offsets = [0, 0, 0], sizes = [1, 1, 961], strides = [1, 1, 1]} : vector<1x4x961xf32> to vector<1x1x961xf32>
    %c0_9 = arith.constant 0 : index
    %c0_10 = arith.constant 0 : index
    %c0_11 = arith.constant 0 : index
    %12 = vector.load %arg2[%c0_9, %c0_10, %c0_11] : memref<4x3x961xf32, #tpu.memory_space<vmem>>, vector<1x3x961xf32>
    %13 = vector.shape_cast %12 : vector<1x3x961xf32> to vector<3x961xf32>
    %14 = vector.shape_cast %13 : vector<3x961xf32> to vector<1x3x961xf32>
    %c0_12 = arith.constant 0 : index
    %c0_13 = arith.constant 0 : index
    %c0_14 = arith.constant 0 : index
    %15 = vector.load %arg3[%c0_12, %c0_13, %c0_14] : memref<4x3x961xf32, #tpu.memory_space<vmem>>, vector<1x3x961xf32>
    %16 = vector.shape_cast %15 : vector<1x3x961xf32> to vector<3x961xf32>
    %17 = vector.shape_cast %16 : vector<3x961xf32> to vector<1x3x961xf32>
    %18 = vector.broadcast %10 : vector<1x1x961xf32> to vector<1x3x961xf32>
    %19 = arith.mulf %18, %14 : vector<1x3x961xf32>
    %20 = vector.broadcast %11 : vector<1x1x961xf32> to vector<1x3x961xf32>
    %21 = arith.mulf %20, %17 : vector<1x3x961xf32>
    %22 = arith.subf %19, %21 : vector<1x3x961xf32>
    %23 = arith.addf %8, %22 : vector<1x3x961xf32>
    %24 = vector.broadcast %10 : vector<1x1x961xf32> to vector<1x3x961xf32>
    %25 = arith.mulf %24, %17 : vector<1x3x961xf32>
    %26 = vector.broadcast %11 : vector<1x1x961xf32> to vector<1x3x961xf32>
    %27 = arith.mulf %26, %14 : vector<1x3x961xf32>
    %28 = arith.addf %25, %27 : vector<1x3x961xf32>
    %29 = arith.addf %9, %28 : vector<1x3x961xf32>
    %30 = vector.extract_strided_slice %6 {offsets = [0, 1, 0], sizes = [1, 1, 961], strides = [1, 1, 1]} : vector<1x4x961xf32> to vector<1x1x961xf32>
    %31 = vector.extract_strided_slice %7 {offsets = [0, 1, 0], sizes = [1, 1, 961], strides = [1, 1, 1]} : vector<1x4x961xf32> to vector<1x1x961xf32>
    %c1 = arith.constant 1 : index
    %c0_15 = arith.constant 0 : index
    %c0_16 = arith.constant 0 : index
    %32 = vector.load %arg2[%c1, %c0_15, %c0_16] : memref<4x3x961xf32, #tpu.memory_space<vmem>>, vector<1x3x961xf32>
    %33 = vector.shape_cast %32 : vector<1x3x961xf32> to vector<3x961xf32>
    %34 = vector.shape_cast %33 : vector<3x961xf32> to vector<1x3x961xf32>
    %c1_17 = arith.constant 1 : index
    %c0_18 = arith.constant 0 : index
    %c0_19 = arith.constant 0 : index
    %35 = vector.load %arg3[%c1_17, %c0_18, %c0_19] : memref<4x3x961xf32, #tpu.memory_space<vmem>>, vector<1x3x961xf32>
    %36 = vector.shape_cast %35 : vector<1x3x961xf32> to vector<3x961xf32>
    %37 = vector.shape_cast %36 : vector<3x961xf32> to vector<1x3x961xf32>
    %38 = vector.broadcast %30 : vector<1x1x961xf32> to vector<1x3x961xf32>
    %39 = arith.mulf %38, %34 : vector<1x3x961xf32>
    %40 = vector.broadcast %31 : vector<1x1x961xf32> to vector<1x3x961xf32>
    %41 = arith.mulf %40, %37 : vector<1x3x961xf32>
    %42 = arith.subf %39, %41 : vector<1x3x961xf32>
    %43 = arith.addf %23, %42 : vector<1x3x961xf32>
    %44 = vector.broadcast %30 : vector<1x1x961xf32> to vector<1x3x961xf32>
    %45 = arith.mulf %44, %37 : vector<1x3x961xf32>
    %46 = vector.broadcast %31 : vector<1x1x961xf32> to vector<1x3x961xf32>
    %47 = arith.mulf %46, %34 : vector<1x3x961xf32>
    %48 = arith.addf %45, %47 : vector<1x3x961xf32>
    %49 = arith.addf %29, %48 : vector<1x3x961xf32>
    %50 = vector.extract_strided_slice %6 {offsets = [0, 2, 0], sizes = [1, 1, 961], strides = [1, 1, 1]} : vector<1x4x961xf32> to vector<1x1x961xf32>
    %51 = vector.extract_strided_slice %7 {offsets = [0, 2, 0], sizes = [1, 1, 961], strides = [1, 1, 1]} : vector<1x4x961xf32> to vector<1x1x961xf32>
    %c2 = arith.constant 2 : index
    %c0_20 = arith.constant 0 : index
    %c0_21 = arith.constant 0 : index
    %52 = vector.load %arg2[%c2, %c0_20, %c0_21] : memref<4x3x961xf32, #tpu.memory_space<vmem>>, vector<1x3x961xf32>
    %53 = vector.shape_cast %52 : vector<1x3x961xf32> to vector<3x961xf32>
    %54 = vector.shape_cast %53 : vector<3x961xf32> to vector<1x3x961xf32>
    %c2_22 = arith.constant 2 : index
    %c0_23 = arith.constant 0 : index
    %c0_24 = arith.constant 0 : index
    %55 = vector.load %arg3[%c2_22, %c0_23, %c0_24] : memref<4x3x961xf32, #tpu.memory_space<vmem>>, vector<1x3x961xf32>
    %56 = vector.shape_cast %55 : vector<1x3x961xf32> to vector<3x961xf32>
    %57 = vector.shape_cast %56 : vector<3x961xf32> to vector<1x3x961xf32>
    %58 = vector.broadcast %50 : vector<1x1x961xf32> to vector<1x3x961xf32>
    %59 = arith.mulf %58, %54 : vector<1x3x961xf32>
    %60 = vector.broadcast %51 : vector<1x1x961xf32> to vector<1x3x961xf32>
    %61 = arith.mulf %60, %57 : vector<1x3x961xf32>
    %62 = arith.subf %59, %61 : vector<1x3x961xf32>
    %63 = arith.addf %43, %62 : vector<1x3x961xf32>
    %64 = vector.broadcast %50 : vector<1x1x961xf32> to vector<1x3x961xf32>
    %65 = arith.mulf %64, %57 : vector<1x3x961xf32>
    %66 = vector.broadcast %51 : vector<1x1x961xf32> to vector<1x3x961xf32>
    %67 = arith.mulf %66, %54 : vector<1x3x961xf32>
    %68 = arith.addf %65, %67 : vector<1x3x961xf32>
    %69 = arith.addf %49, %68 : vector<1x3x961xf32>
    %70 = vector.extract_strided_slice %6 {offsets = [0, 3, 0], sizes = [1, 1, 961], strides = [1, 1, 1]} : vector<1x4x961xf32> to vector<1x1x961xf32>
    %71 = vector.extract_strided_slice %7 {offsets = [0, 3, 0], sizes = [1, 1, 961], strides = [1, 1, 1]} : vector<1x4x961xf32> to vector<1x1x961xf32>
    %c3 = arith.constant 3 : index
    %c0_25 = arith.constant 0 : index
    %c0_26 = arith.constant 0 : index
    %72 = vector.load %arg2[%c3, %c0_25, %c0_26] : memref<4x3x961xf32, #tpu.memory_space<vmem>>, vector<1x3x961xf32>
    %73 = vector.shape_cast %72 : vector<1x3x961xf32> to vector<3x961xf32>
    %74 = vector.shape_cast %73 : vector<3x961xf32> to vector<1x3x961xf32>
    %c3_27 = arith.constant 3 : index
    %c0_28 = arith.constant 0 : index
    %c0_29 = arith.constant 0 : index
    %75 = vector.load %arg3[%c3_27, %c0_28, %c0_29] : memref<4x3x961xf32, #tpu.memory_space<vmem>>, vector<1x3x961xf32>
    %76 = vector.shape_cast %75 : vector<1x3x961xf32> to vector<3x961xf32>
    %77 = vector.shape_cast %76 : vector<3x961xf32> to vector<1x3x961xf32>
    %78 = vector.broadcast %70 : vector<1x1x961xf32> to vector<1x3x961xf32>
    %79 = arith.mulf %78, %74 : vector<1x3x961xf32>
    %80 = vector.broadcast %71 : vector<1x1x961xf32> to vector<1x3x961xf32>
    %81 = arith.mulf %80, %77 : vector<1x3x961xf32>
    %82 = arith.subf %79, %81 : vector<1x3x961xf32>
    %83 = arith.addf %63, %82 : vector<1x3x961xf32>
    %84 = vector.broadcast %70 : vector<1x1x961xf32> to vector<1x3x961xf32>
    %85 = arith.mulf %84, %77 : vector<1x3x961xf32>
    %86 = vector.broadcast %71 : vector<1x1x961xf32> to vector<1x3x961xf32>
    %87 = arith.mulf %86, %74 : vector<1x3x961xf32>
    %88 = arith.addf %85, %87 : vector<1x3x961xf32>
    %89 = arith.addf %69, %88 : vector<1x3x961xf32>
    %90 = vector.shape_cast %83 : vector<1x3x961xf32> to vector<3x961xf32>
    %91 = vector.shape_cast %89 : vector<1x3x961xf32> to vector<3x961xf32>
    %c0_30 = arith.constant 0 : index
    %c0_31 = arith.constant 0 : index
    %92 = vector.load %arg6[%c0_30, %c0_31] : memref<961x256xf32, #tpu.memory_space<vmem>>, vector<961x256xf32>
    %cst_32 = arith.constant dense<0.000000e+00> : vector<3x256xf32>
    %93 = tpu.matmul %90, %92, %cst_32 {dimension_numbers = #tpu.dot_dimension_numbers<[1], [0], [0], [1], [0, 0, 1, 1], [], []>} : vector<3x961xf32>, vector<961x256xf32>, vector<3x256xf32> -> vector<3x256xf32>
    %c0_33 = arith.constant 0 : index
    %c0_34 = arith.constant 0 : index
    %94 = vector.load %arg7[%c0_33, %c0_34] : memref<961x256xf32, #tpu.memory_space<vmem>>, vector<961x256xf32>
    %cst_35 = arith.constant dense<0.000000e+00> : vector<3x256xf32>
    %95 = tpu.matmul %91, %94, %cst_35 {dimension_numbers = #tpu.dot_dimension_numbers<[1], [0], [0], [1], [0, 0, 1, 1], [], []>} : vector<3x961xf32>, vector<961x256xf32>, vector<3x256xf32> -> vector<3x256xf32>
    %96 = arith.subf %93, %95 : vector<3x256xf32>
    %cst_36 = arith.constant 0.00104058278 : f32
    %97 = vector.broadcast %cst_36 : f32 to vector<3x256xf32>
    %98 = arith.mulf %96, %97 : vector<3x256xf32>
    %99 = vector.shape_cast %98 : vector<3x256xf32> to vector<1x3x256xf32>
    %c0_37 = arith.constant 0 : index
    %c0_38 = arith.constant 0 : index
    %100 = vector.load %arg8[%c0_37, %c0_38] : memref<3x1xf32, #tpu.memory_space<vmem>>, vector<3x1xf32>
    %101 = vector.shape_cast %100 : vector<3x1xf32> to vector<1x3x1xf32>
    %102 = vector.broadcast %101 : vector<1x3x1xf32> to vector<1x3x256xf32>
    %103 = arith.addf %99, %102 : vector<1x3x256xf32>
    %c0_39 = arith.constant 0 : index
    %c0_40 = arith.constant 0 : index
    %c0_41 = arith.constant 0 : index
    %104 = vector.load %arg9[%c0_39, %c0_40, %c0_41] : memref<1x3x256xf32, #tpu.memory_space<vmem>>, vector<1x3x256xf32>
    tpu.vector_store %arg9[%c0_39, %c0_40, %c0_41], %103 {strides = array<i32>} : memref<1x3x256xf32, #tpu.memory_space<vmem>>, vector<1x3x256xf32>,
    return
  }
  func.func @transform_0(%arg0: i32) -> (i32, i32, i32) {
    %c0_i32 = arith.constant 0 : i32
    %c0_i32_0 = arith.constant 0 : i32
    %c0_i32_1 = arith.constant 0 : i32
    return %arg0, %c0_i32, %c0_i32_0 : i32, i32, i32
  }
  func.func @transform_1(%arg0: i32) -> (i32, i32, i32) {
    %c0_i32 = arith.constant 0 : i32
    %c0_i32_0 = arith.constant 0 : i32
    %c0_i32_1 = arith.constant 0 : i32
    %c0_i32_2 = arith.constant 0 : i32
    return %c0_i32, %c0_i32_0, %c0_i32_1 : i32, i32, i32
  }
  func.func @transform_2(%arg0: i32) -> (i32, i32, i32) {
    %c0_i32 = arith.constant 0 : i32
    %c0_i32_0 = arith.constant 0 : i32
    %c0_i32_1 = arith.constant 0 : i32
    %c0_i32_2 = arith.constant 0 : i32
    return %c0_i32, %c0_i32_0, %c0_i32_1 : i32, i32, i32
  }
  func.func @transform_3(%arg0: i32) -> (i32, i32) {
    %c0_i32 = arith.constant 0 : i32
    %c0_i32_0 = arith.constant 0 : i32
    %c0_i32_1 = arith.constant 0 : i32
    return %c0_i32, %c0_i32_0 : i32, i32
  }
  func.func @transform_4(%arg0: i32) -> (i32, i32) {
    %c0_i32 = arith.constant 0 : i32
    %c0_i32_0 = arith.constant 0 : i32
    %c0_i32_1 = arith.constant 0 : i32
    return %c0_i32, %c0_i32_0 : i32, i32
  }
  func.func @transform_5(%arg0: i32) -> (i32, i32) {
    %c0_i32 = arith.constant 0 : i32
    %c0_i32_0 = arith.constant 0 : i32
    %c0_i32_1 = arith.constant 0 : i32
    return %c0_i32, %c0_i32_0 : i32, i32
  }
  func.func @transform_6(%arg0: i32) -> (i32, i32) {
    %c0_i32 = arith.constant 0 : i32
    %c0_i32_0 = arith.constant 0 : i32
    %c0_i32_1 = arith.constant 0 : i32
    return %c0_i32, %c0_i32_0 : i32, i32
  }
  func.func @transform_7(%arg0: i32) -> (i32, i32) {
    %c0_i32 = arith.constant 0 : i32
    %c0_i32_0 = arith.constant 0 : i32
    %c0_i32_1 = arith.constant 0 : i32
    return %c0_i32, %c0_i32_0 : i32, i32
  }
  func.func @transform_8(%arg0: i32) -> (i32, i32, i32) {
    %c0_i32 = arith.constant 0 : i32
    %c0_i32_0 = arith.constant 0 : i32
    %c0_i32_1 = arith.constant 0 : i32
    return %arg0, %c0_i32, %c0_i32_0 : i32, i32, i32
  }
}

</mosaic_0001>

<llo_original>
// kernel: tpu_custom_call.1
$region0: #{tpu_custom_call.1}
  #allocation0 [shape = 'u32[]', space=smem, size = 0x4, offset = 0x4, fixed_abs, tag = 'smem constant byte address 0x4 - core index']
  #allocation1 [shape = 'u32[144,128]{1,0:T(1,128)}', space=vmem, size = 0x12000, scoped, tag = 'internal scratch']
  %s0 = inlined_call_operand.vmem [shape: f32[2,4,256], index: 0, kind: input, shape index: {}]
  %s1 = inlined_call_operand.vmem [shape: f32[4,3,961], index: 1, kind: input, shape index: {}]
  %s2 = inlined_call_operand.vmem [shape: f32[4,3,961], index: 2, kind: input, shape index: {}]
  %s3 = inlined_call_operand.vmem [shape: f32[256,961], index: 3, kind: input, shape index: {}]
  %s4 = inlined_call_operand.vmem [shape: f32[256,961], index: 4, kind: input, shape index: {}]
  %s5 = inlined_call_operand.vmem [shape: f32[961,256], index: 5, kind: input, shape index: {}]
  %s6 = inlined_call_operand.vmem [shape: f32[961,256], index: 6, kind: input, shape index: {}]
  %s7 = inlined_call_operand.vmem [shape: f32[3,1], index: 7, kind: input, shape index: {}]
  %s8 = inlined_call_operand.vmem [shape: f32[2,3,256], index: 8, kind: output, shape index: {}]
  %s9 = sld [smem:[#allocation0]]
  $region65: #{tpu_custom_call.1} parent=0
    _
  %s11 = ssub.s32 1, %s9
  %s12 = scalar_select 0, %s11, %s9
  loop: start=0, step=1, limit=4
  $region2: #{tpu_custom_call.1} parent=0 // loop_pre_header
    _
  $region3: #{tpu_custom_call.1} parent=0 // loop_header
    %s14 = sphi 0, %s18
    %p15 = scmp.ge.s32.totalorder %s14, 4
    %s24 = sphi 0, %s26
    %s27 = sphi 0, %s24
    %s28 = sphi 0, %s27
    %s44 = sphi 0, %s28
    %s48 = sphi 0, %s48
    %s50 = sphi 0, %s48
    %s51 = sphi 0, %s50
    %s65 = sphi 0, %s51
    %s69 = sphi 0, %s69
    %s71 = sphi 0, %s69
    %s72 = sphi 0, %s71
    %s86 = sphi 0, %s72
    %s90 = sphi 0, %s90
    %s92 = sphi 0, %s90
    %s93 = sphi 0, %s92
    %s107 = sphi 0, %s93
    %s111 = sphi 0, %s111
    %s113 = sphi 0, %s111
    %s114 = sphi 0, %s113
    %s128 = sphi 0, %s114
    %s132 = sphi 0, %s132
    %s134 = sphi 0, %s132
    %s135 = sphi 0, %s134
    %s149 = sphi 0, %s135
    %s153 = sphi 0, %s153
    %s155 = sphi 0, %s153
    %s156 = sphi 0, %s155
    %s170 = sphi 0, %s156
    %s174 = sphi 0, %s174
    %s176 = sphi 0, %s174
    %s177 = sphi 0, %s176
    %s191 = sphi 0, %s177
    %s197 = sphi 0, %s199
    %s200 = sphi 0, %s197
    %s201 = sphi 0, %s200
    %s217 = sphi 0, %s201
  $region4: #{tpu_custom_call.1} parent=0 // loop_header_branch
    %17 = sbr.rel (%p15) target = $region8
  $region5: #{tpu_custom_call.1} parent=0 // loop_body
    %s19 = ssub.s32 %s14, 1
    %s20 = ssub.s32 %s14, 2
    %s21 = sadd.s32 %s14, 1
    %s22 = ssub.s32 %s14, %s21
    %p23 = scmp.eq.s32.totalorder %s22, 0
    %s25 = sadd.s32 %s24, 1
    %s26 = scalar_select %p23, %s24, %s25
    %p29 = pneg %p23
    %p30 = scmp.eq.s32.totalorder %s14, 1
    %p31 = por %p29, %p30
    %p32 = scmp.ne.s32.totalorder %s24, %s27
    %p33 = scmp.eq.s32.totalorder %s14, 0
    %p34 = por %p32, %p33
    %p35 = scmp.ne.s32.totalorder %s24, %s27
    %p36 = scmp.eq.s32.totalorder %s19, 1
    %p37 = por %p35, %p36
    %p38 = scmp.ne.s32.totalorder %s27, %s28
    %p39 = scmp.eq.s32.totalorder %s19, 0
    %p40 = por %p38, %p39
    %p41 = scmp.ne.s32.totalorder %s27, %s28
    %p42 = scmp.eq.s32.totalorder %s20, 1
    %p43 = por %p41, %p42
    %p45 = scmp.ne.s32.totalorder %s28, %s44
    %p46 = scmp.eq.s32.totalorder %s20, 0
    %p47 = por %p45, %p46
    %s49 = sadd.s32 %s48, 1
    %p52 = scmp.eq.s32.totalorder %s14, 1
    %p53 = scmp.ne.s32.totalorder %s48, %s50
    %p54 = scmp.eq.s32.totalorder %s14, 0
    %p55 = por %p53, %p54
    %p56 = scmp.ne.s32.totalorder %s48, %s50
    %p57 = scmp.eq.s32.totalorder %s19, 1
    %p58 = por %p56, %p57
    %p59 = scmp.ne.s32.totalorder %s50, %s51
    %p60 = scmp.eq.s32.totalorder %s19, 0
    %p61 = por %p59, %p60
    %p62 = scmp.ne.s32.totalorder %s50, %s51
    %p63 = scmp.eq.s32.totalorder %s20, 1
    %p64 = por %p62, %p63
    %p66 = scmp.ne.s32.totalorder %s51, %s65
    %p67 = scmp.eq.s32.totalorder %s20, 0
    %p68 = por %p66, %p67
    %s70 = sadd.s32 %s69, 1
    %p73 = scmp.eq.s32.totalorder %s14, 1
    %p74 = scmp.ne.s32.totalorder %s69, %s71
    %p75 = scmp.eq.s32.totalorder %s14, 0
    %p76 = por %p74, %p75
    %p77 = scmp.ne.s32.totalorder %s69, %s71
    %p78 = scmp.eq.s32.totalorder %s19, 1
    %p79 = por %p77, %p78
    %p80 = scmp.ne.s32.totalorder %s71, %s72
    %p81 = scmp.eq.s32.totalorder %s19, 0
    %p82 = por %p80, %p81
    %p83 = scmp.ne.s32.totalorder %s71, %s72
    %p84 = scmp.eq.s32.totalorder %s20, 1
    %p85 = por %p83, %p84
    %p87 = scmp.ne.s32.totalorder %s72, %s86
    %p88 = scmp.eq.s32.totalorder %s20, 0
    %p89 = por %p87, %p88
    %s91 = sadd.s32 %s90, 1
    %p94 = scmp.eq.s32.totalorder %s14, 1
    %p95 = scmp.ne.s32.totalorder %s90, %s92
    %p96 = scmp.eq.s32.totalorder %s14, 0
    %p97 = por %p95, %p96
    %p98 = scmp.ne.s32.totalorder %s90, %s92
    %p99 = scmp.eq.s32.totalorder %s19, 1
    %p100 = por %p98, %p99
    %p101 = scmp.ne.s32.totalorder %s92, %s93
    %p102 = scmp.eq.s32.totalorder %s19, 0
    %p103 = por %p101, %p102
    %p104 = scmp.ne.s32.totalorder %s92, %s93
    %p105 = scmp.eq.s32.totalorder %s20, 1
    %p106 = por %p104, %p105
    %p108 = scmp.ne.s32.totalorder %s93, %s107
    %p109 = scmp.eq.s32.totalorder %s20, 0
    %p110 = por %p108, %p109
    %s112 = sadd.s32 %s111, 1
    %p115 = scmp.eq.s32.totalorder %s14, 1
    %p116 = scmp.ne.s32.totalorder %s111, %s113
    %p117 = scmp.eq.s32.totalorder %s14, 0
    %p118 = por %p116, %p117
    %p119 = scmp.ne.s32.totalorder %s111, %s113
    %p120 = scmp.eq.s32.totalorder %s19, 1
    %p121 = por %p119, %p120
    %p122 = scmp.ne.s32.totalorder %s113, %s114
    %p123 = scmp.eq.s32.totalorder %s19, 0
    %p124 = por %p122, %p123
    %p125 = scmp.ne.s32.totalorder %s113, %s114
    %p126 = scmp.eq.s32.totalorder %s20, 1
    %p127 = por %p125, %p126
    %p129 = scmp.ne.s32.totalorder %s114, %s128
    %p130 = scmp.eq.s32.totalorder %s20, 0
    %p131 = por %p129, %p130
    %s133 = sadd.s32 %s132, 1
    %p136 = scmp.eq.s32.totalorder %s14, 1
    %p137 = scmp.ne.s32.totalorder %s132, %s134
    %p138 = scmp.eq.s32.totalorder %s14, 0
    %p139 = por %p137, %p138
    %p140 = scmp.ne.s32.totalorder %s132, %s134
    %p141 = scmp.eq.s32.totalorder %s19, 1
    %p142 = por %p140, %p141
    %p143 = scmp.ne.s32.totalorder %s134, %s135
    %p144 = scmp.eq.s32.totalorder %s19, 0
    %p145 = por %p143, %p144
    %p146 = scmp.ne.s32.totalorder %s134, %s135
    %p147 = scmp.eq.s32.totalorder %s20, 1
    %p148 = por %p146, %p147
    %p150 = scmp.ne.s32.totalorder %s135, %s149
    %p151 = scmp.eq.s32.totalorder %s20, 0
    %p152 = por %p150, %p151
    %s154 = sadd.s32 %s153, 1
    %p157 = scmp.eq.s32.totalorder %s14, 1
    %p158 = scmp.ne.s32.totalorder %s153, %s155
    %p159 = scmp.eq.s32.totalorder %s14, 0
    %p160 = por %p158, %p159
    %p161 = scmp.ne.s32.totalorder %s153, %s155
    %p162 = scmp.eq.s32.totalorder %s19, 1
    %p163 = por %p161, %p162
    %p164 = scmp.ne.s32.totalorder %s155, %s156
    %p165 = scmp.eq.s32.totalorder %s19, 0
    %p166 = por %p164, %p165
    %p167 = scmp.ne.s32.totalorder %s155, %s156
    %p168 = scmp.eq.s32.totalorder %s20, 1
    %p169 = por %p167, %p168
    %p171 = scmp.ne.s32.totalorder %s156, %s170
    %p172 = scmp.eq.s32.totalorder %s20, 0
    %p173 = por %p171, %p172
    %s175 = sadd.s32 %s174, 1
    %p178 = scmp.eq.s32.totalorder %s14, 1
    %p179 = scmp.ne.s32.totalorder %s174, %s176
    %p180 = scmp.eq.s32.totalorder %s14, 0
    %p181 = por %p179, %p180
    %p182 = scmp.ne.s32.totalorder %s174, %s176
    %p183 = scmp.eq.s32.totalorder %s19, 1
    %p184 = por %p182, %p183
    %p185 = scmp.ne.s32.totalorder %s176, %s177
    %p186 = scmp.eq.s32.totalorder %s19, 0
    %p187 = por %p185, %p186
    %p188 = scmp.ne.s32.totalorder %s176, %s177
    %p189 = scmp.eq.s32.totalorder %s20, 1
    %p190 = por %p188, %p189
    %p192 = scmp.ne.s32.totalorder %s177, %s191
    %p193 = scmp.eq.s32.totalorder %s20, 0
    %p194 = por %p192, %p193
    %s195 = ssub.s32 %s14, %s21
    %p196 = scmp.eq.s32.totalorder %s195, 0
    %s198 = sadd.s32 %s197, 1
    %s199 = scalar_select %p196, %s197, %s198
    %p202 = pneg %p196
    %p203 = scmp.eq.s32.totalorder %s14, 1
    %p204 = por %p202, %p203
    %p205 = scmp.ne.s32.totalorder %s197, %s200
    %p206 = scmp.eq.s32.totalorder %s14, 0
    %p207 = por %p205, %p206
    %p208 = scmp.ne.s32.totalorder %s197, %s200
    %p209 = scmp.eq.s32.totalorder %s19, 1
    %p210 = por %p208, %p209
    %p211 = scmp.ne.s32.totalorder %s200, %s201
    %p212 = scmp.eq.s32.totalorder %s19, 0
    %p213 = por %p211, %p212
    %p214 = scmp.ne.s32.totalorder %s200, %s201
    %p215 = scmp.eq.s32.totalorder %s20, 1
    %p216 = por %p214, %p215
    %p218 = scmp.ne.s32.totalorder %s201, %s217
    %p219 = scmp.eq.s32.totalorder %s20, 0
    %p220 = por %p218, %p219
    %p221 = scmp.le.s32.totalorder 1, %s14
    %p222 = scmp.lt.s32.totalorder %s14, 3
    %p223 = pnand %p221, %p222
    %p224 = pneg %p223
    // Predicated region
    $region9: #{tpu_custom_call.1} parent=5 // pred_check
      _
    $region10: #{tpu_custom_call.1} parent=5 // pred_check_branch
      %226 = sbr.rel (%p223) target = $region12
    $region11: #{tpu_custom_call.1} parent=5 // pred_region
      %s227 = ssub.s32 %s14, 1
      // Predicated region
      $region13: #{tpu_custom_call.1} parent=11 // pred_check
        %p228 = pneg %p61
      $region14: #{tpu_custom_call.1} parent=11 // pred_check_branch
        %230 = sbr.rel (%p228) target = $region16
      $region15: #{tpu_custom_call.1} parent=11 // pred_region
        _
      $region16: #{tpu_custom_call.1} parent=11 // pred_fallthru
        _
      // Predicated region
      $region17: #{tpu_custom_call.1} parent=11 // pred_check
        %p231 = pneg %p82
      $region18: #{tpu_custom_call.1} parent=11 // pred_check_branch
        %233 = sbr.rel (%p231) target = $region20
      $region19: #{tpu_custom_call.1} parent=11 // pred_region
        _
      $region20: #{tpu_custom_call.1} parent=11 // pred_fallthru
        _
      // Predicated region
      $region21: #{tpu_custom_call.1} parent=11 // pred_check
        %p234 = pneg %p103
      $region22: #{tpu_custom_call.1} parent=11 // pred_check_branch
        %236 = sbr.rel (%p234) target = $region24
      $region23: #{tpu_custom_call.1} parent=11 // pred_region
        _
      $region24: #{tpu_custom_call.1} parent=11 // pred_fallthru
        _
      // Predicated region
      $region25: #{tpu_custom_call.1} parent=11 // pred_check
        %p237 = pneg %p124
      $region26: #{tpu_custom_call.1} parent=11 // pred_check_branch
        %239 = sbr.rel (%p237) target = $region28
      $region27: #{tpu_custom_call.1} parent=11 // pred_region
        _
      $region28: #{tpu_custom_call.1} parent=11 // pred_fallthru
        _
      // Predicated region
      $region29: #{tpu_custom_call.1} parent=11 // pred_check
        %p240 = pneg %p145
      $region30: #{tpu_custom_call.1} parent=11 // pred_check_branch
        %242 = sbr.rel (%p240) target = $region32
      $region31: #{tpu_custom_call.1} parent=11 // pred_region
        _
      $region32: #{tpu_custom_call.1} parent=11 // pred_fallthru
        _
      // Predicated region
      $region33: #{tpu_custom_call.1} parent=11 // pred_check
        %p243 = pneg %p166
      $region34: #{tpu_custom_call.1} parent=11 // pred_check_branch
        %245 = sbr.rel (%p243) target = $region36
      $region35: #{tpu_custom_call.1} parent=11 // pred_region
        _
      $region36: #{tpu_custom_call.1} parent=11 // pred_fallthru
        _
      // Predicated region
      $region37: #{tpu_custom_call.1} parent=11 // pred_check
        %p246 = pneg %p187
      $region38: #{tpu_custom_call.1} parent=11 // pred_check_branch
        %248 = sbr.rel (%p246) target = $region40
      $region39: #{tpu_custom_call.1} parent=11 // pred_region
        _
      $region40: #{tpu_custom_call.1} parent=11 // pred_fallthru
        _
    $region12: #{tpu_custom_call.1} parent=5 // pred_fallthru
      _
    %p249 = scmp.lt.s32.totalorder %s14, 2
    // Predicated region
    $region41: #{tpu_custom_call.1} parent=5 // pred_check
      %p250 = pneg %p249
    $region42: #{tpu_custom_call.1} parent=5 // pred_check_branch
      %252 = sbr.rel (%p250) target = $region44
    $region43: #{tpu_custom_call.1} parent=5 // pred_region
      // Predicated region
      $region45: #{tpu_custom_call.1} parent=43 // pred_check
        %p253 = pneg %p34
      $region46: #{tpu_custom_call.1} parent=43 // pred_check_branch
        %255 = sbr.rel (%p253) target = $region48
      $region47: #{tpu_custom_call.1} parent=43 // pred_region
        %p256 = scmp.lt.s32.totalorder %s14, 1
        %s257 = scalar_select %p256, %s14, 1
        %s258 = smul.addr %s257, 2
        %s259 = smul.addr %s258, 4
        %s260 = scalar_lea.vmem %s0, %s259
      $region48: #{tpu_custom_call.1} parent=43 // pred_fallthru
        _
    $region44: #{tpu_custom_call.1} parent=5 // pred_fallthru
      _
    %p261 = scmp.le.s32.totalorder 1, %s14
    %p262 = scmp.lt.s32.totalorder %s14, 3
    %p263 = pnand %p261, %p262
    %p264 = pneg %p263
    // Predicated region
    $region49: #{tpu_custom_call.1} parent=5 // pred_check
      _
    $region50: #{tpu_custom_call.1} parent=5 // pred_check_branch
      %266 = sbr.rel (%p263) target = $region52
    $region51: #{tpu_custom_call.1} parent=5 // pred_region
      %s267 = ssub.s32 %s14, 1
      %p268 = scmp.lt.s32.totalorder %s19, 1
      %s269 = scalar_select %p268, %s19, 1
      %s270 = smul.addr %s269, 2
      %s271 = smul.addr %s270, 4
      %s272 = scalar_lea.vmem %s0, %s271
      %p273 = pneg %p40
      %p274 = pneg %p37
      %p275 = pneg %p61
      %p276 = pneg %p58
      %p277 = pneg %p82
      %p278 = pneg %p79
      %p279 = pneg %p103
      %p280 = pneg %p100
      %p281 = pneg %p124
      %p282 = pneg %p121
      %p283 = pneg %p145
      %p284 = pneg %p142
      %p285 = pneg %p166
      %p286 = pneg %p163
      %p287 = pneg %p187
      %p288 = pneg %p184
      %p289 = pneg %p213
      %p290 = pneg %p210
      %p291 = scmp.lt.s32.totalorder %s19, 1
      %s292 = scalar_select %p291, %s19, 1
      %s293 = smul.addr %s292, 2
      %s294 = smul.addr %s293, 4
      %s295 = scalar_lea.vmem %s8, %s294
      %p296 = scmp.lt.s32.totalorder %s19, 1
      %s297 = scalar_select %p296, %s19, 1
      %s298 = smul.addr %s297, 2
      %s299 = smul.addr %s298, 4
      %s300 = scalar_lea.vmem %s0, %s299
      %p301 = scmp.lt.s32.totalorder %s19, 1
      %s302 = scalar_select %p301, %s19, 1
      %s303 = smul.addr %s302, 2
      %s304 = smul.addr %s303, 4
      %s305 = scalar_lea.vmem %s8, %s304
      %v306 = vld [vmem:[%s300] sm:$0xff]
      %v307 = vld [vmem:[%s3] sm:$0xff]
      %v308 = vld [vmem:[%s3 + $0x8] sm:$0xff]
      %v309 = vld [vmem:[%s3 + $0x10] sm:$0xff]
      %v310 = vld [vmem:[%s3 + $0x18] sm:$0xff]
      %v311 = vld [vmem:[%s3 + $0x20] sm:$0xff]
      %v312 = vld [vmem:[%s3 + $0x28] sm:$0xff]
      %v313 = vld [vmem:[%s3 + $0x30] sm:$0xff]
      %v314 = vld [vmem:[%s3 + $0x38] sm:$0xff]
      %v315 = vld [vmem:[%s3 + $0x40] sm:$0xff]
      %v316 = vld [vmem:[%s3 + $0x48] sm:$0xff]
      %v317 = vld [vmem:[%s3 + $0x50] sm:$0xff]
      %v318 = vld [vmem:[%s3 + $0x58] sm:$0xff]
      %v319 = vld [vmem:[%s3 + $0x60] sm:$0xff]
      %v320 = vld [vmem:[%s3 + $0x68] sm:$0xff]
      %v321 = vld [vmem:[%s3 + $0x70] sm:$0xff]
      %v322 = vld [vmem:[%s3 + $0x78] sm:$0xff]
      %v323 = vld [vmem:[%s3 + $0x80] sm:$0xff]
      %v324 = vld [vmem:[%s3 + $0x88] sm:$0xff]
      %v325 = vld [vmem:[%s3 + $0x90] sm:$0xff]
      %v326 = vld [vmem:[%s3 + $0x98] sm:$0xff]
      %v327 = vld [vmem:[%s3 + $0xa0] sm:$0xff]
      %v328 = vld [vmem:[%s3 + $0xa8] sm:$0xff]
      %v329 = vld [vmem:[%s3 + $0xb0] sm:$0xff]
      %v330 = vld [vmem:[%s3 + $0xb8] sm:$0xff]
      %v331 = vld [vmem:[%s3 + $0xc0] sm:$0xff]
      %v332 = vld [vmem:[%s3 + $0xc8] sm:$0xff]
      %v333 = vld [vmem:[%s3 + $0xd0] sm:$0xff]
      %v334 = vld [vmem:[%s3 + $0xd8] sm:$0xff]
      %v335 = vld [vmem:[%s3 + $0xe0] sm:$0xff]
      %v336 = vld [vmem:[%s3 + $0xe8] sm:$0xff]
      %v337 = vld [vmem:[%s3 + $0xf0] sm:$0xff]
      %v338 = vld [vmem:[%s3 + $0xf8] sm:$0xff]
      %v339 = vld [vmem:[%s3 + $0x100] sm:$0xff]
      %v340 = vld [vmem:[%s3 + $0x108] sm:$0xff]
      %v341 = vld [vmem:[%s3 + $0x110] sm:$0xff]
      %v342 = vld [vmem:[%s3 + $0x118] sm:$0xff]
      %v343 = vld [vmem:[%s3 + $0x120] sm:$0xff]
      %v344 = vld [vmem:[%s3 + $0x128] sm:$0xff]
      %v345 = vld [vmem:[%s3 + $0x130] sm:$0xff]
      %v346 = vld [vmem:[%s3 + $0x138] sm:$0xff]
      %v347 = vld [vmem:[%s3 + $0x140] sm:$0xff]
      %v348 = vld [vmem:[%s3 + $0x148] sm:$0xff]
      %v349 = vld [vmem:[%s3 + $0x150] sm:$0xff]
      %v350 = vld [vmem:[%s3 + $0x158] sm:$0xff]
      %v351 = vld [vmem:[%s3 + $0x160] sm:$0xff]
      %v352 = vld [vmem:[%s3 + $0x168] sm:$0xff]
      %v353 = vld [vmem:[%s3 + $0x170] sm:$0xff]
      %v354 = vld [vmem:[%s3 + $0x178] sm:$0xff]
      %v355 = vld [vmem:[%s3 + $0x180] sm:$0xff]
      %v356 = vld [vmem:[%s3 + $0x188] sm:$0xff]
      %v357 = vld [vmem:[%s3 + $0x190] sm:$0xff]
      %v358 = vld [vmem:[%s3 + $0x198] sm:$0xff]
      %v359 = vld [vmem:[%s3 + $0x1a0] sm:$0xff]
      %v360 = vld [vmem:[%s3 + $0x1a8] sm:$0xff]
      %v361 = vld [vmem:[%s3 + $0x1b0] sm:$0xff]
      %v362 = vld [vmem:[%s3 + $0x1b8] sm:$0xff]
      %v363 = vld [vmem:[%s3 + $0x1c0] sm:$0xff]
      %v364 = vld [vmem:[%s3 + $0x1c8] sm:$0xff]
      %v365 = vld [vmem:[%s3 + $0x1d0] sm:$0xff]
      %v366 = vld [vmem:[%s3 + $0x1d8] sm:$0xff]
      %v367 = vld [vmem:[%s3 + $0x1e0] sm:$0xff]
      %v368 = vld [vmem:[%s3 + $0x1e8] sm:$0xff]
      %v369 = vld [vmem:[%s3 + $0x1f0] sm:$0xff]
      %v370 = vld [vmem:[%s3 + $0x1f8] sm:$0xff]
      %v371 = vld [vmem:[%s3 + $0x200] sm:$0xff]
      %v372 = vld [vmem:[%s3 + $0x208] sm:$0xff]
      %v373 = vld [vmem:[%s3 + $0x210] sm:$0xff]
      %v374 = vld [vmem:[%s3 + $0x218] sm:$0xff]
      %v375 = vld [vmem:[%s3 + $0x220] sm:$0xff]
      %v376 = vld [vmem:[%s3 + $0x228] sm:$0xff]
      %v377 = vld [vmem:[%s3 + $0x230] sm:$0xff]
      %v378 = vld [vmem:[%s3 + $0x238] sm:$0xff]
      %v379 = vld [vmem:[%s3 + $0x240] sm:$0xff]
      %v380 = vld [vmem:[%s3 + $0x248] sm:$0xff]
      %v381 = vld [vmem:[%s3 + $0x250] sm:$0xff]
      %v382 = vld [vmem:[%s3 + $0x258] sm:$0xff]
      %v383 = vld [vmem:[%s3 + $0x260] sm:$0xff]
      %v384 = vld [vmem:[%s3 + $0x268] sm:$0xff]
      %v385 = vld [vmem:[%s3 + $0x270] sm:$0xff]
      %v386 = vld [vmem:[%s3 + $0x278] sm:$0xff]
      %v387 = vld [vmem:[%s3 + $0x280] sm:$0xff]
      %v388 = vld [vmem:[%s3 + $0x288] sm:$0xff]
      %v389 = vld [vmem:[%s3 + $0x290] sm:$0xff]
      %v390 = vld [vmem:[%s3 + $0x298] sm:$0xff]
      %v391 = vld [vmem:[%s3 + $0x2a0] sm:$0xff]
      %v392 = vld [vmem:[%s3 + $0x2a8] sm:$0xff]
      %v393 = vld [vmem:[%s3 + $0x2b0] sm:$0xff]
      %v394 = vld [vmem:[%s3 + $0x2b8] sm:$0xff]
      %v395 = vld [vmem:[%s3 + $0x2c0] sm:$0xff]
      %v396 = vld [vmem:[%s3 + $0x2c8] sm:$0xff]
      %v397 = vld [vmem:[%s3 + $0x2d0] sm:$0xff]
      %v398 = vld [vmem:[%s3 + $0x2d8] sm:$0xff]
      %v399 = vld [vmem:[%s3 + $0x2e0] sm:$0xff]
      %v400 = vld [vmem:[%s3 + $0x2e8] sm:$0xff]
      %v401 = vld [vmem:[%s3 + $0x2f0] sm:$0xff]
      %v402 = vld [vmem:[%s3 + $0x2f8] sm:$0xff]
      %v403 = vld [vmem:[%s3 + $0x300] sm:$0xff]
      %v404 = vld [vmem:[%s3 + $0x308] sm:$0xff]
      %v405 = vld [vmem:[%s3 + $0x310] sm:$0xff]
      %v406 = vld [vmem:[%s3 + $0x318] sm:$0xff]
      %v407 = vld [vmem:[%s3 + $0x320] sm:$0xff]
      %v408 = vld [vmem:[%s3 + $0x328] sm:$0xff]
      %v409 = vld [vmem:[%s3 + $0x330] sm:$0xff]
      %v410 = vld [vmem:[%s3 + $0x338] sm:$0xff]
      %v411 = vld [vmem:[%s3 + $0x340] sm:$0xff]
      %v412 = vld [vmem:[%s3 + $0x348] sm:$0xff]
      %v413 = vld [vmem:[%s3 + $0x350] sm:$0xff]
      %v414 = vld [vmem:[%s3 + $0x358] sm:$0xff]
      %v415 = vld [vmem:[%s3 + $0x360] sm:$0xff]
      %v416 = vld [vmem:[%s3 + $0x368] sm:$0xff]
      %v417 = vld [vmem:[%s3 + $0x370] sm:$0xff]
      %v418 = vld [vmem:[%s3 + $0x378] sm:$0xff]
      %v419 = vld [vmem:[%s3 + $0x380] sm:$0xff]
      %v420 = vld [vmem:[%s3 + $0x388] sm:$0xff]
      %v421 = vld [vmem:[%s3 + $0x390] sm:$0xff]
      %v422 = vld [vmem:[%s3 + $0x398] sm:$0xff]
      %v423 = vld [vmem:[%s3 + $0x3a0] sm:$0xff]
      %v424 = vld [vmem:[%s3 + $0x3a8] sm:$0xff]
      %v425 = vld [vmem:[%s3 + $0x3b0] sm:$0xff]
      %v426 = vld [vmem:[%s3 + $0x3b8] sm:$0xff]
      %v427 = vld [vmem:[%s3 + $0x3c0] sm:$0xff]
      %v428 = vld [vmem:[%s3 + $0x3c8] sm:$0xff]
      %v429 = vld [vmem:[%s3 + $0x3d0] sm:$0xff]
      %v430 = vld [vmem:[%s3 + $0x3d8] sm:$0xff]
      %v431 = vld [vmem:[%s3 + $0x3e0] sm:$0xff]
      %v432 = vld [vmem:[%s3 + $0x3e8] sm:$0xff]
      %v433 = vld [vmem:[%s3 + $0x3f0] sm:$0xff]
      %v434 = vld [vmem:[%s3 + $0x3f8] sm:$0xff]
      %v435 = vld [vmem:[%s3 + $0x400] sm:$0xff]
      %v436 = vld [vmem:[%s3 + $0x408] sm:$0xff]
      %v437 = vld [vmem:[%s3 + $0x410] sm:$0xff]
      %v438 = vld [vmem:[%s3 + $0x418] sm:$0xff]
      %v439 = vld [vmem:[%s3 + $0x420] sm:$0xff]
      %v440 = vld [vmem:[%s3 + $0x428] sm:$0xff]
      %v441 = vld [vmem:[%s3 + $0x430] sm:$0xff]
      %v442 = vld [vmem:[%s3 + $0x438] sm:$0xff]
      %v443 = vld [vmem:[%s3 + $0x440] sm:$0xff]
      %v444 = vld [vmem:[%s3 + $0x448] sm:$0xff]
      %v445 = vld [vmem:[%s3 + $0x450] sm:$0xff]
      %v446 = vld [vmem:[%s3 + $0x458] sm:$0xff]
      %v447 = vld [vmem:[%s3 + $0x460] sm:$0xff]
      %v448 = vld [vmem:[%s3 + $0x468] sm:$0xff]
      %v449 = vld [vmem:[%s3 + $0x470] sm:$0xff]
      %v450 = vld [vmem:[%s3 + $0x478] sm:$0xff]
      %v451 = vld [vmem:[%s3 + $0x480] sm:$0xff]
      %v452 = vld [vmem:[%s3 + $0x488] sm:$0xff]
      %v453 = vld [vmem:[%s3 + $0x490] sm:$0xff]
      %v454 = vld [vmem:[%s3 + $0x498] sm:$0xff]
      %v455 = vld [vmem:[%s3 + $0x4a0] sm:$0xff]
      %v456 = vld [vmem:[%s3 + $0x4a8] sm:$0xff]
      %v457 = vld [vmem:[%s3 + $0x4b0] sm:$0xff]
      %v458 = vld [vmem:[%s3 + $0x4b8] sm:$0xff]
      %v459 = vld [vmem:[%s3 + $0x4c0] sm:$0xff]
      %v460 = vld [vmem:[%s3 + $0x4c8] sm:$0xff]
      %v461 = vld [vmem:[%s3 + $0x4d0] sm:$0xff]
      %v462 = vld [vmem:[%s3 + $0x4d8] sm:$0xff]
      %v463 = vld [vmem:[%s3 + $0x4e0] sm:$0xff]
      %v464 = vld [vmem:[%s3 + $0x4e8] sm:$0xff]
      %v465 = vld [vmem:[%s3 + $0x4f0] sm:$0xff]
      %v466 = vld [vmem:[%s3 + $0x4f8] sm:$0xff]
      %v467 = vld [vmem:[%s3 + $0x500] sm:$0xff]
      %v468 = vld [vmem:[%s3 + $0x508] sm:$0xff]
      %v469 = vld [vmem:[%s3 + $0x510] sm:$0xff]
      %v470 = vld [vmem:[%s3 + $0x518] sm:$0xff]
      %v471 = vld [vmem:[%s3 + $0x520] sm:$0xff]
      %v472 = vld [vmem:[%s3 + $0x528] sm:$0xff]
      %v473 = vld [vmem:[%s3 + $0x530] sm:$0xff]
      %v474 = vld [vmem:[%s3 + $0x538] sm:$0xff]
      %v475 = vld [vmem:[%s3 + $0x540] sm:$0xff]
      %v476 = vld [vmem:[%s3 + $0x548] sm:$0xff]
      %v477 = vld [vmem:[%s3 + $0x550] sm:$0xff]
      %v478 = vld [vmem:[%s3 + $0x558] sm:$0xff]
      %v479 = vld [vmem:[%s3 + $0x560] sm:$0xff]
      %v480 = vld [vmem:[%s3 + $0x568] sm:$0xff]
      %v481 = vld [vmem:[%s3 + $0x570] sm:$0xff]
      %v482 = vld [vmem:[%s3 + $0x578] sm:$0xff]
      %v483 = vld [vmem:[%s3 + $0x580] sm:$0xff]
      %v484 = vld [vmem:[%s3 + $0x588] sm:$0xff]
      %v485 = vld [vmem:[%s3 + $0x590] sm:$0xff]
      %v486 = vld [vmem:[%s3 + $0x598] sm:$0xff]
      %v487 = vld [vmem:[%s3 + $0x5a0] sm:$0xff]
      %v488 = vld [vmem:[%s3 + $0x5a8] sm:$0xff]
      %v489 = vld [vmem:[%s3 + $0x5b0] sm:$0xff]
      %v490 = vld [vmem:[%s3 + $0x5b8] sm:$0xff]
      %v491 = vld [vmem:[%s3 + $0x5c0] sm:$0xff]
      %v492 = vld [vmem:[%s3 + $0x5c8] sm:$0xff]
      %v493 = vld [vmem:[%s3 + $0x5d0] sm:$0xff]
      %v494 = vld [vmem:[%s3 + $0x5d8] sm:$0xff]
      %v495 = vld [vmem:[%s3 + $0x5e0] sm:$0xff]
      %v496 = vld [vmem:[%s3 + $0x5e8] sm:$0xff]
      %v497 = vld [vmem:[%s3 + $0x5f0] sm:$0xff]
      %v498 = vld [vmem:[%s3 + $0x5f8] sm:$0xff]
      %v499 = vld [vmem:[%s3 + $0x600] sm:$0xff]
      %v500 = vld [vmem:[%s3 + $0x608] sm:$0xff]
      %v501 = vld [vmem:[%s3 + $0x610] sm:$0xff]
      %v502 = vld [vmem:[%s3 + $0x618] sm:$0xff]
      %v503 = vld [vmem:[%s3 + $0x620] sm:$0xff]
      %v504 = vld [vmem:[%s3 + $0x628] sm:$0xff]
      %v505 = vld [vmem:[%s3 + $0x630] sm:$0xff]
      %v506 = vld [vmem:[%s3 + $0x638] sm:$0xff]
      %v507 = vld [vmem:[%s3 + $0x640] sm:$0xff]
      %v508 = vld [vmem:[%s3 + $0x648] sm:$0xff]
      %v509 = vld [vmem:[%s3 + $0x650] sm:$0xff]
      %v510 = vld [vmem:[%s3 + $0x658] sm:$0xff]
      %v511 = vld [vmem:[%s3 + $0x660] sm:$0xff]
      %v512 = vld [vmem:[%s3 + $0x668] sm:$0xff]
      %v513 = vld [vmem:[%s3 + $0x670] sm:$0xff]
      %v514 = vld [vmem:[%s3 + $0x678] sm:$0xff]
      %v515 = vld [vmem:[%s3 + $0x680] sm:$0xff]
      %v516 = vld [vmem:[%s3 + $0x688] sm:$0xff]
      %v517 = vld [vmem:[%s3 + $0x690] sm:$0xff]
      %v518 = vld [vmem:[%s3 + $0x698] sm:$0xff]
      %v519 = vld [vmem:[%s3 + $0x6a0] sm:$0xff]
      %v520 = vld [vmem:[%s3 + $0x6a8] sm:$0xff]
      %v521 = vld [vmem:[%s3 + $0x6b0] sm:$0xff]
      %v522 = vld [vmem:[%s3 + $0x6b8] sm:$0xff]
      %v523 = vld [vmem:[%s3 + $0x6c0] sm:$0xff]
      %v524 = vld [vmem:[%s3 + $0x6c8] sm:$0xff]
      %v525 = vld [vmem:[%s3 + $0x6d0] sm:$0xff]
      %v526 = vld [vmem:[%s3 + $0x6d8] sm:$0xff]
      %v527 = vld [vmem:[%s3 + $0x6e0] sm:$0xff]
      %v528 = vld [vmem:[%s3 + $0x6e8] sm:$0xff]
      %v529 = vld [vmem:[%s3 + $0x6f0] sm:$0xff]
      %v530 = vld [vmem:[%s3 + $0x6f8] sm:$0xff]
      %v531 = vld [vmem:[%s3 + $0x700] sm:$0xff]
      %v532 = vld [vmem:[%s3 + $0x708] sm:$0xff]
      %v533 = vld [vmem:[%s3 + $0x710] sm:$0xff]
      %v534 = vld [vmem:[%s3 + $0x718] sm:$0xff]
      %v535 = vld [vmem:[%s3 + $0x720] sm:$0xff]
      %v536 = vld [vmem:[%s3 + $0x728] sm:$0xff]
      %v537 = vld [vmem:[%s3 + $0x730] sm:$0xff]
      %v538 = vld [vmem:[%s3 + $0x738] sm:$0xff]
      %v539 = vld [vmem:[%s3 + $0x740] sm:$0xff]
      %v540 = vld [vmem:[%s3 + $0x748] sm:$0xff]
      %v541 = vld [vmem:[%s3 + $0x750] sm:$0xff]
      %v542 = vld [vmem:[%s3 + $0x758] sm:$0xff]
      %v543 = vld [vmem:[%s3 + $0x760] sm:$0xff]
      %v544 = vld [vmem:[%s3 + $0x768] sm:$0xff]
      %v545 = vld [vmem:[%s3 + $0x770] sm:$0xff]
      %v546 = vld [vmem:[%s3 + $0x778] sm:$0xff]
      %v547 = vld [vmem:[%s3 + $0x780] sm:$0xff]
      %v548 = vld [vmem:[%s3 + $0x788] sm:$0xff]
      %v549 = vld [vmem:[%s3 + $0x790] sm:$0xff]
      %v550 = vld [vmem:[%s3 + $0x798] sm:$0xff]
      %v551 = vld [vmem:[%s3 + $0x7a0] sm:$0xff]
      %v552 = vld [vmem:[%s3 + $0x7a8] sm:$0xff]
      %v553 = vld [vmem:[%s3 + $0x7b0] sm:$0xff]
      %v554 = vld [vmem:[%s3 + $0x7b8] sm:$0xff]
      %v555 = vld [vmem:[%s3 + $0x7c0] sm:$0xff]
      %v556 = vld [vmem:[%s3 + $0x7c8] sm:$0xff]
      %v557 = vld [vmem:[%s3 + $0x7d0] sm:$0xff]
      %v558 = vld [vmem:[%s3 + $0x7d8] sm:$0xff]
      %v559 = vld [vmem:[%s3 + $0x7e0] sm:$0xff]
      %v560 = vld [vmem:[%s3 + $0x7e8] sm:$0xff]
      %v561 = vld [vmem:[%s3 + $0x7f0] sm:$0xff]
      %v562 = vld [vmem:[%s3 + $0x7f8] sm:$0xff]
      %v564 = vcombine.high %v306, %v306
      %566 = vmatprep.subr.mxu0 %v308
      %567 = vmatpush1.msra.mxu0 %v307
      %568 = vmatprep.subr.mxu0 %v316
      %569 = vmatpush1.msra.mxu0 %v315
      %570 = vmatprep.subr.mxu0 %v324
      %571 = vmatpush1.msra.mxu0 %v323
      %572 = vmatprep.subr.mxu0 %v332
      %573 = vmatpush1.msra.mxu0 %v331
      %574 = vmatprep.subr.mxu0 %v340
      %575 = vmatpush1.msra.mxu0 %v339
      %576 = vmatprep.subr.mxu0 %v348
      %577 = vmatpush1.msra.mxu0 %v347
      %578 = vmatprep.subr.mxu0 %v356
      %579 = vmatpush1.msra.mxu0 %v355
      %580 = vmatprep.subr.mxu0 %v364
      %581 = vmatpush1.msra.mxu0 %v363
      %582 = vmatprep.subr.mxu0 %v372
      %583 = vmatpush1.msra.mxu0 %v371
      %584 = vmatprep.subr.mxu0 %v380
      %585 = vmatpush1.msra.mxu0 %v379
      %586 = vmatprep.subr.mxu0 %v388
      %587 = vmatpush1.msra.mxu0 %v387
      %588 = vmatprep.subr.mxu0 %v396
      %589 = vmatpush1.msra.mxu0 %v395
      %590 = vmatprep.subr.mxu0 %v404
      %591 = vmatpush1.msra.mxu0 %v403
      %592 = vmatprep.subr.mxu0 %v412
      %593 = vmatpush1.msra.mxu0 %v411
      %594 = vmatprep.subr.mxu0 %v420
      %595 = vmatpush1.msra.mxu0 %v419
      %596 = vmatprep.subr.mxu0 %v428
      %597 = vmatpush1.msra.mxu0 %v427
      %598 = vmatprep.subr.mxu0 %v436
      %599 = vmatpush1.msra.mxu0 %v435
      %600 = vmatprep.subr.mxu0 %v444
      %601 = vmatpush1.msra.mxu0 %v443
      %602 = vmatprep.subr.mxu0 %v452
      %603 = vmatpush1.msra.mxu0 %v451
      %604 = vmatprep.subr.mxu0 %v460
      %605 = vmatpush1.msra.mxu0 %v459
      %606 = vmatprep.subr.mxu0 %v468
      %607 = vmatpush1.msra.mxu0 %v467
      %608 = vmatprep.subr.mxu0 %v476
      %609 = vmatpush1.msra.mxu0 %v475
      %610 = vmatprep.subr.mxu0 %v484
      %611 = vmatpush1.msra.mxu0 %v483
      %612 = vmatprep.subr.mxu0 %v492
      %613 = vmatpush1.msra.mxu0 %v491
      %614 = vmatprep.subr.mxu0 %v500
      %615 = vmatpush1.msra.mxu0 %v499
      %616 = vmatprep.subr.mxu0 %v508
      %617 = vmatpush1.msra.mxu0 %v507
      %618 = vmatprep.subr.mxu0 %v516
      %619 = vmatpush1.msra.mxu0 %v515
      %620 = vmatprep.subr.mxu0 %v524
      %621 = vmatpush1.msra.mxu0 %v523
      %622 = vmatprep.subr.mxu0 %v532
      %623 = vmatpush1.msra.mxu0 %v531
      %624 = vmatprep.subr.mxu0 %v540
      %625 = vmatpush1.msra.mxu0 %v539
      %626 = vmatprep.subr.mxu0 %v548
      %627 = vmatpush1.msra.mxu0 %v547
      %628 = vmatprep.subr.mxu0 %v556
      %629 = vmatpush1.msra.mxu0 %v555
      %630 = vmatprep.mubr.f32.mxu0 %v564
      %631 = vmatmul.mubr.f32.gmra.mrb[0].mxu0 %v306
      %v632 = vpop.f32.mrb[0].mxu0
      %v633 = vadd.f32 0.0, %v632
      %v634 = vpop.f32.mrb[0].mxu0
      %v635 = vadd.f32 0.0, %v634
      %636 = vdwg.mxu0
      %637 = vmatprep.subr.mxu0 %v310
      %638 = vmatpush1.msra.mxu0 %v309
      %639 = vmatprep.subr.mxu0 %v318
      %640 = vmatpush1.msra.mxu0 %v317
      %641 = vmatprep.subr.mxu0 %v326
      %642 = vmatpush1.msra.mxu0 %v325
      %643 = vmatprep.subr.mxu0 %v334
      %644 = vmatpush1.msra.mxu0 %v333
      %645 = vmatprep.subr.mxu0 %v342
      %646 = vmatpush1.msra.mxu0 %v341
      %647 = vmatprep.subr.mxu0 %v350
      %648 = vmatpush1.msra.mxu0 %v349
      %649 = vmatprep.subr.mxu0 %v358
      %650 = vmatpush1.msra.mxu0 %v357
      %651 = vmatprep.subr.mxu0 %v366
      %652 = vmatpush1.msra.mxu0 %v365
      %653 = vmatprep.subr.mxu0 %v374
      %654 = vmatpush1.msra.mxu0 %v373
      %655 = vmatprep.subr.mxu0 %v382
      %656 = vmatpush1.msra.mxu0 %v381
      %657 = vmatprep.subr.mxu0 %v390
      %658 = vmatpush1.msra.mxu0 %v389
      %659 = vmatprep.subr.mxu0 %v398
      %660 = vmatpush1.msra.mxu0 %v397
      %661 = vmatprep.subr.mxu0 %v406
      %662 = vmatpush1.msra.mxu0 %v405
      %663 = vmatprep.subr.mxu0 %v414
      %664 = vmatpush1.msra.mxu0 %v413
      %665 = vmatprep.subr.mxu0 %v422
      %666 = vmatpush1.msra.mxu0 %v421
      %667 = vmatprep.subr.mxu0 %v430
      %668 = vmatpush1.msra.mxu0 %v429
      %669 = vmatprep.subr.mxu0 %v438
      %670 = vmatpush1.msra.mxu0 %v437
      %671 = vmatprep.subr.mxu0 %v446
      %672 = vmatpush1.msra.mxu0 %v445
      %673 = vmatprep.subr.mxu0 %v454
      %674 = vmatpush1.msra.mxu0 %v453
      %675 = vmatprep.subr.mxu0 %v462
      %676 = vmatpush1.msra.mxu0 %v461
      %677 = vmatprep.subr.mxu0 %v470
      %678 = vmatpush1.msra.mxu0 %v469
      %679 = vmatprep.subr.mxu0 %v478
      %680 = vmatpush1.msra.mxu0 %v477
      %681 = vmatprep.subr.mxu0 %v486
      %682 = vmatpush1.msra.mxu0 %v485
      %683 = vmatprep.subr.mxu0 %v494
      %684 = vmatpush1.msra.mxu0 %v493
      %685 = vmatprep.subr.mxu0 %v502
      %686 = vmatpush1.msra.mxu0 %v501
      %687 = vmatprep.subr.mxu0 %v510
      %688 = vmatpush1.msra.mxu0 %v509
      %689 = vmatprep.subr.mxu0 %v518
      %690 = vmatpush1.msra.mxu0 %v517
      %691 = vmatprep.subr.mxu0 %v526
      %692 = vmatpush1.msra.mxu0 %v525
      %693 = vmatprep.subr.mxu0 %v534
      %694 = vmatpush1.msra.mxu0 %v533
      %695 = vmatprep.subr.mxu0 %v542
      %696 = vmatpush1.msra.mxu0 %v541
      %697 = vmatprep.subr.mxu0 %v550
      %698 = vmatpush1.msra.mxu0 %v549
      %699 = vmatprep.subr.mxu0 %v558
      %700 = vmatpush1.msra.mxu0 %v557
      %701 = vmatprep.mubr.f32.mxu0 %v564
      %702 = vmatmul.mubr.f32.gmra.mrb[0].mxu0 %v306
      %v703 = vpop.f32.mrb[0].mxu0
      %v704 = vadd.f32 0.0, %v703
      %v705 = vpop.f32.mrb[0].mxu0
      %v706 = vadd.f32 0.0, %v705
      %707 = vdwg.mxu0
      %708 = vmatprep.subr.mxu0 %v312
      %709 = vmatpush1.msra.mxu0 %v311
      %710 = vmatprep.subr.mxu0 %v320
      %711 = vmatpush1.msra.mxu0 %v319
      %712 = vmatprep.subr.mxu0 %v328
      %713 = vmatpush1.msra.mxu0 %v327
      %714 = vmatprep.subr.mxu0 %v336
      %715 = vmatpush1.msra.mxu0 %v335
      %716 = vmatprep.subr.mxu0 %v344
      %717 = vmatpush1.msra.mxu0 %v343
      %718 = vmatprep.subr.mxu0 %v352
      %719 = vmatpush1.msra.mxu0 %v351
      %720 = vmatprep.subr.mxu0 %v360
      %721 = vmatpush1.msra.mxu0 %v359
      %722 = vmatprep.subr.mxu0 %v368
      %723 = vmatpush1.msra.mxu0 %v367
      %724 = vmatprep.subr.mxu0 %v376
      %725 = vmatpush1.msra.mxu0 %v375
      %726 = vmatprep.subr.mxu0 %v384
      %727 = vmatpush1.msra.mxu0 %v383
      %728 = vmatprep.subr.mxu0 %v392
      %729 = vmatpush1.msra.mxu0 %v391
      %730 = vmatprep.subr.mxu0 %v400
      %731 = vmatpush1.msra.mxu0 %v399
      %732 = vmatprep.subr.mxu0 %v408
      %733 = vmatpush1.msra.mxu0 %v407
      %734 = vmatprep.subr.mxu0 %v416
      %735 = vmatpush1.msra.mxu0 %v415
      %736 = vmatprep.subr.mxu0 %v424
      %737 = vmatpush1.msra.mxu0 %v423
      %738 = vmatprep.subr.mxu0 %v432
      %739 = vmatpush1.msra.mxu0 %v431
      %740 = vmatprep.subr.mxu0 %v440
      %741 = vmatpush1.msra.mxu0 %v439
      %742 = vmatprep.subr.mxu0 %v448
      %743 = vmatpush1.msra.mxu0 %v447
      %744 = vmatprep.subr.mxu0 %v456
      %745 = vmatpush1.msra.mxu0 %v455
      %746 = vmatprep.subr.mxu0 %v464
      %747 = vmatpush1.msra.mxu0 %v463
      %748 = vmatprep.subr.mxu0 %v472
      %749 = vmatpush1.msra.mxu0 %v471
      %750 = vmatprep.subr.mxu0 %v480
      %751 = vmatpush1.msra.mxu0 %v479
      %752 = vmatprep.subr.mxu0 %v488
      %753 = vmatpush1.msra.mxu0 %v487
      %754 = vmatprep.subr.mxu0 %v496
      %755 = vmatpush1.msra.mxu0 %v495
      %756 = vmatprep.subr.mxu0 %v504
      %757 = vmatpush1.msra.mxu0 %v503
      %758 = vmatprep.subr.mxu0 %v512
      %759 = vmatpush1.msra.mxu0 %v511
      %760 = vmatprep.subr.mxu0 %v520
      %761 = vmatpush1.msra.mxu0 %v519
      %762 = vmatprep.subr.mxu0 %v528
      %763 = vmatpush1.msra.mxu0 %v527
      %764 = vmatprep.subr.mxu0 %v536
      %765 = vmatpush1.msra.mxu0 %v535
      %766 = vmatprep.subr.mxu0 %v544
      %767 = vmatpush1.msra.mxu0 %v543
      %768 = vmatprep.subr.mxu0 %v552
      %769 = vmatpush1.msra.mxu0 %v551
      %770 = vmatprep.subr.mxu0 %v560
      %771 = vmatpush1.msra.mxu0 %v559
      %772 = vmatprep.mubr.f32.mxu0 %v564
      %773 = vmatmul.mubr.f32.gmra.mrb[0].mxu0 %v306
      %v774 = vpop.f32.mrb[0].mxu0
      %v775 = vadd.f32 0.0, %v774
      %v776 = vpop.f32.mrb[0].mxu0
      %v777 = vadd.f32 0.0, %v776
      %778 = vdwg.mxu0
      %779 = vmatprep.subr.mxu0 %v314
      %780 = vmatpush1.msra.mxu0 %v313
      %781 = vmatprep.subr.mxu0 %v322
      %782 = vmatpush1.msra.mxu0 %v321
      %783 = vmatprep.subr.mxu0 %v330
      %784 = vmatpush1.msra.mxu0 %v329
      %785 = vmatprep.subr.mxu0 %v338
      %786 = vmatpush1.msra.mxu0 %v337
      %787 = vmatprep.subr.mxu0 %v346
      %788 = vmatpush1.msra.mxu0 %v345
      %789 = vmatprep.subr.mxu0 %v354
      %790 = vmatpush1.msra.mxu0 %v353
      %791 = vmatprep.subr.mxu0 %v362
      %792 = vmatpush1.msra.mxu0 %v361
      %793 = vmatprep.subr.mxu0 %v370
      %794 = vmatpush1.msra.mxu0 %v369
      %795 = vmatprep.subr.mxu0 %v378
      %796 = vmatpush1.msra.mxu0 %v377
      %797 = vmatprep.subr.mxu0 %v386
      %798 = vmatpush1.msra.mxu0 %v385
      %799 = vmatprep.subr.mxu0 %v394
      %800 = vmatpush1.msra.mxu0 %v393
      %801 = vmatprep.subr.mxu0 %v402
      %802 = vmatpush1.msra.mxu0 %v401
      %803 = vmatprep.subr.mxu0 %v410
      %804 = vmatpush1.msra.mxu0 %v409
      %805 = vmatprep.subr.mxu0 %v418
      %806 = vmatpush1.msra.mxu0 %v417
      %807 = vmatprep.subr.mxu0 %v426
      %808 = vmatpush1.msra.mxu0 %v425
      %809 = vmatprep.subr.mxu0 %v434
      %810 = vmatpush1.msra.mxu0 %v433
      %811 = vmatprep.subr.mxu0 %v442
      %812 = vmatpush1.msra.mxu0 %v441
      %813 = vmatprep.subr.mxu0 %v450
      %814 = vmatpush1.msra.mxu0 %v449
      %815 = vmatprep.subr.mxu0 %v458
      %816 = vmatpush1.msra.mxu0 %v457
      %817 = vmatprep.subr.mxu0 %v466
      %818 = vmatpush1.msra.mxu0 %v465
      %819 = vmatprep.subr.mxu0 %v474
      %820 = vmatpush1.msra.mxu0 %v473
      %821 = vmatprep.subr.mxu0 %v482
      %822 = vmatpush1.msra.mxu0 %v481
      %823 = vmatprep.subr.mxu0 %v490
      %824 = vmatpush1.msra.mxu0 %v489
      %825 = vmatprep.subr.mxu0 %v498
      %826 = vmatpush1.msra.mxu0 %v497
      %827 = vmatprep.subr.mxu0 %v506
      %828 = vmatpush1.msra.mxu0 %v505
      %829 = vmatprep.subr.mxu0 %v514
      %830 = vmatpush1.msra.mxu0 %v513
      %831 = vmatprep.subr.mxu0 %v522
      %832 = vmatpush1.msra.mxu0 %v521
      %833 = vmatprep.subr.mxu0 %v530
      %834 = vmatpush1.msra.mxu0 %v529
      %835 = vmatprep.subr.mxu0 %v538
      %836 = vmatpush1.msra.mxu0 %v537
      %837 = vmatprep.subr.mxu0 %v546
      %838 = vmatpush1.msra.mxu0 %v545
      %839 = vmatprep.subr.mxu0 %v554
      %840 = vmatpush1.msra.mxu0 %v553
      %841 = vmatprep.subr.mxu0 %v562
      %842 = vmatpush1.msra.mxu0 %v561
      %843 = vmatprep.mubr.f32.mxu0 %v564
      %844 = vmatmul.mubr.f32.gmra.mrb[0].mxu0 %v306
      %v845 = vpop.f32.mrb[0].mxu0
      %v846 = vadd.f32 0.0, %v845
      %v847 = vpop.f32.mrb[0].mxu0
      %v848 = vadd.f32 0.0, %v847
      %849 = vdwg.mxu0
      %v850 = vld [vmem:[%s4] sm:$0xff]
      %v851 = vld [vmem:[%s4 + $0x8] sm:$0xff]
      %v852 = vld [vmem:[%s4 + $0x10] sm:$0xff]
      %v853 = vld [vmem:[%s4 + $0x18] sm:$0xff]
      %v854 = vld [vmem:[%s4 + $0x20] sm:$0xff]
      %v855 = vld [vmem:[%s4 + $0x28] sm:$0xff]
      %v856 = vld [vmem:[%s4 + $0x30] sm:$0xff]
      %v857 = vld [vmem:[%s4 + $0x38] sm:$0xff]
      %v858 = vld [vmem:[%s4 + $0x40] sm:$0xff]
      %v859 = vld [vmem:[%s4 + $0x48] sm:$0xff]
      %v860 = vld [vmem:[%s4 + $0x50] sm:$0xff]
      %v861 = vld [vmem:[%s4 + $0x58] sm:$0xff]
      %v862 = vld [vmem:[%s4 + $0x60] sm:$0xff]
      %v863 = vld [vmem:[%s4 + $0x68] sm:$0xff]
      %v864 = vld [vmem:[%s4 + $0x70] sm:$0xff]
      %v865 = vld [vmem:[%s4 + $0x78] sm:$0xff]
      %v866 = vld [vmem:[%s4 + $0x80] sm:$0xff]
      %v867 = vld [vmem:[%s4 + $0x88] sm:$0xff]
      %v868 = vld [vmem:[%s4 + $0x90] sm:$0xff]
      %v869 = vld [vmem:[%s4 + $0x98] sm:$0xff]
      %v870 = vld [vmem:[%s4 + $0xa0] sm:$0xff]
      %v871 = vld [vmem:[%s4 + $0xa8] sm:$0xff]
      %v872 = vld [vmem:[%s4 + $0xb0] sm:$0xff]
      %v873 = vld [vmem:[%s4 + $0xb8] sm:$0xff]
      %v874 = vld [vmem:[%s4 + $0xc0] sm:$0xff]
      %v875 = vld [vmem:[%s4 + $0xc8] sm:$0xff]
      %v876 = vld [vmem:[%s4 + $0xd0] sm:$0xff]
      %v877 = vld [vmem:[%s4 + $0xd8] sm:$0xff]
      %v878 = vld [vmem:[%s4 + $0xe0] sm:$0xff]
      %v879 = vld [vmem:[%s4 + $0xe8] sm:$0xff]
      %v880 = vld [vmem:[%s4 + $0xf0] sm:$0xff]
      %v881 = vld [vmem:[%s4 + $0xf8] sm:$0xff]
      %v882 = vld [vmem:[%s4 + $0x100] sm:$0xff]
      %v883 = vld [vmem:[%s4 + $0x108] sm:$0xff]
      %v884 = vld [vmem:[%s4 + $0x110] sm:$0xff]
      %v885 = vld [vmem:[%s4 + $0x118] sm:$0xff]
      %v886 = vld [vmem:[%s4 + $0x120] sm:$0xff]
      %v887 = vld [vmem:[%s4 + $0x128] sm:$0xff]
      %v888 = vld [vmem:[%s4 + $0x130] sm:$0xff]
      %v889 = vld [vmem:[%s4 + $0x138] sm:$0xff]
      %v890 = vld [vmem:[%s4 + $0x140] sm:$0xff]
      %v891 = vld [vmem:[%s4 + $0x148] sm:$0xff]
      %v892 = vld [vmem:[%s4 + $0x150] sm:$0xff]
      %v893 = vld [vmem:[%s4 + $0x158] sm:$0xff]
      %v894 = vld [vmem:[%s4 + $0x160] sm:$0xff]
      %v895 = vld [vmem:[%s4 + $0x168] sm:$0xff]
      %v896 = vld [vmem:[%s4 + $0x170] sm:$0xff]
      %v897 = vld [vmem:[%s4 + $0x178] sm:$0xff]
      %v898 = vld [vmem:[%s4 + $0x180] sm:$0xff]
      %v899 = vld [vmem:[%s4 + $0x188] sm:$0xff]
      %v900 = vld [vmem:[%s4 + $0x190] sm:$0xff]
      %v901 = vld [vmem:[%s4 + $0x198] sm:$0xff]
      %v902 = vld [vmem:[%s4 + $0x1a0] sm:$0xff]
      %v903 = vld [vmem:[%s4 + $0x1a8] sm:$0xff]
      %v904 = vld [vmem:[%s4 + $0x1b0] sm:$0xff]
      %v905 = vld [vmem:[%s4 + $0x1b8] sm:$0xff]
      %v906 = vld [vmem:[%s4 + $0x1c0] sm:$0xff]
      %v907 = vld [vmem:[%s4 + $0x1c8] sm:$0xff]
      %v908 = vld [vmem:[%s4 + $0x1d0] sm:$0xff]
      %v909 = vld [vmem:[%s4 + $0x1d8] sm:$0xff]
      %v910 = vld [vmem:[%s4 + $0x1e0] sm:$0xff]
      %v911 = vld [vmem:[%s4 + $0x1e8] sm:$0xff]
      %v912 = vld [vmem:[%s4 + $0x1f0] sm:$0xff]
      %v913 = vld [vmem:[%s4 + $0x1f8] sm:$0xff]
      %v914 = vld [vmem:[%s4 + $0x200] sm:$0xff]
      %v915 = vld [vmem:[%s4 + $0x208] sm:$0xff]
      %v916 = vld [vmem:[%s4 + $0x210] sm:$0xff]
      %v917 = vld [vmem:[%s4 + $0x218] sm:$0xff]
      %v918 = vld [vmem:[%s4 + $0x220] sm:$0xff]
      %v919 = vld [vmem:[%s4 + $0x228] sm:$0xff]
      %v920 = vld [vmem:[%s4 + $0x230] sm:$0xff]
      %v921 = vld [vmem:[%s4 + $0x238] sm:$0xff]
      %v922 = vld [vmem:[%s4 + $0x240] sm:$0xff]
      %v923 = vld [vmem:[%s4 + $0x248] sm:$0xff]
      %v924 = vld [vmem:[%s4 + $0x250] sm:$0xff]
      %v925 = vld [vmem:[%s4 + $0x258] sm:$0xff]
      %v926 = vld [vmem:[%s4 + $0x260] sm:$0xff]
      %v927 = vld [vmem:[%s4 + $0x268] sm:$0xff]
      %v928 = vld [vmem:[%s4 + $0x270] sm:$0xff]
      %v929 = vld [vmem:[%s4 + $0x278] sm:$0xff]
      %v930 = vld [vmem:[%s4 + $0x280] sm:$0xff]
      %v931 = vld [vmem:[%s4 + $0x288] sm:$0xff]
      %v932 = vld [vmem:[%s4 + $0x290] sm:$0xff]
      %v933 = vld [vmem:[%s4 + $0x298] sm:$0xff]
      %v934 = vld [vmem:[%s4 + $0x2a0] sm:$0xff]
      %v935 = vld [vmem:[%s4 + $0x2a8] sm:$0xff]
      %v936 = vld [vmem:[%s4 + $0x2b0] sm:$0xff]
      %v937 = vld [vmem:[%s4 + $0x2b8] sm:$0xff]
      %v938 = vld [vmem:[%s4 + $0x2c0] sm:$0xff]
      %v939 = vld [vmem:[%s4 + $0x2c8] sm:$0xff]
      %v940 = vld [vmem:[%s4 + $0x2d0] sm:$0xff]
      %v941 = vld [vmem:[%s4 + $0x2d8] sm:$0xff]
      %v942 = vld [vmem:[%s4 + $0x2e0] sm:$0xff]
      %v943 = vld [vmem:[%s4 + $0x2e8] sm:$0xff]
      %v944 = vld [vmem:[%s4 + $0x2f0] sm:$0xff]
      %v945 = vld [vmem:[%s4 + $0x2f8] sm:$0xff]
      %v946 = vld [vmem:[%s4 + $0x300] sm:$0xff]
      %v947 = vld [vmem:[%s4 + $0x308] sm:$0xff]
      %v948 = vld [vmem:[%s4 + $0x310] sm:$0xff]
      %v949 = vld [vmem:[%s4 + $0x318] sm:$0xff]
      %v950 = vld [vmem:[%s4 + $0x320] sm:$0xff]
      %v951 = vld [vmem:[%s4 + $0x328] sm:$0xff]
      %v952 = vld [vmem:[%s4 + $0x330] sm:$0xff]
      %v953 = vld [vmem:[%s4 + $0x338] sm:$0xff]
      %v954 = vld [vmem:[%s4 + $0x340] sm:$0xff]
      %v955 = vld [vmem:[%s4 + $0x348] sm:$0xff]
      %v956 = vld [vmem:[%s4 + $0x350] sm:$0xff]
      %v957 = vld [vmem:[%s4 + $0x358] sm:$0xff]
      %v958 = vld [vmem:[%s4 + $0x360] sm:$0xff]
      %v959 = vld [vmem:[%s4 + $0x368] sm:$0xff]
      %v960 = vld [vmem:[%s4 + $0x370] sm:$0xff]
      %v961 = vld [vmem:[%s4 + $0x378] sm:$0xff]
      %v962 = vld [vmem:[%s4 + $0x380] sm:$0xff]
      %v963 = vld [vmem:[%s4 + $0x388] sm:$0xff]
      %v964 = vld [vmem:[%s4 + $0x390] sm:$0xff]
      %v965 = vld [vmem:[%s4 + $0x398] sm:$0xff]
      %v966 = vld [vmem:[%s4 + $0x3a0] sm:$0xff]
      %v967 = vld [vmem:[%s4 + $0x3a8] sm:$0xff]
      %v968 = vld [vmem:[%s4 + $0x3b0] sm:$0xff]
      %v969 = vld [vmem:[%s4 + $0x3b8] sm:$0xff]
      %v970 = vld [vmem:[%s4 + $0x3c0] sm:$0xff]
      %v971 = vld [vmem:[%s4 + $0x3c8] sm:$0xff]
      %v972 = vld [vmem:[%s4 + $0x3d0] sm:$0xff]
      %v973 = vld [vmem:[%s4 + $0x3d8] sm:$0xff]
      %v974 = vld [vmem:[%s4 + $0x3e0] sm:$0xff]
      %v975 = vld [vmem:[%s4 + $0x3e8] sm:$0xff]
      %v976 = vld [vmem:[%s4 + $0x3f0] sm:$0xff]
      %v977 = vld [vmem:[%s4 + $0x3f8] sm:$0xff]
      %v978 = vld [vmem:[%s4 + $0x400] sm:$0xff]
      %v979 = vld [vmem:[%s4 + $0x408] sm:$0xff]
      %v980 = vld [vmem:[%s4 + $0x410] sm:$0xff]
      %v981 = vld [vmem:[%s4 + $0x418] sm:$0xff]
      %v982 = vld [vmem:[%s4 + $0x420] sm:$0xff]
      %v983 = vld [vmem:[%s4 + $0x428] sm:$0xff]
      %v984 = vld [vmem:[%s4 + $0x430] sm:$0xff]
      %v985 = vld [vmem:[%s4 + $0x438] sm:$0xff]
      %v986 = vld [vmem:[%s4 + $0x440] sm:$0xff]
      %v987 = vld [vmem:[%s4 + $0x448] sm:$0xff]
      %v988 = vld [vmem:[%s4 + $0x450] sm:$0xff]
      %v989 = vld [vmem:[%s4 + $0x458] sm:$0xff]
      %v990 = vld [vmem:[%s4 + $0x460] sm:$0xff]
      %v991 = vld [vmem:[%s4 + $0x468] sm:$0xff]
      %v992 = vld [vmem:[%s4 + $0x470] sm:$0xff]
      %v993 = vld [vmem:[%s4 + $0x478] sm:$0xff]
      %v994 = vld [vmem:[%s4 + $0x480] sm:$0xff]
      %v995 = vld [vmem:[%s4 + $0x488] sm:$0xff]
      %v996 = vld [vmem:[%s4 + $0x490] sm:$0xff]
      %v997 = vld [vmem:[%s4 + $0x498] sm:$0xff]
      %v998 = vld [vmem:[%s4 + $0x4a0] sm:$0xff]
      %v999 = vld [vmem:[%s4 + $0x4a8] sm:$0xff]
      %v1000 = vld [vmem:[%s4 + $0x4b0] sm:$0xff]
      %v1001 = vld [vmem:[%s4 + $0x4b8] sm:$0xff]
      %v1002 = vld [vmem:[%s4 + $0x4c0] sm:$0xff]
      %v1003 = vld [vmem:[%s4 + $0x4c8] sm:$0xff]
      %v1004 = vld [vmem:[%s4 + $0x4d0] sm:$0xff]
      %v1005 = vld [vmem:[%s4 + $0x4d8] sm:$0xff]
      %v1006 = vld [vmem:[%s4 + $0x4e0] sm:$0xff]
      %v1007 = vld [vmem:[%s4 + $0x4e8] sm:$0xff]
      %v1008 = vld [vmem:[%s4 + $0x4f0] sm:$0xff]
      %v1009 = vld [vmem:[%s4 + $0x4f8] sm:$0xff]
      %v1010 = vld [vmem:[%s4 + $0x500] sm:$0xff]
      %v1011 = vld [vmem:[%s4 + $0x508] sm:$0xff]
      %v1012 = vld [vmem:[%s4 + $0x510] sm:$0xff]
      %v1013 = vld [vmem:[%s4 + $0x518] sm:$0xff]
      %v1014 = vld [vmem:[%s4 + $0x520] sm:$0xff]
      %v1015 = vld [vmem:[%s4 + $0x528] sm:$0xff]
      %v1016 = vld [vmem:[%s4 + $0x530] sm:$0xff]
      %v1017 = vld [vmem:[%s4 + $0x538] sm:$0xff]
      %v1018 = vld [vmem:[%s4 + $0x540] sm:$0xff]
      %v1019 = vld [vmem:[%s4 + $0x548] sm:$0xff]
      %v1020 = vld [vmem:[%s4 + $0x550] sm:$0xff]
      %v1021 = vld [vmem:[%s4 + $0x558] sm:$0xff]
      %v1022 = vld [vmem:[%s4 + $0x560] sm:$0xff]
      %v1023 = vld [vmem:[%s4 + $0x568] sm:$0xff]
      %v1024 = vld [vmem:[%s4 + $0x570] sm:$0xff]
      %v1025 = vld [vmem:[%s4 + $0x578] sm:$0xff]
      %v1026 = vld [vmem:[%s4 + $0x580] sm:$0xff]
      %v1027 = vld [vmem:[%s4 + $0x588] sm:$0xff]
      %v1028 = vld [vmem:[%s4 + $0x590] sm:$0xff]
      %v1029 = vld [vmem:[%s4 + $0x598] sm:$0xff]
      %v1030 = vld [vmem:[%s4 + $0x5a0] sm:$0xff]
      %v1031 = vld [vmem:[%s4 + $0x5a8] sm:$0xff]
      %v1032 = vld [vmem:[%s4 + $0x5b0] sm:$0xff]
      %v1033 = vld [vmem:[%s4 + $0x5b8] sm:$0xff]
      %v1034 = vld [vmem:[%s4 + $0x5c0] sm:$0xff]
      %v1035 = vld [vmem:[%s4 + $0x5c8] sm:$0xff]
      %v1036 = vld [vmem:[%s4 + $0x5d0] sm:$0xff]
      %v1037 = vld [vmem:[%s4 + $0x5d8] sm:$0xff]
      %v1038 = vld [vmem:[%s4 + $0x5e0] sm:$0xff]
      %v1039 = vld [vmem:[%s4 + $0x5e8] sm:$0xff]
      %v1040 = vld [vmem:[%s4 + $0x5f0] sm:$0xff]
      %v1041 = vld [vmem:[%s4 + $0x5f8] sm:$0xff]
      %v1042 = vld [vmem:[%s4 + $0x600] sm:$0xff]
      %v1043 = vld [vmem:[%s4 + $0x608] sm:$0xff]
      %v1044 = vld [vmem:[%s4 + $0x610] sm:$0xff]
      %v1045 = vld [vmem:[%s4 + $0x618] sm:$0xff]
      %v1046 = vld [vmem:[%s4 + $0x620] sm:$0xff]
      %v1047 = vld [vmem:[%s4 + $0x628] sm:$0xff]
      %v1048 = vld [vmem:[%s4 + $0x630] sm:$0xff]
      %v1049 = vld [vmem:[%s4 + $0x638] sm:$0xff]
      %v1050 = vld [vmem:[%s4 + $0x640] sm:$0xff]
      %v1051 = vld [vmem:[%s4 + $0x648] sm:$0xff]
      %v1052 = vld [vmem:[%s4 + $0x650] sm:$0xff]
      %v1053 = vld [vmem:[%s4 + $0x658] sm:$0xff]
      %v1054 = vld [vmem:[%s4 + $0x660] sm:$0xff]
      %v1055 = vld [vmem:[%s4 + $0x668] sm:$0xff]
      %v1056 = vld [vmem:[%s4 + $0x670] sm:$0xff]
      %v1057 = vld [vmem:[%s4 + $0x678] sm:$0xff]
      %v1058 = vld [vmem:[%s4 + $0x680] sm:$0xff]
      %v1059 = vld [vmem:[%s4 + $0x688] sm:$0xff]
      %v1060 = vld [vmem:[%s4 + $0x690] sm:$0xff]
      %v1061 = vld [vmem:[%s4 + $0x698] sm:$0xff]
      %v1062 = vld [vmem:[%s4 + $0x6a0] sm:$0xff]
      %v1063 = vld [vmem:[%s4 + $0x6a8] sm:$0xff]
      %v1064 = vld [vmem:[%s4 + $0x6b0] sm:$0xff]
      %v1065 = vld [vmem:[%s4 + $0x6b8] sm:$0xff]
      %v1066 = vld [vmem:[%s4 + $0x6c0] sm:$0xff]
      %v1067 = vld [vmem:[%s4 + $0x6c8] sm:$0xff]
      %v1068 = vld [vmem:[%s4 + $0x6d0] sm:$0xff]
      %v1069 = vld [vmem:[%s4 + $0x6d8] sm:$0xff]
      %v1070 = vld [vmem:[%s4 + $0x6e0] sm:$0xff]
      %v1071 = vld [vmem:[%s4 + $0x6e8] sm:$0xff]
      %v1072 = vld [vmem:[%s4 + $0x6f0] sm:$0xff]
      %v1073 = vld [vmem:[%s4 + $0x6f8] sm:$0xff]
      %v1074 = vld [vmem:[%s4 + $0x700] sm:$0xff]
      %v1075 = vld [vmem:[%s4 + $0x708] sm:$0xff]
      %v1076 = vld [vmem:[%s4 + $0x710] sm:$0xff]
      %v1077 = vld [vmem:[%s4 + $0x718] sm:$0xff]
      %v1078 = vld [vmem:[%s4 + $0x720] sm:$0xff]
      %v1079 = vld [vmem:[%s4 + $0x728] sm:$0xff]
      %v1080 = vld [vmem:[%s4 + $0x730] sm:$0xff]
      %v1081 = vld [vmem:[%s4 + $0x738] sm:$0xff]
      %v1082 = vld [vmem:[%s4 + $0x740] sm:$0xff]
      %v1083 = vld [vmem:[%s4 + $0x748] sm:$0xff]
      %v1084 = vld [vmem:[%s4 + $0x750] sm:$0xff]
      %v1085 = vld [vmem:[%s4 + $0x758] sm:$0xff]
      %v1086 = vld [vmem:[%s4 + $0x760] sm:$0xff]
      %v1087 = vld [vmem:[%s4 + $0x768] sm:$0xff]
      %v1088 = vld [vmem:[%s4 + $0x770] sm:$0xff]
      %v1089 = vld [vmem:[%s4 + $0x778] sm:$0xff]
      %v1090 = vld [vmem:[%s4 + $0x780] sm:$0xff]
      %v1091 = vld [vmem:[%s4 + $0x788] sm:$0xff]
      %v1092 = vld [vmem:[%s4 + $0x790] sm:$0xff]
      %v1093 = vld [vmem:[%s4 + $0x798] sm:$0xff]
      %v1094 = vld [vmem:[%s4 + $0x7a0] sm:$0xff]
      %v1095 = vld [vmem:[%s4 + $0x7a8] sm:$0xff]
      %v1096 = vld [vmem:[%s4 + $0x7b0] sm:$0xff]
      %v1097 = vld [vmem:[%s4 + $0x7b8] sm:$0xff]
      %v1098 = vld [vmem:[%s4 + $0x7c0] sm:$0xff]
      %v1099 = vld [vmem:[%s4 + $0x7c8] sm:$0xff]
      %v1100 = vld [vmem:[%s4 + $0x7d0] sm:$0xff]
      %v1101 = vld [vmem:[%s4 + $0x7d8] sm:$0xff]
      %v1102 = vld [vmem:[%s4 + $0x7e0] sm:$0xff]
      %v1103 = vld [vmem:[%s4 + $0x7e8] sm:$0xff]
      %v1104 = vld [vmem:[%s4 + $0x7f0] sm:$0xff]
      %v1105 = vld [vmem:[%s4 + $0x7f8] sm:$0xff]
      %1106 = vmatprep.subr.mxu0 %v851
      %1107 = vmatpush1.msra.mxu0 %v850
      %1108 = vmatprep.subr.mxu0 %v859
      %1109 = vmatpush1.msra.mxu0 %v858
      %1110 = vmatprep.subr.mxu0 %v867
      %1111 = vmatpush1.msra.mxu0 %v866
      %1112 = vmatprep.subr.mxu0 %v875
      %1113 = vmatpush1.msra.mxu0 %v874
      %1114 = vmatprep.subr.mxu0 %v883
      %1115 = vmatpush1.msra.mxu0 %v882
      %1116 = vmatprep.subr.mxu0 %v891
      %1117 = vmatpush1.msra.mxu0 %v890
      %1118 = vmatprep.subr.mxu0 %v899
      %1119 = vmatpush1.msra.mxu0 %v898
      %1120 = vmatprep.subr.mxu0 %v907
      %1121 = vmatpush1.msra.mxu0 %v906
      %1122 = vmatprep.subr.mxu0 %v915
      %1123 = vmatpush1.msra.mxu0 %v914
      %1124 = vmatprep.subr.mxu0 %v923
      %1125 = vmatpush1.msra.mxu0 %v922
      %1126 = vmatprep.subr.mxu0 %v931
      %1127 = vmatpush1.msra.mxu0 %v930
      %1128 = vmatprep.subr.mxu0 %v939
      %1129 = vmatpush1.msra.mxu0 %v938
      %1130 = vmatprep.subr.mxu0 %v947
      %1131 = vmatpush1.msra.mxu0 %v946
      %1132 = vmatprep.subr.mxu0 %v955
      %1133 = vmatpush1.msra.mxu0 %v954
      %1134 = vmatprep.subr.mxu0 %v963
      %1135 = vmatpush1.msra.mxu0 %v962
      %1136 = vmatprep.subr.mxu0 %v971
      %1137 = vmatpush1.msra.mxu0 %v970
      %1138 = vmatprep.subr.mxu0 %v979
      %1139 = vmatpush1.msra.mxu0 %v978
      %1140 = vmatprep.subr.mxu0 %v987
      %1141 = vmatpush1.msra.mxu0 %v986
      %1142 = vmatprep.subr.mxu0 %v995
      %1143 = vmatpush1.msra.mxu0 %v994
      %1144 = vmatprep.subr.mxu0 %v1003
      %1145 = vmatpush1.msra.mxu0 %v1002
      %1146 = vmatprep.subr.mxu0 %v1011
      %1147 = vmatpush1.msra.mxu0 %v1010
      %1148 = vmatprep.subr.mxu0 %v1019
      %1149 = vmatpush1.msra.mxu0 %v1018
      %1150 = vmatprep.subr.mxu0 %v1027
      %1151 = vmatpush1.msra.mxu0 %v1026
      %1152 = vmatprep.subr.mxu0 %v1035
      %1153 = vmatpush1.msra.mxu0 %v1034
      %1154 = vmatprep.subr.mxu0 %v1043
      %1155 = vmatpush1.msra.mxu0 %v1042
      %1156 = vmatprep.subr.mxu0 %v1051
      %1157 = vmatpush1.msra.mxu0 %v1050
      %1158 = vmatprep.subr.mxu0 %v1059
      %1159 = vmatpush1.msra.mxu0 %v1058
      %1160 = vmatprep.subr.mxu0 %v1067
      %1161 = vmatpush1.msra.mxu0 %v1066
      %1162 = vmatprep.subr.mxu0 %v1075
      %1163 = vmatpush1.msra.mxu0 %v1074
      %1164 = vmatprep.subr.mxu0 %v1083
      %1165 = vmatpush1.msra.mxu0 %v1082
      %1166 = vmatprep.subr.mxu0 %v1091
      %1167 = vmatpush1.msra.mxu0 %v1090
      %1168 = vmatprep.subr.mxu0 %v1099
      %1169 = vmatpush1.msra.mxu0 %v1098
      %1170 = vmatprep.mubr.f32.mxu0 %v564
      %1171 = vmatmul.mubr.f32.gmra.mrb[0].mxu0 %v306
      %v1172 = vpop.f32.mrb[0].mxu0
      %v1173 = vadd.f32 0.0, %v1172
      %v1174 = vpop.f32.mrb[0].mxu0
      %v1175 = vadd.f32 0.0, %v1174
      %1176 = vdwg.mxu0
      %1177 = vmatprep.subr.mxu0 %v853
      %1178 = vmatpush1.msra.mxu0 %v852
      %1179 = vmatprep.subr.mxu0 %v861
      %1180 = vmatpush1.msra.mxu0 %v860
      %1181 = vmatprep.subr.mxu0 %v869
      %1182 = vmatpush1.msra.mxu0 %v868
      %1183 = vmatprep.subr.mxu0 %v877
      %1184 = vmatpush1.msra.mxu0 %v876
      %1185 = vmatprep.subr.mxu0 %v885
      %1186 = vmatpush1.msra.mxu0 %v884
      %1187 = vmatprep.subr.mxu0 %v893
      %1188 = vmatpush1.msra.mxu0 %v892
      %1189 = vmatprep.subr.mxu0 %v901
      %1190 = vmatpush1.msra.mxu0 %v900
      %1191 = vmatprep.subr.mxu0 %v909
      %1192 = vmatpush1.msra.mxu0 %v908
      %1193 = vmatprep.subr.mxu0 %v917
      %1194 = vmatpush1.msra.mxu0 %v916
      %1195 = vmatprep.subr.mxu0 %v925
      %1196 = vmatpush1.msra.mxu0 %v924
      %1197 = vmatprep.subr.mxu0 %v933
      %1198 = vmatpush1.msra.mxu0 %v932
      %1199 = vmatprep.subr.mxu0 %v941
      %1200 = vmatpush1.msra.mxu0 %v940
      %1201 = vmatprep.subr.mxu0 %v949
      %1202 = vmatpush1.msra.mxu0 %v948
      %1203 = vmatprep.subr.mxu0 %v957
      %1204 = vmatpush1.msra.mxu0 %v956
      %1205 = vmatprep.subr.mxu0 %v965
      %1206 = vmatpush1.msra.mxu0 %v964
      %1207 = vmatprep.subr.mxu0 %v973
      %1208 = vmatpush1.msra.mxu0 %v972
      %1209 = vmatprep.subr.mxu0 %v981
      %1210 = vmatpush1.msra.mxu0 %v980
      %1211 = vmatprep.subr.mxu0 %v989
      %1212 = vmatpush1.msra.mxu0 %v988
      %1213 = vmatprep.subr.mxu0 %v997
      %1214 = vmatpush1.msra.mxu0 %v996
      %1215 = vmatprep.subr.mxu0 %v1005
      %1216 = vmatpush1.msra.mxu0 %v1004
      %1217 = vmatprep.subr.mxu0 %v1013
      %1218 = vmatpush1.msra.mxu0 %v1012
      %1219 = vmatprep.subr.mxu0 %v1021
      %1220 = vmatpush1.msra.mxu0 %v1020
      %1221 = vmatprep.subr.mxu0 %v1029
      %1222 = vmatpush1.msra.mxu0 %v1028
      %1223 = vmatprep.subr.mxu0 %v1037
      %1224 = vmatpush1.msra.mxu0 %v1036
      %1225 = vmatprep.subr.mxu0 %v1045
      %1226 = vmatpush1.msra.mxu0 %v1044
      %1227 = vmatprep.subr.mxu0 %v1053
      %1228 = vmatpush1.msra.mxu0 %v1052
      %1229 = vmatprep.subr.mxu0 %v1061
      %1230 = vmatpush1.msra.mxu0 %v1060
      %1231 = vmatprep.subr.mxu0 %v1069
      %1232 = vmatpush1.msra.mxu0 %v1068
      %1233 = vmatprep.subr.mxu0 %v1077
      %1234 = vmatpush1.msra.mxu0 %v1076
      %1235 = vmatprep.subr.mxu0 %v1085
      %1236 = vmatpush1.msra.mxu0 %v1084
      %1237 = vmatprep.subr.mxu0 %v1093
      %1238 = vmatpush1.msra.mxu0 %v1092
      %1239 = vmatprep.subr.mxu0 %v1101
      %1240 = vmatpush1.msra.mxu0 %v1100
      %1241 = vmatprep.mubr.f32.mxu0 %v564
      %1242 = vmatmul.mubr.f32.gmra.mrb[0].mxu0 %v306
      %v1243 = vpop.f32.mrb[0].mxu0
      %v1244 = vadd.f32 0.0, %v1243
      %v1245 = vpop.f32.mrb[0].mxu0
      %v1246 = vadd.f32 0.0, %v1245
      %1247 = vdwg.mxu0
      %1248 = vmatprep.subr.mxu0 %v855
      %1249 = vmatpush1.msra.mxu0 %v854
      %1250 = vmatprep.subr.mxu0 %v863
      %1251 = vmatpush1.msra.mxu0 %v862
      %1252 = vmatprep.subr.mxu0 %v871
      %1253 = vmatpush1.msra.mxu0 %v870
      %1254 = vmatprep.subr.mxu0 %v879
      %1255 = vmatpush1.msra.mxu0 %v878
      %1256 = vmatprep.subr.mxu0 %v887
      %1257 = vmatpush1.msra.mxu0 %v886
      %1258 = vmatprep.subr.mxu0 %v895
      %1259 = vmatpush1.msra.mxu0 %v894
      %1260 = vmatprep.subr.mxu0 %v903
      %1261 = vmatpush1.msra.mxu0 %v902
      %1262 = vmatprep.subr.mxu0 %v911
      %1263 = vmatpush1.msra.mxu0 %v910
      %1264 = vmatprep.subr.mxu0 %v919
      %1265 = vmatpush1.msra.mxu0 %v918
      %1266 = vmatprep.subr.mxu0 %v927
      %1267 = vmatpush1.msra.mxu0 %v926
      %1268 = vmatprep.subr.mxu0 %v935
      %1269 = vmatpush1.msra.mxu0 %v934
      %1270 = vmatprep.subr.mxu0 %v943
      %1271 = vmatpush1.msra.mxu0 %v942
      %1272 = vmatprep.subr.mxu0 %v951
      %1273 = vmatpush1.msra.mxu0 %v950
      %1274 = vmatprep.subr.mxu0 %v959
      %1275 = vmatpush1.msra.mxu0 %v958
      %1276 = vmatprep.subr.mxu0 %v967
      %1277 = vmatpush1.msra.mxu0 %v966
      %1278 = vmatprep.subr.mxu0 %v975
      %1279 = vmatpush1.msra.mxu0 %v974
      %1280 = vmatprep.subr.mxu0 %v983
      %1281 = vmatpush1.msra.mxu0 %v982
      %1282 = vmatprep.subr.mxu0 %v991
      %1283 = vmatpush1.msra.mxu0 %v990
      %1284 = vmatprep.subr.mxu0 %v999
      %1285 = vmatpush1.msra.mxu0 %v998
      %1286 = vmatprep.subr.mxu0 %v1007
      %1287 = vmatpush1.msra.mxu0 %v1006
      %1288 = vmatprep.subr.mxu0 %v1015
      %1289 = vmatpush1.msra.mxu0 %v1014
      %1290 = vmatprep.subr.mxu0 %v1023
      %1291 = vmatpush1.msra.mxu0 %v1022
      %1292 = vmatprep.subr.mxu0 %v1031
      %1293 = vmatpush1.msra.mxu0 %v1030
      %1294 = vmatprep.subr.mxu0 %v1039
      %1295 = vmatpush1.msra.mxu0 %v1038
      %1296 = vmatprep.subr.mxu0 %v1047
      %1297 = vmatpush1.msra.mxu0 %v1046
      %1298 = vmatprep.subr.mxu0 %v1055
      %1299 = vmatpush1.msra.mxu0 %v1054
      %1300 = vmatprep.subr.mxu0 %v1063
      %1301 = vmatpush1.msra.mxu0 %v1062
      %1302 = vmatprep.subr.mxu0 %v1071
      %1303 = vmatpush1.msra.mxu0 %v1070
      %1304 = vmatprep.subr.mxu0 %v1079
      %1305 = vmatpush1.msra.mxu0 %v1078
      %1306 = vmatprep.subr.mxu0 %v1087
      %1307 = vmatpush1.msra.mxu0 %v1086
      %1308 = vmatprep.subr.mxu0 %v1095
      %1309 = vmatpush1.msra.mxu0 %v1094
      %1310 = vmatprep.subr.mxu0 %v1103
      %1311 = vmatpush1.msra.mxu0 %v1102
      %1312 = vmatprep.mubr.f32.mxu0 %v564
      %1313 = vmatmul.mubr.f32.gmra.mrb[0].mxu0 %v306
      %v1314 = vpop.f32.mrb[0].mxu0
      %v1315 = vadd.f32 0.0, %v1314
      %v1316 = vpop.f32.mrb[0].mxu0
      %v1317 = vadd.f32 0.0, %v1316
      %1318 = vdwg.mxu0
      %1319 = vmatprep.subr.mxu0 %v857
      %1320 = vmatpush1.msra.mxu0 %v856
      %1321 = vmatprep.subr.mxu0 %v865
      %1322 = vmatpush1.msra.mxu0 %v864
      %1323 = vmatprep.subr.mxu0 %v873
      %1324 = vmatpush1.msra.mxu0 %v872
      %1325 = vmatprep.subr.mxu0 %v881
      %1326 = vmatpush1.msra.mxu0 %v880
      %1327 = vmatprep.subr.mxu0 %v889
      %1328 = vmatpush1.msra.mxu0 %v888
      %1329 = vmatprep.subr.mxu0 %v897
      %1330 = vmatpush1.msra.mxu0 %v896
      %1331 = vmatprep.subr.mxu0 %v905
      %1332 = vmatpush1.msra.mxu0 %v904
      %1333 = vmatprep.subr.mxu0 %v913
      %1334 = vmatpush1.msra.mxu0 %v912
      %1335 = vmatprep.subr.mxu0 %v921
      %1336 = vmatpush1.msra.mxu0 %v920
      %1337 = vmatprep.subr.mxu0 %v929
      %1338 = vmatpush1.msra.mxu0 %v928
      %1339 = vmatprep.subr.mxu0 %v937
      %1340 = vmatpush1.msra.mxu0 %v936
      %1341 = vmatprep.subr.mxu0 %v945
      %1342 = vmatpush1.msra.mxu0 %v944
      %1343 = vmatprep.subr.mxu0 %v953
      %1344 = vmatpush1.msra.mxu0 %v952
      %1345 = vmatprep.subr.mxu0 %v961
      %1346 = vmatpush1.msra.mxu0 %v960
      %1347 = vmatprep.subr.mxu0 %v969
      %1348 = vmatpush1.msra.mxu0 %v968
      %1349 = vmatprep.subr.mxu0 %v977
      %1350 = vmatpush1.msra.mxu0 %v976
      %1351 = vmatprep.subr.mxu0 %v985
      %1352 = vmatpush1.msra.mxu0 %v984
      %1353 = vmatprep.subr.mxu0 %v993
      %1354 = vmatpush1.msra.mxu0 %v992
      %1355 = vmatprep.subr.mxu0 %v1001
      %1356 = vmatpush1.msra.mxu0 %v1000
      %1357 = vmatprep.subr.mxu0 %v1009
      %1358 = vmatpush1.msra.mxu0 %v1008
      %1359 = vmatprep.subr.mxu0 %v1017
      %1360 = vmatpush1.msra.mxu0 %v1016
      %1361 = vmatprep.subr.mxu0 %v1025
      %1362 = vmatpush1.msra.mxu0 %v1024
      %1363 = vmatprep.subr.mxu0 %v1033
      %1364 = vmatpush1.msra.mxu0 %v1032
      %1365 = vmatprep.subr.mxu0 %v1041
      %1366 = vmatpush1.msra.mxu0 %v1040
      %1367 = vmatprep.subr.mxu0 %v1049
      %1368 = vmatpush1.msra.mxu0 %v1048
      %1369 = vmatprep.subr.mxu0 %v1057
      %1370 = vmatpush1.msra.mxu0 %v1056
      %1371 = vmatprep.subr.mxu0 %v1065
      %1372 = vmatpush1.msra.mxu0 %v1064
      %1373 = vmatprep.subr.mxu0 %v1073
      %1374 = vmatpush1.msra.mxu0 %v1072
      %1375 = vmatprep.subr.mxu0 %v1081
      %1376 = vmatpush1.msra.mxu0 %v1080
      %1377 = vmatprep.subr.mxu0 %v1089
      %1378 = vmatpush1.msra.mxu0 %v1088
      %1379 = vmatprep.subr.mxu0 %v1097
      %1380 = vmatpush1.msra.mxu0 %v1096
      %1381 = vmatprep.subr.mxu0 %v1105
      %1382 = vmatpush1.msra.mxu0 %v1104
      %1383 = vmatprep.mubr.f32.mxu0 %v564
      %1384 = vmatmul.mubr.f32.gmra.mrb[0].mxu0 %v306
      %v1385 = vpop.f32.mrb[0].mxu0
      %v1386 = vadd.f32 0.0, %v1385
      %v1387 = vpop.f32.mrb[0].mxu0
      %v1388 = vadd.f32 0.0, %v1387
      %1389 = vdwg.mxu0
      %v1390 = vld [vmem:[%s1] sm:$0x77]
      %v1391 = vld [vmem:[%s1 + $0x8] sm:$0x77]
      %v1392 = vld [vmem:[%s1 + $0x10] sm:$0x77]
      %v1393 = vld [vmem:[%s1 + $0x18] sm:$0x77]
      %v1394 = vld [vmem:[%s2] sm:$0x77]
      %v1395 = vld [vmem:[%s2 + $0x8] sm:$0x77]
      %v1396 = vld [vmem:[%s2 + $0x10] sm:$0x77]
      %v1397 = vld [vmem:[%s2 + $0x18] sm:$0x77]
      %v1398 = vlaneseq
      %v1399 = vshrl.u32 %v1398, 7
      %v1400 = vsub.s32 0, %v1399
      %v1401 = vrot.slane %v633, %v1400
      %v1402 = vlaneseq
      %v1403 = vshrl.u32 %v1402, 7
      %v1404 = vsub.s32 0, %v1403
      %v1405 = vrot.slane %v635, %v1404
      %v1406 = vlaneseq
      %v1407 = vshrl.u32 %v1406, 7
      %v1408 = vsub.s32 0, %v1407
      %v1409 = vrot.slane %v704, %v1408
      %v1410 = vlaneseq
      %v1411 = vshrl.u32 %v1410, 7
      %v1412 = vsub.s32 0, %v1411
      %v1413 = vrot.slane %v706, %v1412
      %v1414 = vlaneseq
      %v1415 = vshrl.u32 %v1414, 7
      %v1416 = vsub.s32 0, %v1415
      %v1417 = vrot.slane %v775, %v1416
      %v1418 = vlaneseq
      %v1419 = vshrl.u32 %v1418, 7
      %v1420 = vsub.s32 0, %v1419
      %v1421 = vrot.slane %v777, %v1420
      %v1422 = vlaneseq
      %v1423 = vshrl.u32 %v1422, 7
      %v1424 = vsub.s32 0, %v1423
      %v1425 = vrot.slane %v846, %v1424
      %v1426 = vlaneseq
      %v1427 = vshrl.u32 %v1426, 7
      %v1428 = vsub.s32 0, %v1427
      %v1429 = vrot.slane %v848, %v1428
      %v1434 = vcombine.high %v1390, %v1390
      %v1435 = vcombine.high %v1391, %v1391
      %v1436 = vcombine.high %v1392, %v1392
      %v1437 = vcombine.high %v1393, %v1393
      %v1442 = vmul.f32 %v1401, %v1390
      %v1443 = vmul.f32 %v1405, %v1434
      %v1444 = vmul.f32 %v1409, %v1391
      %v1445 = vmul.f32 %v1413, %v1435
      %v1446 = vmul.f32 %v1417, %v1392
      %v1447 = vmul.f32 %v1421, %v1436
      %v1448 = vmul.f32 %v1425, %v1393
      %v1449 = vmul.f32 %v1429, %v1437
      %v1450 = vlaneseq
      %v1451 = vshrl.u32 %v1450, 7
      %v1452 = vsub.s32 0, %v1451
      %v1453 = vrot.slane %v1173, %v1452
      %v1454 = vlaneseq
      %v1455 = vshrl.u32 %v1454, 7
      %v1456 = vsub.s32 0, %v1455
      %v1457 = vrot.slane %v1175, %v1456
      %v1458 = vlaneseq
      %v1459 = vshrl.u32 %v1458, 7
      %v1460 = vsub.s32 0, %v1459
      %v1461 = vrot.slane %v1244, %v1460
      %v1462 = vlaneseq
      %v1463 = vshrl.u32 %v1462, 7
      %v1464 = vsub.s32 0, %v1463
      %v1465 = vrot.slane %v1246, %v1464
      %v1466 = vlaneseq
      %v1467 = vshrl.u32 %v1466, 7
      %v1468 = vsub.s32 0, %v1467
      %v1469 = vrot.slane %v1315, %v1468
      %v1470 = vlaneseq
      %v1471 = vshrl.u32 %v1470, 7
      %v1472 = vsub.s32 0, %v1471
      %v1473 = vrot.slane %v1317, %v1472
      %v1474 = vlaneseq
      %v1475 = vshrl.u32 %v1474, 7
      %v1476 = vsub.s32 0, %v1475
      %v1477 = vrot.slane %v1386, %v1476
      %v1478 = vlaneseq
      %v1479 = vshrl.u32 %v1478, 7
      %v1480 = vsub.s32 0, %v1479
      %v1481 = vrot.slane %v1388, %v1480
      %v1486 = vcombine.high %v1394, %v1394
      %v1487 = vcombine.high %v1395, %v1395
      %v1488 = vcombine.high %v1396, %v1396
      %v1489 = vcombine.high %v1397, %v1397
      %v1494 = vmul.f32 %v1453, %v1394
      %v1495 = vmul.f32 %v1457, %v1486
      %v1496 = vmul.f32 %v1461, %v1395
      %v1497 = vmul.f32 %v1465, %v1487
      %v1498 = vmul.f32 %v1469, %v1396
      %v1499 = vmul.f32 %v1473, %v1488
      %v1500 = vmul.f32 %v1477, %v1397
      %v1501 = vmul.f32 %v1481, %v1489
      %v1502 = vsub.f32 %v1442, %v1494
      %v1503 = vsub.f32 %v1443, %v1495
      %v1504 = vsub.f32 %v1444, %v1496
      %v1505 = vsub.f32 %v1445, %v1497
      %v1506 = vsub.f32 %v1446, %v1498
      %v1507 = vsub.f32 %v1447, %v1499
      %v1508 = vsub.f32 %v1448, %v1500
      %v1509 = vsub.f32 %v1449, %v1501
      %v1510 = vadd.f32 %v1502, 0.0
      %v1511 = vadd.f32 %v1503, 0.0
      %v1512 = vadd.f32 %v1504, 0.0
      %v1513 = vadd.f32 %v1505, 0.0
      %v1514 = vadd.f32 %v1506, 0.0
      %v1515 = vadd.f32 %v1507, 0.0
      %v1516 = vadd.f32 %v1508, 0.0
      %v1517 = vadd.f32 %v1509, 0.0
      %v1518 = vmul.f32 %v1401, %v1394
      %v1519 = vmul.f32 %v1405, %v1486
      %v1520 = vmul.f32 %v1409, %v1395
      %v1521 = vmul.f32 %v1413, %v1487
      %v1522 = vmul.f32 %v1417, %v1396
      %v1523 = vmul.f32 %v1421, %v1488
      %v1524 = vmul.f32 %v1425, %v1397
      %v1525 = vmul.f32 %v1429, %v1489
      %v1526 = vmul.f32 %v1453, %v1390
      %v1527 = vmul.f32 %v1457, %v1434
      %v1528 = vmul.f32 %v1461, %v1391
      %v1529 = vmul.f32 %v1465, %v1435
      %v1530 = vmul.f32 %v1469, %v1392
      %v1531 = vmul.f32 %v1473, %v1436
      %v1532 = vmul.f32 %v1477, %v1393
      %v1533 = vmul.f32 %v1481, %v1437
      %v1534 = vadd.f32 %v1518, %v1526
      %v1535 = vadd.f32 %v1519, %v1527
      %v1536 = vadd.f32 %v1520, %v1528
      %v1537 = vadd.f32 %v1521, %v1529
      %v1538 = vadd.f32 %v1522, %v1530
      %v1539 = vadd.f32 %v1523, %v1531
      %v1540 = vadd.f32 %v1524, %v1532
      %v1541 = vadd.f32 %v1525, %v1533
      %v1542 = vadd.f32 %v1534, 0.0
      %v1543 = vadd.f32 %v1535, 0.0
      %v1544 = vadd.f32 %v1536, 0.0
      %v1545 = vadd.f32 %v1537, 0.0
      %v1546 = vadd.f32 %v1538, 0.0
      %v1547 = vadd.f32 %v1539, 0.0
      %v1548 = vadd.f32 %v1540, 0.0
      %v1549 = vadd.f32 %v1541, 0.0
      %s1550 = scalar_lea.vmem %s1, 32
      %v1551 = vld [vmem:[%s1550] sm:$0x77]
      %v1552 = vld [vmem:[%s1550 + $0x8] sm:$0x77]
      %v1553 = vld [vmem:[%s1550 + $0x10] sm:$0x77]
      %v1554 = vld [vmem:[%s1550 + $0x18] sm:$0x77]
      %s1555 = scalar_lea.vmem %s2, 32
      %v1556 = vld [vmem:[%s1555] sm:$0x77]
      %v1557 = vld [vmem:[%s1555 + $0x8] sm:$0x77]
      %v1558 = vld [vmem:[%s1555 + $0x10] sm:$0x77]
      %v1559 = vld [vmem:[%s1555 + $0x18] sm:$0x77]
      %v1560 = vlaneseq
      %v1561 = vshrl.u32 %v1560, 7
      %v1562 = vsub.s32 1, %v1561
      %v1563 = vrot.slane %v633, %v1562
      %v1564 = vlaneseq
      %v1565 = vshrl.u32 %v1564, 7
      %v1566 = vsub.s32 1, %v1565
      %v1567 = vrot.slane %v635, %v1566
      %v1568 = vlaneseq
      %v1569 = vshrl.u32 %v1568, 7
      %v1570 = vsub.s32 1, %v1569
      %v1571 = vrot.slane %v704, %v1570
      %v1572 = vlaneseq
      %v1573 = vshrl.u32 %v1572, 7
      %v1574 = vsub.s32 1, %v1573
      %v1575 = vrot.slane %v706, %v1574
      %v1576 = vlaneseq
      %v1577 = vshrl.u32 %v1576, 7
      %v1578 = vsub.s32 1, %v1577
      %v1579 = vrot.slane %v775, %v1578
      %v1580 = vlaneseq
      %v1581 = vshrl.u32 %v1580, 7
      %v1582 = vsub.s32 1, %v1581
      %v1583 = vrot.slane %v777, %v1582
      %v1584 = vlaneseq
      %v1585 = vshrl.u32 %v1584, 7
      %v1586 = vsub.s32 1, %v1585
      %v1587 = vrot.slane %v846, %v1586
      %v1588 = vlaneseq
      %v1589 = vshrl.u32 %v1588, 7
      %v1590 = vsub.s32 1, %v1589
      %v1591 = vrot.slane %v848, %v1590
      %v1596 = vcombine.high %v1551, %v1551
      %v1597 = vcombine.high %v1552, %v1552
      %v1598 = vcombine.high %v1553, %v1553
      %v1599 = vcombine.high %v1554, %v1554
      %v1604 = vmul.f32 %v1563, %v1551
      %v1605 = vmul.f32 %v1567, %v1596
      %v1606 = vmul.f32 %v1571, %v1552
      %v1607 = vmul.f32 %v1575, %v1597
      %v1608 = vmul.f32 %v1579, %v1553
      %v1609 = vmul.f32 %v1583, %v1598
      %v1610 = vmul.f32 %v1587, %v1554
      %v1611 = vmul.f32 %v1591, %v1599
      %v1612 = vlaneseq
      %v1613 = vshrl.u32 %v1612, 7
      %v1614 = vsub.s32 1, %v1613
      %v1615 = vrot.slane %v1173, %v1614
      %v1616 = vlaneseq
      %v1617 = vshrl.u32 %v1616, 7
      %v1618 = vsub.s32 1, %v1617
      %v1619 = vrot.slane %v1175, %v1618
      %v1620 = vlaneseq
      %v1621 = vshrl.u32 %v1620, 7
      %v1622 = vsub.s32 1, %v1621
      %v1623 = vrot.slane %v1244, %v1622
      %v1624 = vlaneseq
      %v1625 = vshrl.u32 %v1624, 7
      %v1626 = vsub.s32 1, %v1625
      %v1627 = vrot.slane %v1246, %v1626
      %v1628 = vlaneseq
      %v1629 = vshrl.u32 %v1628, 7
      %v1630 = vsub.s32 1, %v1629
      %v1631 = vrot.slane %v1315, %v1630
      %v1632 = vlaneseq
      %v1633 = vshrl.u32 %v1632, 7
      %v1634 = vsub.s32 1, %v1633
      %v1635 = vrot.slane %v1317, %v1634
      %v1636 = vlaneseq
      %v1637 = vshrl.u32 %v1636, 7
      %v1638 = vsub.s32 1, %v1637
      %v1639 = vrot.slane %v1386, %v1638
      %v1640 = vlaneseq
      %v1641 = vshrl.u32 %v1640, 7
      %v1642 = vsub.s32 1, %v1641
      %v1643 = vrot.slane %v1388, %v1642
      %v1648 = vcombine.high %v1556, %v1556
      %v1649 = vcombine.high %v1557, %v1557
      %v1650 = vcombine.high %v1558, %v1558
      %v1651 = vcombine.high %v1559, %v1559
      %v1656 = vmul.f32 %v1615, %v1556
      %v1657 = vmul.f32 %v1619, %v1648
      %v1658 = vmul.f32 %v1623, %v1557
      %v1659 = vmul.f32 %v1627, %v1649
      %v1660 = vmul.f32 %v1631, %v1558
      %v1661 = vmul.f32 %v1635, %v1650
      %v1662 = vmul.f32 %v1639, %v1559
      %v1663 = vmul.f32 %v1643, %v1651
      %v1664 = vsub.f32 %v1604, %v1656
      %v1665 = vsub.f32 %v1605, %v1657
      %v1666 = vsub.f32 %v1606, %v1658
      %v1667 = vsub.f32 %v1607, %v1659
      %v1668 = vsub.f32 %v1608, %v1660
      %v1669 = vsub.f32 %v1609, %v1661
      %v1670 = vsub.f32 %v1610, %v1662
      %v1671 = vsub.f32 %v1611, %v1663
      %v1672 = vadd.f32 %v1510, %v1664
      %v1673 = vadd.f32 %v1511, %v1665
      %v1674 = vadd.f32 %v1512, %v1666
      %v1675 = vadd.f32 %v1513, %v1667
      %v1676 = vadd.f32 %v1514, %v1668
      %v1677 = vadd.f32 %v1515, %v1669
      %v1678 = vadd.f32 %v1516, %v1670
      %v1679 = vadd.f32 %v1517, %v1671
      %v1680 = vmul.f32 %v1563, %v1556
      %v1681 = vmul.f32 %v1567, %v1648
      %v1682 = vmul.f32 %v1571, %v1557
      %v1683 = vmul.f32 %v1575, %v1649
      %v1684 = vmul.f32 %v1579, %v1558
      %v1685 = vmul.f32 %v1583, %v1650
      %v1686 = vmul.f32 %v1587, %v1559
      %v1687 = vmul.f32 %v1591, %v1651
      %v1688 = vmul.f32 %v1615, %v1551
      %v1689 = vmul.f32 %v1619, %v1596
      %v1690 = vmul.f32 %v1623, %v1552
      %v1691 = vmul.f32 %v1627, %v1597
      %v1692 = vmul.f32 %v1631, %v1553
      %v1693 = vmul.f32 %v1635, %v1598
      %v1694 = vmul.f32 %v1639, %v1554
      %v1695 = vmul.f32 %v1643, %v1599
      %v1696 = vadd.f32 %v1680, %v1688
      %v1697 = vadd.f32 %v1681, %v1689
      %v1698 = vadd.f32 %v1682, %v1690
      %v1699 = vadd.f32 %v1683, %v1691
      %v1700 = vadd.f32 %v1684, %v1692
      %v1701 = vadd.f32 %v1685, %v1693
      %v1702 = vadd.f32 %v1686, %v1694
      %v1703 = vadd.f32 %v1687, %v1695
      %v1704 = vadd.f32 %v1542, %v1696
      %v1705 = vadd.f32 %v1543, %v1697
      %v1706 = vadd.f32 %v1544, %v1698
      %v1707 = vadd.f32 %v1545, %v1699
      %v1708 = vadd.f32 %v1546, %v1700
      %v1709 = vadd.f32 %v1547, %v1701
      %v1710 = vadd.f32 %v1548, %v1702
      %v1711 = vadd.f32 %v1549, %v1703
      %s1712 = scalar_lea.vmem %s1, 64
      %v1713 = vld [vmem:[%s1712] sm:$0x77]
      %v1714 = vld [vmem:[%s1712 + $0x8] sm:$0x77]
      %v1715 = vld [vmem:[%s1712 + $0x10] sm:$0x77]
      %v1716 = vld [vmem:[%s1712 + $0x18] sm:$0x77]
      %s1717 = scalar_lea.vmem %s2, 64
      %v1718 = vld [vmem:[%s1717] sm:$0x77]
      %v1719 = vld [vmem:[%s1717 + $0x8] sm:$0x77]
      %v1720 = vld [vmem:[%s1717 + $0x10] sm:$0x77]
      %v1721 = vld [vmem:[%s1717 + $0x18] sm:$0x77]
      %v1722 = vlaneseq
      %v1723 = vshrl.u32 %v1722, 7
      %v1724 = vsub.s32 2, %v1723
      %v1725 = vrot.slane %v633, %v1724
      %v1726 = vlaneseq
      %v1727 = vshrl.u32 %v1726, 7
      %v1728 = vsub.s32 2, %v1727
      %v1729 = vrot.slane %v635, %v1728
      %v1730 = vlaneseq
      %v1731 = vshrl.u32 %v1730, 7
      %v1732 = vsub.s32 2, %v1731
      %v1733 = vrot.slane %v704, %v1732
      %v1734 = vlaneseq
      %v1735 = vshrl.u32 %v1734, 7
      %v1736 = vsub.s32 2, %v1735
      %v1737 = vrot.slane %v706, %v1736
      %v1738 = vlaneseq
      %v1739 = vshrl.u32 %v1738, 7
      %v1740 = vsub.s32 2, %v1739
      %v1741 = vrot.slane %v775, %v1740
      %v1742 = vlaneseq
      %v1743 = vshrl.u32 %v1742, 7
      %v1744 = vsub.s32 2, %v1743
      %v1745 = vrot.slane %v777, %v1744
      %v1746 = vlaneseq
      %v1747 = vshrl.u32 %v1746, 7
      %v1748 = vsub.s32 2, %v1747
      %v1749 = vrot.slane %v846, %v1748
      %v1750 = vlaneseq
      %v1751 = vshrl.u32 %v1750, 7
      %v1752 = vsub.s32 2, %v1751
      %v1753 = vrot.slane %v848, %v1752
      %v1758 = vcombine.high %v1713, %v1713
      %v1759 = vcombine.high %v1714, %v1714
      %v1760 = vcombine.high %v1715, %v1715
      %v1761 = vcombine.high %v1716, %v1716
      %v1766 = vmul.f32 %v1725, %v1713
      %v1767 = vmul.f32 %v1729, %v1758
      %v1768 = vmul.f32 %v1733, %v1714
      %v1769 = vmul.f32 %v1737, %v1759
      %v1770 = vmul.f32 %v1741, %v1715
      %v1771 = vmul.f32 %v1745, %v1760
      %v1772 = vmul.f32 %v1749, %v1716
      %v1773 = vmul.f32 %v1753, %v1761
      %v1774 = vlaneseq
      %v1775 = vshrl.u32 %v1774, 7
      %v1776 = vsub.s32 2, %v1775
      %v1777 = vrot.slane %v1173, %v1776
      %v1778 = vlaneseq
      %v1779 = vshrl.u32 %v1778, 7
      %v1780 = vsub.s32 2, %v1779
      %v1781 = vrot.slane %v1175, %v1780
      %v1782 = vlaneseq
      %v1783 = vshrl.u32 %v1782, 7
      %v1784 = vsub.s32 2, %v1783
      %v1785 = vrot.slane %v1244, %v1784
      %v1786 = vlaneseq
      %v1787 = vshrl.u32 %v1786, 7
      %v1788 = vsub.s32 2, %v1787
      %v1789 = vrot.slane %v1246, %v1788
      %v1790 = vlaneseq
      %v1791 = vshrl.u32 %v1790, 7
      %v1792 = vsub.s32 2, %v1791
      %v1793 = vrot.slane %v1315, %v1792
      %v1794 = vlaneseq
      %v1795 = vshrl.u32 %v1794, 7
      %v1796 = vsub.s32 2, %v1795
      %v1797 = vrot.slane %v1317, %v1796
      %v1798 = vlaneseq
      %v1799 = vshrl.u32 %v1798, 7
      %v1800 = vsub.s32 2, %v1799
      %v1801 = vrot.slane %v1386, %v1800
      %v1802 = vlaneseq
      %v1803 = vshrl.u32 %v1802, 7
      %v1804 = vsub.s32 2, %v1803
      %v1805 = vrot.slane %v1388, %v1804
      %v1810 = vcombine.high %v1718, %v1718
      %v1811 = vcombine.high %v1719, %v1719
      %v1812 = vcombine.high %v1720, %v1720
      %v1813 = vcombine.high %v1721, %v1721
      %v1818 = vmul.f32 %v1777, %v1718
      %v1819 = vmul.f32 %v1781, %v1810
      %v1820 = vmul.f32 %v1785, %v1719
      %v1821 = vmul.f32 %v1789, %v1811
      %v1822 = vmul.f32 %v1793, %v1720
      %v1823 = vmul.f32 %v1797, %v1812
      %v1824 = vmul.f32 %v1801, %v1721
      %v1825 = vmul.f32 %v1805, %v1813
      %v1826 = vsub.f32 %v1766, %v1818
      %v1827 = vsub.f32 %v1767, %v1819
      %v1828 = vsub.f32 %v1768, %v1820
      %v1829 = vsub.f32 %v1769, %v1821
      %v1830 = vsub.f32 %v1770, %v1822
      %v1831 = vsub.f32 %v1771, %v1823
      %v1832 = vsub.f32 %v1772, %v1824
      %v1833 = vsub.f32 %v1773, %v1825
      %v1834 = vadd.f32 %v1672, %v1826
      %v1835 = vadd.f32 %v1673, %v1827
      %v1836 = vadd.f32 %v1674, %v1828
      %v1837 = vadd.f32 %v1675, %v1829
      %v1838 = vadd.f32 %v1676, %v1830
      %v1839 = vadd.f32 %v1677, %v1831
      %v1840 = vadd.f32 %v1678, %v1832
      %v1841 = vadd.f32 %v1679, %v1833
      %v1842 = vmul.f32 %v1725, %v1718
      %v1843 = vmul.f32 %v1729, %v1810
      %v1844 = vmul.f32 %v1733, %v1719
      %v1845 = vmul.f32 %v1737, %v1811
      %v1846 = vmul.f32 %v1741, %v1720
      %v1847 = vmul.f32 %v1745, %v1812
      %v1848 = vmul.f32 %v1749, %v1721
      %v1849 = vmul.f32 %v1753, %v1813
      %v1850 = vmul.f32 %v1777, %v1713
      %v1851 = vmul.f32 %v1781, %v1758
      %v1852 = vmul.f32 %v1785, %v1714
      %v1853 = vmul.f32 %v1789, %v1759
      %v1854 = vmul.f32 %v1793, %v1715
      %v1855 = vmul.f32 %v1797, %v1760
      %v1856 = vmul.f32 %v1801, %v1716
      %v1857 = vmul.f32 %v1805, %v1761
      %v1858 = vadd.f32 %v1842, %v1850
      %v1859 = vadd.f32 %v1843, %v1851
      %v1860 = vadd.f32 %v1844, %v1852
      %v1861 = vadd.f32 %v1845, %v1853
      %v1862 = vadd.f32 %v1846, %v1854
      %v1863 = vadd.f32 %v1847, %v1855
      %v1864 = vadd.f32 %v1848, %v1856
      %v1865 = vadd.f32 %v1849, %v1857
      %v1866 = vadd.f32 %v1704, %v1858
      %v1867 = vadd.f32 %v1705, %v1859
      %v1868 = vadd.f32 %v1706, %v1860
      %v1869 = vadd.f32 %v1707, %v1861
      %v1870 = vadd.f32 %v1708, %v1862
      %v1871 = vadd.f32 %v1709, %v1863
      %v1872 = vadd.f32 %v1710, %v1864
      %v1873 = vadd.f32 %v1711, %v1865
      %s1874 = scalar_lea.vmem %s1, 96
      %v1875 = vld [vmem:[%s1874] sm:$0x77]
      %v1876 = vld [vmem:[%s1874 + $0x8] sm:$0x77]
      %v1877 = vld [vmem:[%s1874 + $0x10] sm:$0x77]
      %v1878 = vld [vmem:[%s1874 + $0x18] sm:$0x77]
      %s1879 = scalar_lea.vmem %s2, 96
      %v1880 = vld [vmem:[%s1879] sm:$0x77]
      %v1881 = vld [vmem:[%s1879 + $0x8] sm:$0x77]
      %v1882 = vld [vmem:[%s1879 + $0x10] sm:$0x77]
      %v1883 = vld [vmem:[%s1879 + $0x18] sm:$0x77]
      %v1884 = vlaneseq
      %v1885 = vshrl.u32 %v1884, 7
      %v1886 = vsub.s32 3, %v1885
      %v1887 = vrot.slane %v633, %v1886
      %v1888 = vlaneseq
      %v1889 = vshrl.u32 %v1888, 7
      %v1890 = vsub.s32 3, %v1889
      %v1891 = vrot.slane %v635, %v1890
      %v1892 = vlaneseq
      %v1893 = vshrl.u32 %v1892, 7
      %v1894 = vsub.s32 3, %v1893
      %v1895 = vrot.slane %v704, %v1894
      %v1896 = vlaneseq
      %v1897 = vshrl.u32 %v1896, 7
      %v1898 = vsub.s32 3, %v1897
      %v1899 = vrot.slane %v706, %v1898
      %v1900 = vlaneseq
      %v1901 = vshrl.u32 %v1900, 7
      %v1902 = vsub.s32 3, %v1901
      %v1903 = vrot.slane %v775, %v1902
      %v1904 = vlaneseq
      %v1905 = vshrl.u32 %v1904, 7
      %v1906 = vsub.s32 3, %v1905
      %v1907 = vrot.slane %v777, %v1906
      %v1908 = vlaneseq
      %v1909 = vshrl.u32 %v1908, 7
      %v1910 = vsub.s32 3, %v1909
      %v1911 = vrot.slane %v846, %v1910
      %v1912 = vlaneseq
      %v1913 = vshrl.u32 %v1912, 7
      %v1914 = vsub.s32 3, %v1913
      %v1915 = vrot.slane %v848, %v1914
      %v1920 = vcombine.high %v1875, %v1875
      %v1921 = vcombine.high %v1876, %v1876
      %v1922 = vcombine.high %v1877, %v1877
      %v1923 = vcombine.high %v1878, %v1878
      %v1928 = vmul.f32 %v1887, %v1875
      %v1929 = vmul.f32 %v1891, %v1920
      %v1930 = vmul.f32 %v1895, %v1876
      %v1931 = vmul.f32 %v1899, %v1921
      %v1932 = vmul.f32 %v1903, %v1877
      %v1933 = vmul.f32 %v1907, %v1922
      %v1934 = vmul.f32 %v1911, %v1878
      %v1935 = vmul.f32 %v1915, %v1923
      %v1936 = vlaneseq
      %v1937 = vshrl.u32 %v1936, 7
      %v1938 = vsub.s32 3, %v1937
      %v1939 = vrot.slane %v1173, %v1938
      %v1940 = vlaneseq
      %v1941 = vshrl.u32 %v1940, 7
      %v1942 = vsub.s32 3, %v1941
      %v1943 = vrot.slane %v1175, %v1942
      %v1944 = vlaneseq
      %v1945 = vshrl.u32 %v1944, 7
      %v1946 = vsub.s32 3, %v1945
      %v1947 = vrot.slane %v1244, %v1946
      %v1948 = vlaneseq
      %v1949 = vshrl.u32 %v1948, 7
      %v1950 = vsub.s32 3, %v1949
      %v1951 = vrot.slane %v1246, %v1950
      %v1952 = vlaneseq
      %v1953 = vshrl.u32 %v1952, 7
      %v1954 = vsub.s32 3, %v1953
      %v1955 = vrot.slane %v1315, %v1954
      %v1956 = vlaneseq
      %v1957 = vshrl.u32 %v1956, 7
      %v1958 = vsub.s32 3, %v1957
      %v1959 = vrot.slane %v1317, %v1958
      %v1960 = vlaneseq
      %v1961 = vshrl.u32 %v1960, 7
      %v1962 = vsub.s32 3, %v1961
      %v1963 = vrot.slane %v1386, %v1962
      %v1964 = vlaneseq
      %v1965 = vshrl.u32 %v1964, 7
      %v1966 = vsub.s32 3, %v1965
      %v1967 = vrot.slane %v1388, %v1966
      %v1972 = vcombine.high %v1880, %v1880
      %v1973 = vcombine.high %v1881, %v1881
      %v1974 = vcombine.high %v1882, %v1882
      %v1975 = vcombine.high %v1883, %v1883
      %v1980 = vmul.f32 %v1939, %v1880
      %v1981 = vmul.f32 %v1943, %v1972
      %v1982 = vmul.f32 %v1947, %v1881
      %v1983 = vmul.f32 %v1951, %v1973
      %v1984 = vmul.f32 %v1955, %v1882
      %v1985 = vmul.f32 %v1959, %v1974
      %v1986 = vmul.f32 %v1963, %v1883
      %v1987 = vmul.f32 %v1967, %v1975
      %v1988 = vsub.f32 %v1928, %v1980
      %v1989 = vsub.f32 %v1929, %v1981
      %v1990 = vsub.f32 %v1930, %v1982
      %v1991 = vsub.f32 %v1931, %v1983
      %v1992 = vsub.f32 %v1932, %v1984
      %v1993 = vsub.f32 %v1933, %v1985
      %v1994 = vsub.f32 %v1934, %v1986
      %v1995 = vsub.f32 %v1935, %v1987
      %v1996 = vadd.f32 %v1834, %v1988
      %v1997 = vadd.f32 %v1835, %v1989
      %v1998 = vadd.f32 %v1836, %v1990
      %v1999 = vadd.f32 %v1837, %v1991
      %v2000 = vadd.f32 %v1838, %v1992
      %v2001 = vadd.f32 %v1839, %v1993
      %v2002 = vadd.f32 %v1840, %v1994
      %v2003 = vadd.f32 %v1841, %v1995
      %v2004 = vmul.f32 %v1887, %v1880
      %v2005 = vmul.f32 %v1891, %v1972
      %v2006 = vmul.f32 %v1895, %v1881
      %v2007 = vmul.f32 %v1899, %v1973
      %v2008 = vmul.f32 %v1903, %v1882
      %v2009 = vmul.f32 %v1907, %v1974
      %v2010 = vmul.f32 %v1911, %v1883
      %v2011 = vmul.f32 %v1915, %v1975
      %v2012 = vmul.f32 %v1939, %v1875
      %v2013 = vmul.f32 %v1943, %v1920
      %v2014 = vmul.f32 %v1947, %v1876
      %v2015 = vmul.f32 %v1951, %v1921
      %v2016 = vmul.f32 %v1955, %v1877
      %v2017 = vmul.f32 %v1959, %v1922
      %v2018 = vmul.f32 %v1963, %v1878
      %v2019 = vmul.f32 %v1967, %v1923
      %v2020 = vadd.f32 %v2004, %v2012
      %v2021 = vadd.f32 %v2005, %v2013
      %v2022 = vadd.f32 %v2006, %v2014
      %v2023 = vadd.f32 %v2007, %v2015
      %v2024 = vadd.f32 %v2008, %v2016
      %v2025 = vadd.f32 %v2009, %v2017
      %v2026 = vadd.f32 %v2010, %v2018
      %v2027 = vadd.f32 %v2011, %v2019
      %v2028 = vadd.f32 %v1866, %v2020
      %v2029 = vadd.f32 %v1867, %v2021
      %v2030 = vadd.f32 %v1868, %v2022
      %v2031 = vadd.f32 %v1869, %v2023
      %v2032 = vadd.f32 %v1870, %v2024
      %v2033 = vadd.f32 %v1871, %v2025
      %v2034 = vadd.f32 %v1872, %v2026
      %v2035 = vadd.f32 %v1873, %v2027
      %v2036 = vld [vmem:[%s5] sm:$0xff]
      %v2037 = vld [vmem:[%s5 + $0x8] sm:$0xff]
      %v2038 = vld [vmem:[%s5 + $0x10] sm:$0xff]
      %v2039 = vld [vmem:[%s5 + $0x18] sm:$0xff]
      %v2040 = vld [vmem:[%s5 + $0x20] sm:$0xff]
      %v2041 = vld [vmem:[%s5 + $0x28] sm:$0xff]
      %v2042 = vld [vmem:[%s5 + $0x30] sm:$0xff]
      %v2043 = vld [vmem:[%s5 + $0x38] sm:$0xff]
      %v2044 = vld [vmem:[%s5 + $0x40] sm:$0xff]
      %v2045 = vld [vmem:[%s5 + $0x48] sm:$0xff]
      %v2046 = vld [vmem:[%s5 + $0x50] sm:$0xff]
      %v2047 = vld [vmem:[%s5 + $0x58] sm:$0xff]
      %v2048 = vld [vmem:[%s5 + $0x60] sm:$0xff]
      %v2049 = vld [vmem:[%s5 + $0x68] sm:$0xff]
      %v2050 = vld [vmem:[%s5 + $0x70] sm:$0xff]
      %v2051 = vld [vmem:[%s5 + $0x78] sm:$0xff]
      %v2052 = vld [vmem:[%s5 + $0x80] sm:$0xff]
      %v2053 = vld [vmem:[%s5 + $0x88] sm:$0xff]
      %v2054 = vld [vmem:[%s5 + $0x90] sm:$0xff]
      %v2055 = vld [vmem:[%s5 + $0x98] sm:$0xff]
      %v2056 = vld [vmem:[%s5 + $0xa0] sm:$0xff]
      %v2057 = vld [vmem:[%s5 + $0xa8] sm:$0xff]
      %v2058 = vld [vmem:[%s5 + $0xb0] sm:$0xff]
      %v2059 = vld [vmem:[%s5 + $0xb8] sm:$0xff]
      %v2060 = vld [vmem:[%s5 + $0xc0] sm:$0xff]
      %v2061 = vld [vmem:[%s5 + $0xc8] sm:$0xff]
      %v2062 = vld [vmem:[%s5 + $0xd0] sm:$0xff]
      %v2063 = vld [vmem:[%s5 + $0xd8] sm:$0xff]
      %v2064 = vld [vmem:[%s5 + $0xe0] sm:$0xff]
      %v2065 = vld [vmem:[%s5 + $0xe8] sm:$0xff]
      %v2066 = vld [vmem:[%s5 + $0xf0] sm:$0xff]
      %v2067 = vld [vmem:[%s5 + $0xf8] sm:$0xff]
      %v2068 = vld [vmem:[%s5 + $0x100] sm:$0xff]
      %v2069 = vld [vmem:[%s5 + $0x108] sm:$0xff]
      %v2070 = vld [vmem:[%s5 + $0x110] sm:$0xff]
      %v2071 = vld [vmem:[%s5 + $0x118] sm:$0xff]
      %v2072 = vld [vmem:[%s5 + $0x120] sm:$0xff]
      %v2073 = vld [vmem:[%s5 + $0x128] sm:$0xff]
      %v2074 = vld [vmem:[%s5 + $0x130] sm:$0xff]
      %v2075 = vld [vmem:[%s5 + $0x138] sm:$0xff]
      %v2076 = vld [vmem:[%s5 + $0x140] sm:$0xff]
      %v2077 = vld [vmem:[%s5 + $0x148] sm:$0xff]
      %v2078 = vld [vmem:[%s5 + $0x150] sm:$0xff]
      %v2079 = vld [vmem:[%s5 + $0x158] sm:$0xff]
      %v2080 = vld [vmem:[%s5 + $0x160] sm:$0xff]
      %v2081 = vld [vmem:[%s5 + $0x168] sm:$0xff]
      %v2082 = vld [vmem:[%s5 + $0x170] sm:$0xff]
      %v2083 = vld [vmem:[%s5 + $0x178] sm:$0xff]
      %v2084 = vld [vmem:[%s5 + $0x180] sm:$0xff]
      %v2085 = vld [vmem:[%s5 + $0x188] sm:$0xff]
      %v2086 = vld [vmem:[%s5 + $0x190] sm:$0xff]
      %v2087 = vld [vmem:[%s5 + $0x198] sm:$0xff]
      %v2088 = vld [vmem:[%s5 + $0x1a0] sm:$0xff]
      %v2089 = vld [vmem:[%s5 + $0x1a8] sm:$0xff]
      %v2090 = vld [vmem:[%s5 + $0x1b0] sm:$0xff]
      %v2091 = vld [vmem:[%s5 + $0x1b8] sm:$0xff]
      %v2092 = vld [vmem:[%s5 + $0x1c0] sm:$0xff]
      %v2093 = vld [vmem:[%s5 + $0x1c8] sm:$0xff]
      %v2094 = vld [vmem:[%s5 + $0x1d0] sm:$0xff]
      %v2095 = vld [vmem:[%s5 + $0x1d8] sm:$0xff]
      %v2096 = vld [vmem:[%s5 + $0x1e0] sm:$0xff]
      %v2097 = vld [vmem:[%s5 + $0x1e8] sm:$0xff]
      %v2098 = vld [vmem:[%s5 + $0x1f0] sm:$0xff]
      %v2099 = vld [vmem:[%s5 + $0x1f8] sm:$0xff]
      %v2100 = vld [vmem:[%s5 + $0x200] sm:$0xff]
      %v2101 = vld [vmem:[%s5 + $0x208] sm:$0xff]
      %v2102 = vld [vmem:[%s5 + $0x210] sm:$0xff]
      %v2103 = vld [vmem:[%s5 + $0x218] sm:$0xff]
      %v2104 = vld [vmem:[%s5 + $0x220] sm:$0xff]
      %v2105 = vld [vmem:[%s5 + $0x228] sm:$0xff]
      %v2106 = vld [vmem:[%s5 + $0x230] sm:$0xff]
      %v2107 = vld [vmem:[%s5 + $0x238] sm:$0xff]
      %v2108 = vld [vmem:[%s5 + $0x240] sm:$0xff]
      %v2109 = vld [vmem:[%s5 + $0x248] sm:$0xff]
      %v2110 = vld [vmem:[%s5 + $0x250] sm:$0xff]
      %v2111 = vld [vmem:[%s5 + $0x258] sm:$0xff]
      %v2112 = vld [vmem:[%s5 + $0x260] sm:$0xff]
      %v2113 = vld [vmem:[%s5 + $0x268] sm:$0xff]
      %v2114 = vld [vmem:[%s5 + $0x270] sm:$0xff]
      %v2115 = vld [vmem:[%s5 + $0x278] sm:$0xff]
      %v2116 = vld [vmem:[%s5 + $0x280] sm:$0xff]
      %v2117 = vld [vmem:[%s5 + $0x288] sm:$0xff]
      %v2118 = vld [vmem:[%s5 + $0x290] sm:$0xff]
      %v2119 = vld [vmem:[%s5 + $0x298] sm:$0xff]
      %v2120 = vld [vmem:[%s5 + $0x2a0] sm:$0xff]
      %v2121 = vld [vmem:[%s5 + $0x2a8] sm:$0xff]
      %v2122 = vld [vmem:[%s5 + $0x2b0] sm:$0xff]
      %v2123 = vld [vmem:[%s5 + $0x2b8] sm:$0xff]
      %v2124 = vld [vmem:[%s5 + $0x2c0] sm:$0xff]
      %v2125 = vld [vmem:[%s5 + $0x2c8] sm:$0xff]
      %v2126 = vld [vmem:[%s5 + $0x2d0] sm:$0xff]
      %v2127 = vld [vmem:[%s5 + $0x2d8] sm:$0xff]
      %v2128 = vld [vmem:[%s5 + $0x2e0] sm:$0xff]
      %v2129 = vld [vmem:[%s5 + $0x2e8] sm:$0xff]
      %v2130 = vld [vmem:[%s5 + $0x2f0] sm:$0xff]
      %v2131 = vld [vmem:[%s5 + $0x2f8] sm:$0xff]
      %v2132 = vld [vmem:[%s5 + $0x300] sm:$0xff]
      %v2133 = vld [vmem:[%s5 + $0x308] sm:$0xff]
      %v2134 = vld [vmem:[%s5 + $0x310] sm:$0xff]
      %v2135 = vld [vmem:[%s5 + $0x318] sm:$0xff]
      %v2136 = vld [vmem:[%s5 + $0x320] sm:$0xff]
      %v2137 = vld [vmem:[%s5 + $0x328] sm:$0xff]
      %v2138 = vld [vmem:[%s5 + $0x330] sm:$0xff]
      %v2139 = vld [vmem:[%s5 + $0x338] sm:$0xff]
      %v2140 = vld [vmem:[%s5 + $0x340] sm:$0xff]
      %v2141 = vld [vmem:[%s5 + $0x348] sm:$0xff]
      %v2142 = vld [vmem:[%s5 + $0x350] sm:$0xff]
      %v2143 = vld [vmem:[%s5 + $0x358] sm:$0xff]
      %v2144 = vld [vmem:[%s5 + $0x360] sm:$0xff]
      %v2145 = vld [vmem:[%s5 + $0x368] sm:$0xff]
      %v2146 = vld [vmem:[%s5 + $0x370] sm:$0xff]
      %v2147 = vld [vmem:[%s5 + $0x378] sm:$0xff]
      %v2148 = vld [vmem:[%s5 + $0x380] sm:$0xff]
      %v2149 = vld [vmem:[%s5 + $0x388] sm:$0xff]
      %v2150 = vld [vmem:[%s5 + $0x390] sm:$0xff]
      %v2151 = vld [vmem:[%s5 + $0x398] sm:$0xff]
      %v2152 = vld [vmem:[%s5 + $0x3a0] sm:$0xff]
      %v2153 = vld [vmem:[%s5 + $0x3a8] sm:$0xff]
      %v2154 = vld [vmem:[%s5 + $0x3b0] sm:$0xff]
      %v2155 = vld [vmem:[%s5 + $0x3b8] sm:$0xff]
      %v2156 = vld [vmem:[%s5 + $0x3c0] sm:$0xff]
      %v2157 = vld [vmem:[%s5 + $0x3c8] sm:$0xff]
      %v2158 = vld [vmem:[%s5 + $0x3d0] sm:$0xff]
      %v2159 = vld [vmem:[%s5 + $0x3d8] sm:$0xff]
      %v2160 = vld [vmem:[%s5 + $0x3e0] sm:$0xff]
      %v2161 = vld [vmem:[%s5 + $0x3e8] sm:$0xff]
      %v2162 = vld [vmem:[%s5 + $0x3f0] sm:$0xff]
      %v2163 = vld [vmem:[%s5 + $0x3f8] sm:$0xff]
      %v2164 = vld [vmem:[%s5 + $0x400] sm:$0xff]
      %v2165 = vld [vmem:[%s5 + $0x408] sm:$0xff]
      %v2166 = vld [vmem:[%s5 + $0x410] sm:$0xff]
      %v2167 = vld [vmem:[%s5 + $0x418] sm:$0xff]
      %v2168 = vld [vmem:[%s5 + $0x420] sm:$0xff]
      %v2169 = vld [vmem:[%s5 + $0x428] sm:$0xff]
      %v2170 = vld [vmem:[%s5 + $0x430] sm:$0xff]
      %v2171 = vld [vmem:[%s5 + $0x438] sm:$0xff]
      %v2172 = vld [vmem:[%s5 + $0x440] sm:$0xff]
      %v2173 = vld [vmem:[%s5 + $0x448] sm:$0xff]
      %v2174 = vld [vmem:[%s5 + $0x450] sm:$0xff]
      %v2175 = vld [vmem:[%s5 + $0x458] sm:$0xff]
      %v2176 = vld [vmem:[%s5 + $0x460] sm:$0xff]
      %v2177 = vld [vmem:[%s5 + $0x468] sm:$0xff]
      %v2178 = vld [vmem:[%s5 + $0x470] sm:$0xff]
      %v2179 = vld [vmem:[%s5 + $0x478] sm:$0xff]
      %v2180 = vld [vmem:[%s5 + $0x480] sm:$0xff]
      %v2181 = vld [vmem:[%s5 + $0x488] sm:$0xff]
      %v2182 = vld [vmem:[%s5 + $0x490] sm:$0xff]
      %v2183 = vld [vmem:[%s5 + $0x498] sm:$0xff]
      %v2184 = vld [vmem:[%s5 + $0x4a0] sm:$0xff]
      %v2185 = vld [vmem:[%s5 + $0x4a8] sm:$0xff]
      %v2186 = vld [vmem:[%s5 + $0x4b0] sm:$0xff]
      %v2187 = vld [vmem:[%s5 + $0x4b8] sm:$0xff]
      %v2188 = vld [vmem:[%s5 + $0x4c0] sm:$0xff]
      %v2189 = vld [vmem:[%s5 + $0x4c8] sm:$0xff]
      %v2190 = vld [vmem:[%s5 + $0x4d0] sm:$0xff]
      %v2191 = vld [vmem:[%s5 + $0x4d8] sm:$0xff]
      %v2192 = vld [vmem:[%s5 + $0x4e0] sm:$0xff]
      %v2193 = vld [vmem:[%s5 + $0x4e8] sm:$0xff]
      %v2194 = vld [vmem:[%s5 + $0x4f0] sm:$0xff]
      %v2195 = vld [vmem:[%s5 + $0x4f8] sm:$0xff]
      %v2196 = vld [vmem:[%s5 + $0x500] sm:$0xff]
      %v2197 = vld [vmem:[%s5 + $0x508] sm:$0xff]
      %v2198 = vld [vmem:[%s5 + $0x510] sm:$0xff]
      %v2199 = vld [vmem:[%s5 + $0x518] sm:$0xff]
      %v2200 = vld [vmem:[%s5 + $0x520] sm:$0xff]
      %v2201 = vld [vmem:[%s5 + $0x528] sm:$0xff]
      %v2202 = vld [vmem:[%s5 + $0x530] sm:$0xff]
      %v2203 = vld [vmem:[%s5 + $0x538] sm:$0xff]
      %v2204 = vld [vmem:[%s5 + $0x540] sm:$0xff]
      %v2205 = vld [vmem:[%s5 + $0x548] sm:$0xff]
      %v2206 = vld [vmem:[%s5 + $0x550] sm:$0xff]
      %v2207 = vld [vmem:[%s5 + $0x558] sm:$0xff]
      %v2208 = vld [vmem:[%s5 + $0x560] sm:$0xff]
      %v2209 = vld [vmem:[%s5 + $0x568] sm:$0xff]
      %v2210 = vld [vmem:[%s5 + $0x570] sm:$0xff]
      %v2211 = vld [vmem:[%s5 + $0x578] sm:$0xff]
      %v2212 = vld [vmem:[%s5 + $0x580] sm:$0xff]
      %v2213 = vld [vmem:[%s5 + $0x588] sm:$0xff]
      %v2214 = vld [vmem:[%s5 + $0x590] sm:$0xff]
      %v2215 = vld [vmem:[%s5 + $0x598] sm:$0xff]
      %v2216 = vld [vmem:[%s5 + $0x5a0] sm:$0xff]
      %v2217 = vld [vmem:[%s5 + $0x5a8] sm:$0xff]
      %v2218 = vld [vmem:[%s5 + $0x5b0] sm:$0xff]
      %v2219 = vld [vmem:[%s5 + $0x5b8] sm:$0xff]
      %v2220 = vld [vmem:[%s5 + $0x5c0] sm:$0xff]
      %v2221 = vld [vmem:[%s5 + $0x5c8] sm:$0xff]
      %v2222 = vld [vmem:[%s5 + $0x5d0] sm:$0xff]
      %v2223 = vld [vmem:[%s5 + $0x5d8] sm:$0xff]
      %v2224 = vld [vmem:[%s5 + $0x5e0] sm:$0xff]
      %v2225 = vld [vmem:[%s5 + $0x5e8] sm:$0xff]
      %v2226 = vld [vmem:[%s5 + $0x5f0] sm:$0xff]
      %v2227 = vld [vmem:[%s5 + $0x5f8] sm:$0xff]
      %v2228 = vld [vmem:[%s5 + $0x600] sm:$0xff]
      %v2229 = vld [vmem:[%s5 + $0x608] sm:$0xff]
      %v2230 = vld [vmem:[%s5 + $0x610] sm:$0xff]
      %v2231 = vld [vmem:[%s5 + $0x618] sm:$0xff]
      %v2232 = vld [vmem:[%s5 + $0x620] sm:$0xff]
      %v2233 = vld [vmem:[%s5 + $0x628] sm:$0xff]
      %v2234 = vld [vmem:[%s5 + $0x630] sm:$0xff]
      %v2235 = vld [vmem:[%s5 + $0x638] sm:$0xff]
      %v2236 = vld [vmem:[%s5 + $0x640] sm:$0xff]
      %v2237 = vld [vmem:[%s5 + $0x648] sm:$0xff]
      %v2238 = vld [vmem:[%s5 + $0x650] sm:$0xff]
      %v2239 = vld [vmem:[%s5 + $0x658] sm:$0xff]
      %v2240 = vld [vmem:[%s5 + $0x660] sm:$0xff]
      %v2241 = vld [vmem:[%s5 + $0x668] sm:$0xff]
      %v2242 = vld [vmem:[%s5 + $0x670] sm:$0xff]
      %v2243 = vld [vmem:[%s5 + $0x678] sm:$0xff]
      %v2244 = vld [vmem:[%s5 + $0x680] sm:$0xff]
      %v2245 = vld [vmem:[%s5 + $0x688] sm:$0xff]
      %v2246 = vld [vmem:[%s5 + $0x690] sm:$0xff]
      %v2247 = vld [vmem:[%s5 + $0x698] sm:$0xff]
      %v2248 = vld [vmem:[%s5 + $0x6a0] sm:$0xff]
      %v2249 = vld [vmem:[%s5 + $0x6a8] sm:$0xff]
      %v2250 = vld [vmem:[%s5 + $0x6b0] sm:$0xff]
      %v2251 = vld [vmem:[%s5 + $0x6b8] sm:$0xff]
      %v2252 = vld [vmem:[%s5 + $0x6c0] sm:$0xff]
      %v2253 = vld [vmem:[%s5 + $0x6c8] sm:$0xff]
      %v2254 = vld [vmem:[%s5 + $0x6d0] sm:$0xff]
      %v2255 = vld [vmem:[%s5 + $0x6d8] sm:$0xff]
      %v2256 = vld [vmem:[%s5 + $0x6e0] sm:$0xff]
      %v2257 = vld [vmem:[%s5 + $0x6e8] sm:$0xff]
      %v2258 = vld [vmem:[%s5 + $0x6f0] sm:$0xff]
      %v2259 = vld [vmem:[%s5 + $0x6f8] sm:$0xff]
      %v2260 = vld [vmem:[%s5 + $0x700] sm:$0xff]
      %v2261 = vld [vmem:[%s5 + $0x708] sm:$0xff]
      %v2262 = vld [vmem:[%s5 + $0x710] sm:$0xff]
      %v2263 = vld [vmem:[%s5 + $0x718] sm:$0xff]
      %v2264 = vld [vmem:[%s5 + $0x720] sm:$0xff]
      %v2265 = vld [vmem:[%s5 + $0x728] sm:$0xff]
      %v2266 = vld [vmem:[%s5 + $0x730] sm:$0xff]
      %v2267 = vld [vmem:[%s5 + $0x738] sm:$0xff]
      %v2268 = vld [vmem:[%s5 + $0x740] sm:$0xff]
      %v2269 = vld [vmem:[%s5 + $0x748] sm:$0xff]
      %v2270 = vld [vmem:[%s5 + $0x750] sm:$0xff]
      %v2271 = vld [vmem:[%s5 + $0x758] sm:$0xff]
      %v2272 = vld [vmem:[%s5 + $0x760] sm:$0xff]
      %v2273 = vld [vmem:[%s5 + $0x768] sm:$0xff]
      %v2274 = vld [vmem:[%s5 + $0x770] sm:$0xff]
      %v2275 = vld [vmem:[%s5 + $0x778] sm:$0xff]
      %v2276 = vld [vmem:[%s5 + $0x780] sm:$0x1]
      %v2277 = vld [vmem:[%s5 + $0x788] sm:$0x1]
      %vm2278 = vcmask 531456
      %v2280 = vsel %vm2278, %v2003, 0
      %vm2282 = vcmask 1040384
      %v2284 = vsel %vm2282, %v2276, 0
      %v2287 = vsel %vm2282, %v2277, 0
      %2289 = vmatprep.subr.mxu0 %v2037
      %2290 = vmatpush1.msra.mxu0 %v2036
      %2291 = vmatprep.subr.mxu0 %v2039
      %2292 = vmatpush1.msra.mxu0 %v2038
      %2293 = vmatprep.subr.mxu0 %v2041
      %2294 = vmatpush1.msra.mxu0 %v2040
      %2295 = vmatprep.subr.mxu0 %v2043
      %2296 = vmatpush1.msra.mxu0 %v2042
      %2297 = vmatprep.subr.mxu0 %v2045
      %2298 = vmatpush1.msra.mxu0 %v2044
      %2299 = vmatprep.subr.mxu0 %v2047
      %2300 = vmatpush1.msra.mxu0 %v2046
      %2301 = vmatprep.subr.mxu0 %v2049
      %2302 = vmatpush1.msra.mxu0 %v2048
      %2303 = vmatprep.subr.mxu0 %v2051
      %2304 = vmatpush1.msra.mxu0 %v2050
      %2305 = vmatprep.subr.mxu0 %v2053
      %2306 = vmatpush1.msra.mxu0 %v2052
      %2307 = vmatprep.subr.mxu0 %v2055
      %2308 = vmatpush1.msra.mxu0 %v2054
      %2309 = vmatprep.subr.mxu0 %v2057
      %2310 = vmatpush1.msra.mxu0 %v2056
      %2311 = vmatprep.subr.mxu0 %v2059
      %2312 = vmatpush1.msra.mxu0 %v2058
      %2313 = vmatprep.subr.mxu0 %v2061
      %2314 = vmatpush1.msra.mxu0 %v2060
      %2315 = vmatprep.subr.mxu0 %v2063
      %2316 = vmatpush1.msra.mxu0 %v2062
      %2317 = vmatprep.subr.mxu0 %v2065
      %2318 = vmatpush1.msra.mxu0 %v2064
      %2319 = vmatprep.subr.mxu0 %v2067
      %2320 = vmatpush1.msra.mxu0 %v2066
      %2321 = vmatprep.subr.mxu0 %v2069
      %2322 = vmatpush1.msra.mxu0 %v2068
      %2323 = vmatprep.subr.mxu0 %v2071
      %2324 = vmatpush1.msra.mxu0 %v2070
      %2325 = vmatprep.subr.mxu0 %v2073
      %2326 = vmatpush1.msra.mxu0 %v2072
      %2327 = vmatprep.subr.mxu0 %v2075
      %2328 = vmatpush1.msra.mxu0 %v2074
      %2329 = vmatprep.subr.mxu0 %v2077
      %2330 = vmatpush1.msra.mxu0 %v2076
      %2331 = vmatprep.subr.mxu0 %v2079
      %2332 = vmatpush1.msra.mxu0 %v2078
      %2333 = vmatprep.subr.mxu0 %v2081
      %2334 = vmatpush1.msra.mxu0 %v2080
      %2335 = vmatprep.subr.mxu0 %v2083
      %2336 = vmatpush1.msra.mxu0 %v2082
      %2337 = vmatprep.subr.mxu0 %v2085
      %2338 = vmatpush1.msra.mxu0 %v2084
      %2339 = vmatprep.subr.mxu0 %v2087
      %2340 = vmatpush1.msra.mxu0 %v2086
      %2341 = vmatprep.subr.mxu0 %v2089
      %2342 = vmatpush1.msra.mxu0 %v2088
      %2343 = vmatprep.subr.mxu0 %v2091
      %2344 = vmatpush1.msra.mxu0 %v2090
      %2345 = vmatprep.subr.mxu0 %v2093
      %2346 = vmatpush1.msra.mxu0 %v2092
      %2347 = vmatprep.subr.mxu0 %v2095
      %2348 = vmatpush1.msra.mxu0 %v2094
      %2349 = vmatprep.subr.mxu0 %v2097
      %2350 = vmatpush1.msra.mxu0 %v2096
      %2351 = vmatprep.subr.mxu0 %v2099
      %2352 = vmatpush1.msra.mxu0 %v2098
      %2353 = vmatprep.mubr.f32.mxu0 %v1997
      %2354 = vmatmul.mubr.f32.gmra.mrb[0].mxu0 %v1996
      %v2355 = vpop.f32.mrb[0].mxu0
      %v2356 = vadd.f32 0.0, %v2355
      %v2357 = vpop.f32.mrb[0].mxu0
      %v2358 = vadd.f32 0.0, %v2357
      %2359 = vdwg.mxu0
      %2360 = vmatprep.subr.mxu0 %v2101
      %2361 = vmatpush1.msra.mxu0 %v2100
      %2362 = vmatprep.subr.mxu0 %v2103
      %2363 = vmatpush1.msra.mxu0 %v2102
      %2364 = vmatprep.subr.mxu0 %v2105
      %2365 = vmatpush1.msra.mxu0 %v2104
      %2366 = vmatprep.subr.mxu0 %v2107
      %2367 = vmatpush1.msra.mxu0 %v2106
      %2368 = vmatprep.subr.mxu0 %v2109
      %2369 = vmatpush1.msra.mxu0 %v2108
      %2370 = vmatprep.subr.mxu0 %v2111
      %2371 = vmatpush1.msra.mxu0 %v2110
      %2372 = vmatprep.subr.mxu0 %v2113
      %2373 = vmatpush1.msra.mxu0 %v2112
      %2374 = vmatprep.subr.mxu0 %v2115
      %2375 = vmatpush1.msra.mxu0 %v2114
      %2376 = vmatprep.subr.mxu0 %v2117
      %2377 = vmatpush1.msra.mxu0 %v2116
      %2378 = vmatprep.subr.mxu0 %v2119
      %2379 = vmatpush1.msra.mxu0 %v2118
      %2380 = vmatprep.subr.mxu0 %v2121
      %2381 = vmatpush1.msra.mxu0 %v2120
      %2382 = vmatprep.subr.mxu0 %v2123
      %2383 = vmatpush1.msra.mxu0 %v2122
      %2384 = vmatprep.subr.mxu0 %v2125
      %2385 = vmatpush1.msra.mxu0 %v2124
      %2386 = vmatprep.subr.mxu0 %v2127
      %2387 = vmatpush1.msra.mxu0 %v2126
      %2388 = vmatprep.subr.mxu0 %v2129
      %2389 = vmatpush1.msra.mxu0 %v2128
      %2390 = vmatprep.subr.mxu0 %v2131
      %2391 = vmatpush1.msra.mxu0 %v2130
      %2392 = vmatprep.subr.mxu0 %v2133
      %2393 = vmatpush1.msra.mxu0 %v2132
      %2394 = vmatprep.subr.mxu0 %v2135
      %2395 = vmatpush1.msra.mxu0 %v2134
      %2396 = vmatprep.subr.mxu0 %v2137
      %2397 = vmatpush1.msra.mxu0 %v2136
      %2398 = vmatprep.subr.mxu0 %v2139
      %2399 = vmatpush1.msra.mxu0 %v2138
      %2400 = vmatprep.subr.mxu0 %v2141
      %2401 = vmatpush1.msra.mxu0 %v2140
      %2402 = vmatprep.subr.mxu0 %v2143
      %2403 = vmatpush1.msra.mxu0 %v2142
      %2404 = vmatprep.subr.mxu0 %v2145
      %2405 = vmatpush1.msra.mxu0 %v2144
      %2406 = vmatprep.subr.mxu0 %v2147
      %2407 = vmatpush1.msra.mxu0 %v2146
      %2408 = vmatprep.subr.mxu0 %v2149
      %2409 = vmatpush1.msra.mxu0 %v2148
      %2410 = vmatprep.subr.mxu0 %v2151
      %2411 = vmatpush1.msra.mxu0 %v2150
      %2412 = vmatprep.subr.mxu0 %v2153
      %2413 = vmatpush1.msra.mxu0 %v2152
      %2414 = vmatprep.subr.mxu0 %v2155
      %2415 = vmatpush1.msra.mxu0 %v2154
      %2416 = vmatprep.subr.mxu0 %v2157
      %2417 = vmatpush1.msra.mxu0 %v2156
      %2418 = vmatprep.subr.mxu0 %v2159
      %2419 = vmatpush1.msra.mxu0 %v2158
      %2420 = vmatprep.subr.mxu0 %v2161
      %2421 = vmatpush1.msra.mxu0 %v2160
      %2422 = vmatprep.subr.mxu0 %v2163
      %2423 = vmatpush1.msra.mxu0 %v2162
      %2424 = vmatprep.mubr.f32.mxu0 %v1999
      %2425 = vmatmul.mubr.f32.gmra.mrb[0].mxu0 %v1998
      %v2426 = vpop.f32.mrb[0].mxu0
      %v2427 = vadd.f32 %v2356, %v2426
      %v2428 = vpop.f32.mrb[0].mxu0
      %v2429 = vadd.f32 %v2358, %v2428
      %2430 = vdwg.mxu0
      %2431 = vmatprep.subr.mxu0 %v2165
      %2432 = vmatpush1.msra.mxu0 %v2164
      %2433 = vmatprep.subr.mxu0 %v2167
      %2434 = vmatpush1.msra.mxu0 %v2166
      %2435 = vmatprep.subr.mxu0 %v2169
      %2436 = vmatpush1.msra.mxu0 %v2168
      %2437 = vmatprep.subr.mxu0 %v2171
      %2438 = vmatpush1.msra.mxu0 %v2170
      %2439 = vmatprep.subr.mxu0 %v2173
      %2440 = vmatpush1.msra.mxu0 %v2172
      %2441 = vmatprep.subr.mxu0 %v2175
      %2442 = vmatpush1.msra.mxu0 %v2174
      %2443 = vmatprep.subr.mxu0 %v2177
      %2444 = vmatpush1.msra.mxu0 %v2176
      %2445 = vmatprep.subr.mxu0 %v2179
      %2446 = vmatpush1.msra.mxu0 %v2178
      %2447 = vmatprep.subr.mxu0 %v2181
      %2448 = vmatpush1.msra.mxu0 %v2180
      %2449 = vmatprep.subr.mxu0 %v2183
      %2450 = vmatpush1.msra.mxu0 %v2182
      %2451 = vmatprep.subr.mxu0 %v2185
      %2452 = vmatpush1.msra.mxu0 %v2184
      %2453 = vmatprep.subr.mxu0 %v2187
      %2454 = vmatpush1.msra.mxu0 %v2186
      %2455 = vmatprep.subr.mxu0 %v2189
      %2456 = vmatpush1.msra.mxu0 %v2188
      %2457 = vmatprep.subr.mxu0 %v2191
      %2458 = vmatpush1.msra.mxu0 %v2190
      %2459 = vmatprep.subr.mxu0 %v2193
      %2460 = vmatpush1.msra.mxu0 %v2192
      %2461 = vmatprep.subr.mxu0 %v2195
      %2462 = vmatpush1.msra.mxu0 %v2194
      %2463 = vmatprep.subr.mxu0 %v2197
      %2464 = vmatpush1.msra.mxu0 %v2196
      %2465 = vmatprep.subr.mxu0 %v2199
      %2466 = vmatpush1.msra.mxu0 %v2198
      %2467 = vmatprep.subr.mxu0 %v2201
      %2468 = vmatpush1.msra.mxu0 %v2200
      %2469 = vmatprep.subr.mxu0 %v2203
      %2470 = vmatpush1.msra.mxu0 %v2202
      %2471 = vmatprep.subr.mxu0 %v2205
      %2472 = vmatpush1.msra.mxu0 %v2204
      %2473 = vmatprep.subr.mxu0 %v2207
      %2474 = vmatpush1.msra.mxu0 %v2206
      %2475 = vmatprep.subr.mxu0 %v2209
      %2476 = vmatpush1.msra.mxu0 %v2208
      %2477 = vmatprep.subr.mxu0 %v2211
      %2478 = vmatpush1.msra.mxu0 %v2210
      %2479 = vmatprep.subr.mxu0 %v2213
      %2480 = vmatpush1.msra.mxu0 %v2212
      %2481 = vmatprep.subr.mxu0 %v2215
      %2482 = vmatpush1.msra.mxu0 %v2214
      %2483 = vmatprep.subr.mxu0 %v2217
      %2484 = vmatpush1.msra.mxu0 %v2216
      %2485 = vmatprep.subr.mxu0 %v2219
      %2486 = vmatpush1.msra.mxu0 %v2218
      %2487 = vmatprep.subr.mxu0 %v2221
      %2488 = vmatpush1.msra.mxu0 %v2220
      %2489 = vmatprep.subr.mxu0 %v2223
      %2490 = vmatpush1.msra.mxu0 %v2222
      %2491 = vmatprep.subr.mxu0 %v2225
      %2492 = vmatpush1.msra.mxu0 %v2224
      %2493 = vmatprep.subr.mxu0 %v2227
      %2494 = vmatpush1.msra.mxu0 %v2226
      %2495 = vmatprep.mubr.f32.mxu0 %v2001
      %2496 = vmatmul.mubr.f32.gmra.mrb[0].mxu0 %v2000
      %v2497 = vpop.f32.mrb[0].mxu0
      %v2498 = vadd.f32 %v2427, %v2497
      %v2499 = vpop.f32.mrb[0].mxu0
      %v2500 = vadd.f32 %v2429, %v2499
      %2501 = vdwg.mxu0
      %2502 = vmatprep.subr.mxu0 %v2229
      %2503 = vmatpush1.msra.mxu0 %v2228
      %2504 = vmatprep.subr.mxu0 %v2231
      %2505 = vmatpush1.msra.mxu0 %v2230
      %2506 = vmatprep.subr.mxu0 %v2233
      %2507 = vmatpush1.msra.mxu0 %v2232
      %2508 = vmatprep.subr.mxu0 %v2235
      %2509 = vmatpush1.msra.mxu0 %v2234
      %2510 = vmatprep.subr.mxu0 %v2237
      %2511 = vmatpush1.msra.mxu0 %v2236
      %2512 = vmatprep.subr.mxu0 %v2239
      %2513 = vmatpush1.msra.mxu0 %v2238
      %2514 = vmatprep.subr.mxu0 %v2241
      %2515 = vmatpush1.msra.mxu0 %v2240
      %2516 = vmatprep.subr.mxu0 %v2243
      %2517 = vmatpush1.msra.mxu0 %v2242
      %2518 = vmatprep.subr.mxu0 %v2245
      %2519 = vmatpush1.msra.mxu0 %v2244
      %2520 = vmatprep.subr.mxu0 %v2247
      %2521 = vmatpush1.msra.mxu0 %v2246
      %2522 = vmatprep.subr.mxu0 %v2249
      %2523 = vmatpush1.msra.mxu0 %v2248
      %2524 = vmatprep.subr.mxu0 %v2251
      %2525 = vmatpush1.msra.mxu0 %v2250
      %2526 = vmatprep.subr.mxu0 %v2253
      %2527 = vmatpush1.msra.mxu0 %v2252
      %2528 = vmatprep.subr.mxu0 %v2255
      %2529 = vmatpush1.msra.mxu0 %v2254
      %2530 = vmatprep.subr.mxu0 %v2257
      %2531 = vmatpush1.msra.mxu0 %v2256
      %2532 = vmatprep.subr.mxu0 %v2259
      %2533 = vmatpush1.msra.mxu0 %v2258
      %2534 = vmatprep.subr.mxu0 %v2261
      %2535 = vmatpush1.msra.mxu0 %v2260
      %2536 = vmatprep.subr.mxu0 %v2263
      %2537 = vmatpush1.msra.mxu0 %v2262
      %2538 = vmatprep.subr.mxu0 %v2265
      %2539 = vmatpush1.msra.mxu0 %v2264
      %2540 = vmatprep.subr.mxu0 %v2267
      %2541 = vmatpush1.msra.mxu0 %v2266
      %2542 = vmatprep.subr.mxu0 %v2269
      %2543 = vmatpush1.msra.mxu0 %v2268
      %2544 = vmatprep.subr.mxu0 %v2271
      %2545 = vmatpush1.msra.mxu0 %v2270
      %2546 = vmatprep.subr.mxu0 %v2273
      %2547 = vmatpush1.msra.mxu0 %v2272
      %2548 = vmatprep.subr.mxu0 %v2275
      %2549 = vmatpush1.msra.mxu0 %v2274
      %2550 = vmatprep.subr.mxu0 %v2287
      %2551 = vmatpush1.msra.mxu0 %v2284
      %2552 = vmatprep.subr.mxu0 0.0
      %2553 = vmatpush1.msra.mxu0 0.0
      %2554 = vmatprep.subr.mxu0 0.0
      %2555 = vmatpush1.msra.mxu0 0.0
      %2556 = vmatprep.subr.mxu0 0.0
      %2557 = vmatpush1.msra.mxu0 0.0
      %2558 = vmatprep.subr.mxu0 0.0
      %2559 = vmatpush1.msra.mxu0 0.0
      %2560 = vmatprep.subr.mxu0 0.0
      %2561 = vmatpush1.msra.mxu0 0.0
      %2562 = vmatprep.subr.mxu0 0.0
      %2563 = vmatpush1.msra.mxu0 0.0
      %2564 = vmatprep.subr.mxu0 0.0
      %2565 = vmatpush1.msra.mxu0 0.0
      %2566 = vmatprep.mubr.f32.mxu0 %v2280
      %2567 = vmatmul.mubr.f32.gmra.mrb[0].mxu0 %v2002
      %v2568 = vpop.f32.mrb[0].mxu0
      %v2569 = vadd.f32 %v2498, %v2568
      %v2570 = vpop.f32.mrb[0].mxu0
      %v2571 = vadd.f32 %v2500, %v2570
      %2572 = vdwg.mxu0
      %v2573 = vld [vmem:[%s6] sm:$0xff]
      %v2574 = vld [vmem:[%s6 + $0x8] sm:$0xff]
      %v2575 = vld [vmem:[%s6 + $0x10] sm:$0xff]
      %v2576 = vld [vmem:[%s6 + $0x18] sm:$0xff]
      %v2577 = vld [vmem:[%s6 + $0x20] sm:$0xff]
      %v2578 = vld [vmem:[%s6 + $0x28] sm:$0xff]
      %v2579 = vld [vmem:[%s6 + $0x30] sm:$0xff]
      %v2580 = vld [vmem:[%s6 + $0x38] sm:$0xff]
      %v2581 = vld [vmem:[%s6 + $0x40] sm:$0xff]
      %v2582 = vld [vmem:[%s6 + $0x48] sm:$0xff]
      %v2583 = vld [vmem:[%s6 + $0x50] sm:$0xff]
      %v2584 = vld [vmem:[%s6 + $0x58] sm:$0xff]
      %v2585 = vld [vmem:[%s6 + $0x60] sm:$0xff]
      %v2586 = vld [vmem:[%s6 + $0x68] sm:$0xff]
      %v2587 = vld [vmem:[%s6 + $0x70] sm:$0xff]
      %v2588 = vld [vmem:[%s6 + $0x78] sm:$0xff]
      %v2589 = vld [vmem:[%s6 + $0x80] sm:$0xff]
      %v2590 = vld [vmem:[%s6 + $0x88] sm:$0xff]
      %v2591 = vld [vmem:[%s6 + $0x90] sm:$0xff]
      %v2592 = vld [vmem:[%s6 + $0x98] sm:$0xff]
      %v2593 = vld [vmem:[%s6 + $0xa0] sm:$0xff]
      %v2594 = vld [vmem:[%s6 + $0xa8] sm:$0xff]
      %v2595 = vld [vmem:[%s6 + $0xb0] sm:$0xff]
      %v2596 = vld [vmem:[%s6 + $0xb8] sm:$0xff]
      %v2597 = vld [vmem:[%s6 + $0xc0] sm:$0xff]
      %v2598 = vld [vmem:[%s6 + $0xc8] sm:$0xff]
      %v2599 = vld [vmem:[%s6 + $0xd0] sm:$0xff]
      %v2600 = vld [vmem:[%s6 + $0xd8] sm:$0xff]
      %v2601 = vld [vmem:[%s6 + $0xe0] sm:$0xff]
      %v2602 = vld [vmem:[%s6 + $0xe8] sm:$0xff]
      %v2603 = vld [vmem:[%s6 + $0xf0] sm:$0xff]
      %v2604 = vld [vmem:[%s6 + $0xf8] sm:$0xff]
      %v2605 = vld [vmem:[%s6 + $0x100] sm:$0xff]
      %v2606 = vld [vmem:[%s6 + $0x108] sm:$0xff]
      %v2607 = vld [vmem:[%s6 + $0x110] sm:$0xff]
      %v2608 = vld [vmem:[%s6 + $0x118] sm:$0xff]
      %v2609 = vld [vmem:[%s6 + $0x120] sm:$0xff]
      %v2610 = vld [vmem:[%s6 + $0x128] sm:$0xff]
      %v2611 = vld [vmem:[%s6 + $0x130] sm:$0xff]
      %v2612 = vld [vmem:[%s6 + $0x138] sm:$0xff]
      %v2613 = vld [vmem:[%s6 + $0x140] sm:$0xff]
      %v2614 = vld [vmem:[%s6 + $0x148] sm:$0xff]
      %v2615 = vld [vmem:[%s6 + $0x150] sm:$0xff]
      %v2616 = vld [vmem:[%s6 + $0x158] sm:$0xff]
      %v2617 = vld [vmem:[%s6 + $0x160] sm:$0xff]
      %v2618 = vld [vmem:[%s6 + $0x168] sm:$0xff]
      %v2619 = vld [vmem:[%s6 + $0x170] sm:$0xff]
      %v2620 = vld [vmem:[%s6 + $0x178] sm:$0xff]
      %v2621 = vld [vmem:[%s6 + $0x180] sm:$0xff]
      %v2622 = vld [vmem:[%s6 + $0x188] sm:$0xff]
      %v2623 = vld [vmem:[%s6 + $0x190] sm:$0xff]
      %v2624 = vld [vmem:[%s6 + $0x198] sm:$0xff]
      %v2625 = vld [vmem:[%s6 + $0x1a0] sm:$0xff]
      %v2626 = vld [vmem:[%s6 + $0x1a8] sm:$0xff]
      %v2627 = vld [vmem:[%s6 + $0x1b0] sm:$0xff]
      %v2628 = vld [vmem:[%s6 + $0x1b8] sm:$0xff]
      %v2629 = vld [vmem:[%s6 + $0x1c0] sm:$0xff]
      %v2630 = vld [vmem:[%s6 + $0x1c8] sm:$0xff]
      %v2631 = vld [vmem:[%s6 + $0x1d0] sm:$0xff]
      %v2632 = vld [vmem:[%s6 + $0x1d8] sm:$0xff]
      %v2633 = vld [vmem:[%s6 + $0x1e0] sm:$0xff]
      %v2634 = vld [vmem:[%s6 + $0x1e8] sm:$0xff]
      %v2635 = vld [vmem:[%s6 + $0x1f0] sm:$0xff]
      %v2636 = vld [vmem:[%s6 + $0x1f8] sm:$0xff]
      %v2637 = vld [vmem:[%s6 + $0x200] sm:$0xff]
      %v2638 = vld [vmem:[%s6 + $0x208] sm:$0xff]
      %v2639 = vld [vmem:[%s6 + $0x210] sm:$0xff]
      %v2640 = vld [vmem:[%s6 + $0x218] sm:$0xff]
      %v2641 = vld [vmem:[%s6 + $0x220] sm:$0xff]
      %v2642 = vld [vmem:[%s6 + $0x228] sm:$0xff]
      %v2643 = vld [vmem:[%s6 + $0x230] sm:$0xff]
      %v2644 = vld [vmem:[%s6 + $0x238] sm:$0xff]
      %v2645 = vld [vmem:[%s6 + $0x240] sm:$0xff]
      %v2646 = vld [vmem:[%s6 + $0x248] sm:$0xff]
      %v2647 = vld [vmem:[%s6 + $0x250] sm:$0xff]
      %v2648 = vld [vmem:[%s6 + $0x258] sm:$0xff]
      %v2649 = vld [vmem:[%s6 + $0x260] sm:$0xff]
      %v2650 = vld [vmem:[%s6 + $0x268] sm:$0xff]
      %v2651 = vld [vmem:[%s6 + $0x270] sm:$0xff]
      %v2652 = vld [vmem:[%s6 + $0x278] sm:$0xff]
      %v2653 = vld [vmem:[%s6 + $0x280] sm:$0xff]
      %v2654 = vld [vmem:[%s6 + $0x288] sm:$0xff]
      %v2655 = vld [vmem:[%s6 + $0x290] sm:$0xff]
      %v2656 = vld [vmem:[%s6 + $0x298] sm:$0xff]
      %v2657 = vld [vmem:[%s6 + $0x2a0] sm:$0xff]
      %v2658 = vld [vmem:[%s6 + $0x2a8] sm:$0xff]
      %v2659 = vld [vmem:[%s6 + $0x2b0] sm:$0xff]
      %v2660 = vld [vmem:[%s6 + $0x2b8] sm:$0xff]
      %v2661 = vld [vmem:[%s6 + $0x2c0] sm:$0xff]
      %v2662 = vld [vmem:[%s6 + $0x2c8] sm:$0xff]
      %v2663 = vld [vmem:[%s6 + $0x2d0] sm:$0xff]
      %v2664 = vld [vmem:[%s6 + $0x2d8] sm:$0xff]
      %v2665 = vld [vmem:[%s6 + $0x2e0] sm:$0xff]
      %v2666 = vld [vmem:[%s6 + $0x2e8] sm:$0xff]
      %v2667 = vld [vmem:[%s6 + $0x2f0] sm:$0xff]
      %v2668 = vld [vmem:[%s6 + $0x2f8] sm:$0xff]
      %v2669 = vld [vmem:[%s6 + $0x300] sm:$0xff]
      %v2670 = vld [vmem:[%s6 + $0x308] sm:$0xff]
      %v2671 = vld [vmem:[%s6 + $0x310] sm:$0xff]
      %v2672 = vld [vmem:[%s6 + $0x318] sm:$0xff]
      %v2673 = vld [vmem:[%s6 + $0x320] sm:$0xff]
      %v2674 = vld [vmem:[%s6 + $0x328] sm:$0xff]
      %v2675 = vld [vmem:[%s6 + $0x330] sm:$0xff]
      %v2676 = vld [vmem:[%s6 + $0x338] sm:$0xff]
      %v2677 = vld [vmem:[%s6 + $0x340] sm:$0xff]
      %v2678 = vld [vmem:[%s6 + $0x348] sm:$0xff]
      %v2679 = vld [vmem:[%s6 + $0x350] sm:$0xff]
      %v2680 = vld [vmem:[%s6 + $0x358] sm:$0xff]
      %v2681 = vld [vmem:[%s6 + $0x360] sm:$0xff]
      %v2682 = vld [vmem:[%s6 + $0x368] sm:$0xff]
      %v2683 = vld [vmem:[%s6 + $0x370] sm:$0xff]
      %v2684 = vld [vmem:[%s6 + $0x378] sm:$0xff]
      %v2685 = vld [vmem:[%s6 + $0x380] sm:$0xff]
      %v2686 = vld [vmem:[%s6 + $0x388] sm:$0xff]
      %v2687 = vld [vmem:[%s6 + $0x390] sm:$0xff]
      %v2688 = vld [vmem:[%s6 + $0x398] sm:$0xff]
      %v2689 = vld [vmem:[%s6 + $0x3a0] sm:$0xff]
      %v2690 = vld [vmem:[%s6 + $0x3a8] sm:$0xff]
      %v2691 = vld [vmem:[%s6 + $0x3b0] sm:$0xff]
      %v2692 = vld [vmem:[%s6 + $0x3b8] sm:$0xff]
      %v2693 = vld [vmem:[%s6 + $0x3c0] sm:$0xff]
      %v2694 = vld [vmem:[%s6 + $0x3c8] sm:$0xff]
      %v2695 = vld [vmem:[%s6 + $0x3d0] sm:$0xff]
      %v2696 = vld [vmem:[%s6 + $0x3d8] sm:$0xff]
      %v2697 = vld [vmem:[%s6 + $0x3e0] sm:$0xff]
      %v2698 = vld [vmem:[%s6 + $0x3e8] sm:$0xff]
      %v2699 = vld [vmem:[%s6 + $0x3f0] sm:$0xff]
      %v2700 = vld [vmem:[%s6 + $0x3f8] sm:$0xff]
      %v2701 = vld [vmem:[%s6 + $0x400] sm:$0xff]
      %v2702 = vld [vmem:[%s6 + $0x408] sm:$0xff]
      %v2703 = vld [vmem:[%s6 + $0x410] sm:$0xff]
      %v2704 = vld [vmem:[%s6 + $0x418] sm:$0xff]
      %v2705 = vld [vmem:[%s6 + $0x420] sm:$0xff]
      %v2706 = vld [vmem:[%s6 + $0x428] sm:$0xff]
      %v2707 = vld [vmem:[%s6 + $0x430] sm:$0xff]
      %v2708 = vld [vmem:[%s6 + $0x438] sm:$0xff]
      %v2709 = vld [vmem:[%s6 + $0x440] sm:$0xff]
      %v2710 = vld [vmem:[%s6 + $0x448] sm:$0xff]
      %v2711 = vld [vmem:[%s6 + $0x450] sm:$0xff]
      %v2712 = vld [vmem:[%s6 + $0x458] sm:$0xff]
      %v2713 = vld [vmem:[%s6 + $0x460] sm:$0xff]
      %v2714 = vld [vmem:[%s6 + $0x468] sm:$0xff]
      %v2715 = vld [vmem:[%s6 + $0x470] sm:$0xff]
      %v2716 = vld [vmem:[%s6 + $0x478] sm:$0xff]
      %v2717 = vld [vmem:[%s6 + $0x480] sm:$0xff]
      %v2718 = vld [vmem:[%s6 + $0x488] sm:$0xff]
      %v2719 = vld [vmem:[%s6 + $0x490] sm:$0xff]
      %v2720 = vld [vmem:[%s6 + $0x498] sm:$0xff]
      %v2721 = vld [vmem:[%s6 + $0x4a0] sm:$0xff]
      %v2722 = vld [vmem:[%s6 + $0x4a8] sm:$0xff]
      %v2723 = vld [vmem:[%s6 + $0x4b0] sm:$0xff]
      %v2724 = vld [vmem:[%s6 + $0x4b8] sm:$0xff]
      %v2725 = vld [vmem:[%s6 + $0x4c0] sm:$0xff]
      %v2726 = vld [vmem:[%s6 + $0x4c8] sm:$0xff]
      %v2727 = vld [vmem:[%s6 + $0x4d0] sm:$0xff]
      %v2728 = vld [vmem:[%s6 + $0x4d8] sm:$0xff]
      %v2729 = vld [vmem:[%s6 + $0x4e0] sm:$0xff]
      %v2730 = vld [vmem:[%s6 + $0x4e8] sm:$0xff]
      %v2731 = vld [vmem:[%s6 + $0x4f0] sm:$0xff]
      %v2732 = vld [vmem:[%s6 + $0x4f8] sm:$0xff]
      %v2733 = vld [vmem:[%s6 + $0x500] sm:$0xff]
      %v2734 = vld [vmem:[%s6 + $0x508] sm:$0xff]
      %v2735 = vld [vmem:[%s6 + $0x510] sm:$0xff]
      %v2736 = vld [vmem:[%s6 + $0x518] sm:$0xff]
      %v2737 = vld [vmem:[%s6 + $0x520] sm:$0xff]
      %v2738 = vld [vmem:[%s6 + $0x528] sm:$0xff]
      %v2739 = vld [vmem:[%s6 + $0x530] sm:$0xff]
      %v2740 = vld [vmem:[%s6 + $0x538] sm:$0xff]
      %v2741 = vld [vmem:[%s6 + $0x540] sm:$0xff]
      %v2742 = vld [vmem:[%s6 + $0x548] sm:$0xff]
      %v2743 = vld [vmem:[%s6 + $0x550] sm:$0xff]
      %v2744 = vld [vmem:[%s6 + $0x558] sm:$0xff]
      %v2745 = vld [vmem:[%s6 + $0x560] sm:$0xff]
      %v2746 = vld [vmem:[%s6 + $0x568] sm:$0xff]
      %v2747 = vld [vmem:[%s6 + $0x570] sm:$0xff]
      %v2748 = vld [vmem:[%s6 + $0x578] sm:$0xff]
      %v2749 = vld [vmem:[%s6 + $0x580] sm:$0xff]
      %v2750 = vld [vmem:[%s6 + $0x588] sm:$0xff]
      %v2751 = vld [vmem:[%s6 + $0x590] sm:$0xff]
      %v2752 = vld [vmem:[%s6 + $0x598] sm:$0xff]
      %v2753 = vld [vmem:[%s6 + $0x5a0] sm:$0xff]
      %v2754 = vld [vmem:[%s6 + $0x5a8] sm:$0xff]
      %v2755 = vld [vmem:[%s6 + $0x5b0] sm:$0xff]
      %v2756 = vld [vmem:[%s6 + $0x5b8] sm:$0xff]
      %v2757 = vld [vmem:[%s6 + $0x5c0] sm:$0xff]
      %v2758 = vld [vmem:[%s6 + $0x5c8] sm:$0xff]
      %v2759 = vld [vmem:[%s6 + $0x5d0] sm:$0xff]
      %v2760 = vld [vmem:[%s6 + $0x5d8] sm:$0xff]
      %v2761 = vld [vmem:[%s6 + $0x5e0] sm:$0xff]
      %v2762 = vld [vmem:[%s6 + $0x5e8] sm:$0xff]
      %v2763 = vld [vmem:[%s6 + $0x5f0] sm:$0xff]
      %v2764 = vld [vmem:[%s6 + $0x5f8] sm:$0xff]
      %v2765 = vld [vmem:[%s6 + $0x600] sm:$0xff]
      %v2766 = vld [vmem:[%s6 + $0x608] sm:$0xff]
      %v2767 = vld [vmem:[%s6 + $0x610] sm:$0xff]
      %v2768 = vld [vmem:[%s6 + $0x618] sm:$0xff]
      %v2769 = vld [vmem:[%s6 + $0x620] sm:$0xff]
      %v2770 = vld [vmem:[%s6 + $0x628] sm:$0xff]
      %v2771 = vld [vmem:[%s6 + $0x630] sm:$0xff]
      %v2772 = vld [vmem:[%s6 + $0x638] sm:$0xff]
      %v2773 = vld [vmem:[%s6 + $0x640] sm:$0xff]
      %v2774 = vld [vmem:[%s6 + $0x648] sm:$0xff]
      %v2775 = vld [vmem:[%s6 + $0x650] sm:$0xff]
      %v2776 = vld [vmem:[%s6 + $0x658] sm:$0xff]
      %v2777 = vld [vmem:[%s6 + $0x660] sm:$0xff]
      %v2778 = vld [vmem:[%s6 + $0x668] sm:$0xff]
      %v2779 = vld [vmem:[%s6 + $0x670] sm:$0xff]
      %v2780 = vld [vmem:[%s6 + $0x678] sm:$0xff]
      %v2781 = vld [vmem:[%s6 + $0x680] sm:$0xff]
      %v2782 = vld [vmem:[%s6 + $0x688] sm:$0xff]
      %v2783 = vld [vmem:[%s6 + $0x690] sm:$0xff]
      %v2784 = vld [vmem:[%s6 + $0x698] sm:$0xff]
      %v2785 = vld [vmem:[%s6 + $0x6a0] sm:$0xff]
      %v2786 = vld [vmem:[%s6 + $0x6a8] sm:$0xff]
      %v2787 = vld [vmem:[%s6 + $0x6b0] sm:$0xff]
      %v2788 = vld [vmem:[%s6 + $0x6b8] sm:$0xff]
      %v2789 = vld [vmem:[%s6 + $0x6c0] sm:$0xff]
      %v2790 = vld [vmem:[%s6 + $0x6c8] sm:$0xff]
      %v2791 = vld [vmem:[%s6 + $0x6d0] sm:$0xff]
      %v2792 = vld [vmem:[%s6 + $0x6d8] sm:$0xff]
      %v2793 = vld [vmem:[%s6 + $0x6e0] sm:$0xff]
      %v2794 = vld [vmem:[%s6 + $0x6e8] sm:$0xff]
      %v2795 = vld [vmem:[%s6 + $0x6f0] sm:$0xff]
      %v2796 = vld [vmem:[%s6 + $0x6f8] sm:$0xff]
      %v2797 = vld [vmem:[%s6 + $0x700] sm:$0xff]
      %v2798 = vld [vmem:[%s6 + $0x708] sm:$0xff]
      %v2799 = vld [vmem:[%s6 + $0x710] sm:$0xff]
      %v2800 = vld [vmem:[%s6 + $0x718] sm:$0xff]
      %v2801 = vld [vmem:[%s6 + $0x720] sm:$0xff]
      %v2802 = vld [vmem:[%s6 + $0x728] sm:$0xff]
      %v2803 = vld [vmem:[%s6 + $0x730] sm:$0xff]
      %v2804 = vld [vmem:[%s6 + $0x738] sm:$0xff]
      %v2805 = vld [vmem:[%s6 + $0x740] sm:$0xff]
      %v2806 = vld [vmem:[%s6 + $0x748] sm:$0xff]
      %v2807 = vld [vmem:[%s6 + $0x750] sm:$0xff]
      %v2808 = vld [vmem:[%s6 + $0x758] sm:$0xff]
      %v2809 = vld [vmem:[%s6 + $0x760] sm:$0xff]
      %v2810 = vld [vmem:[%s6 + $0x768] sm:$0xff]
      %v2811 = vld [vmem:[%s6 + $0x770] sm:$0xff]
      %v2812 = vld [vmem:[%s6 + $0x778] sm:$0xff]
      %v2813 = vld [vmem:[%s6 + $0x780] sm:$0x1]
      %v2814 = vld [vmem:[%s6 + $0x788] sm:$0x1]
      %v2816 = vsel %vm2278, %v2035, 0
      %v2819 = vsel %vm2282, %v2813, 0
      %v2822 = vsel %vm2282, %v2814, 0
      %2824 = vmatprep.subr.mxu0 %v2574
      %2825 = vmatpush1.msra.mxu0 %v2573
      %2826 = vmatprep.subr.mxu0 %v2576
      %2827 = vmatpush1.msra.mxu0 %v2575
      %2828 = vmatprep.subr.mxu0 %v2578
      %2829 = vmatpush1.msra.mxu0 %v2577
      %2830 = vmatprep.subr.mxu0 %v2580
      %2831 = vmatpush1.msra.mxu0 %v2579
      %2832 = vmatprep.subr.mxu0 %v2582
      %2833 = vmatpush1.msra.mxu0 %v2581
      %2834 = vmatprep.subr.mxu0 %v2584
      %2835 = vmatpush1.msra.mxu0 %v2583
      %2836 = vmatprep.subr.mxu0 %v2586
      %2837 = vmatpush1.msra.mxu0 %v2585
      %2838 = vmatprep.subr.mxu0 %v2588
      %2839 = vmatpush1.msra.mxu0 %v2587
      %2840 = vmatprep.subr.mxu0 %v2590
      %2841 = vmatpush1.msra.mxu0 %v2589
      %2842 = vmatprep.subr.mxu0 %v2592
      %2843 = vmatpush1.msra.mxu0 %v2591
      %2844 = vmatprep.subr.mxu0 %v2594
      %2845 = vmatpush1.msra.mxu0 %v2593
      %2846 = vmatprep.subr.mxu0 %v2596
      %2847 = vmatpush1.msra.mxu0 %v2595
      %2848 = vmatprep.subr.mxu0 %v2598
      %2849 = vmatpush1.msra.mxu0 %v2597
      %2850 = vmatprep.subr.mxu0 %v2600
      %2851 = vmatpush1.msra.mxu0 %v2599
      %2852 = vmatprep.subr.mxu0 %v2602
      %2853 = vmatpush1.msra.mxu0 %v2601
      %2854 = vmatprep.subr.mxu0 %v2604
      %2855 = vmatpush1.msra.mxu0 %v2603
      %2856 = vmatprep.subr.mxu0 %v2606
      %2857 = vmatpush1.msra.mxu0 %v2605
      %2858 = vmatprep.subr.mxu0 %v2608
      %2859 = vmatpush1.msra.mxu0 %v2607
      %2860 = vmatprep.subr.mxu0 %v2610
      %2861 = vmatpush1.msra.mxu0 %v2609
      %2862 = vmatprep.subr.mxu0 %v2612
      %2863 = vmatpush1.msra.mxu0 %v2611
      %2864 = vmatprep.subr.mxu0 %v2614
      %2865 = vmatpush1.msra.mxu0 %v2613
      %2866 = vmatprep.subr.mxu0 %v2616
      %2867 = vmatpush1.msra.mxu0 %v2615
      %2868 = vmatprep.subr.mxu0 %v2618
      %2869 = vmatpush1.msra.mxu0 %v2617
      %2870 = vmatprep.subr.mxu0 %v2620
      %2871 = vmatpush1.msra.mxu0 %v2619
      %2872 = vmatprep.subr.mxu0 %v2622
      %2873 = vmatpush1.msra.mxu0 %v2621
      %2874 = vmatprep.subr.mxu0 %v2624
      %2875 = vmatpush1.msra.mxu0 %v2623
      %2876 = vmatprep.subr.mxu0 %v2626
      %2877 = vmatpush1.msra.mxu0 %v2625
      %2878 = vmatprep.subr.mxu0 %v2628
      %2879 = vmatpush1.msra.mxu0 %v2627
      %2880 = vmatprep.subr.mxu0 %v2630
      %2881 = vmatpush1.msra.mxu0 %v2629
      %2882 = vmatprep.subr.mxu0 %v2632
      %2883 = vmatpush1.msra.mxu0 %v2631
      %2884 = vmatprep.subr.mxu0 %v2634
      %2885 = vmatpush1.msra.mxu0 %v2633
      %2886 = vmatprep.subr.mxu0 %v2636
      %2887 = vmatpush1.msra.mxu0 %v2635
      %2888 = vmatprep.mubr.f32.mxu0 %v2029
      %2889 = vmatmul.mubr.f32.gmra.mrb[0].mxu0 %v2028
      %v2890 = vpop.f32.mrb[0].mxu0
      %v2891 = vadd.f32 0.0, %v2890
      %v2892 = vpop.f32.mrb[0].mxu0
      %v2893 = vadd.f32 0.0, %v2892
      %2894 = vdwg.mxu0
      %2895 = vmatprep.subr.mxu0 %v2638
      %2896 = vmatpush1.msra.mxu0 %v2637
      %2897 = vmatprep.subr.mxu0 %v2640
      %2898 = vmatpush1.msra.mxu0 %v2639
      %2899 = vmatprep.subr.mxu0 %v2642
      %2900 = vmatpush1.msra.mxu0 %v2641
      %2901 = vmatprep.subr.mxu0 %v2644
      %2902 = vmatpush1.msra.mxu0 %v2643
      %2903 = vmatprep.subr.mxu0 %v2646
      %2904 = vmatpush1.msra.mxu0 %v2645
      %2905 = vmatprep.subr.mxu0 %v2648
      %2906 = vmatpush1.msra.mxu0 %v2647
      %2907 = vmatprep.subr.mxu0 %v2650
      %2908 = vmatpush1.msra.mxu0 %v2649
      %2909 = vmatprep.subr.mxu0 %v2652
      %2910 = vmatpush1.msra.mxu0 %v2651
      %2911 = vmatprep.subr.mxu0 %v2654
      %2912 = vmatpush1.msra.mxu0 %v2653
      %2913 = vmatprep.subr.mxu0 %v2656
      %2914 = vmatpush1.msra.mxu0 %v2655
      %2915 = vmatprep.subr.mxu0 %v2658
      %2916 = vmatpush1.msra.mxu0 %v2657
      %2917 = vmatprep.subr.mxu0 %v2660
      %2918 = vmatpush1.msra.mxu0 %v2659
      %2919 = vmatprep.subr.mxu0 %v2662
      %2920 = vmatpush1.msra.mxu0 %v2661
      %2921 = vmatprep.subr.mxu0 %v2664
      %2922 = vmatpush1.msra.mxu0 %v2663
      %2923 = vmatprep.subr.mxu0 %v2666
      %2924 = vmatpush1.msra.mxu0 %v2665
      %2925 = vmatprep.subr.mxu0 %v2668
      %2926 = vmatpush1.msra.mxu0 %v2667
      %2927 = vmatprep.subr.mxu0 %v2670
      %2928 = vmatpush1.msra.mxu0 %v2669
      %2929 = vmatprep.subr.mxu0 %v2672
      %2930 = vmatpush1.msra.mxu0 %v2671
      %2931 = vmatprep.subr.mxu0 %v2674
      %2932 = vmatpush1.msra.mxu0 %v2673
      %2933 = vmatprep.subr.mxu0 %v2676
      %2934 = vmatpush1.msra.mxu0 %v2675
      %2935 = vmatprep.subr.mxu0 %v2678
      %2936 = vmatpush1.msra.mxu0 %v2677
      %2937 = vmatprep.subr.mxu0 %v2680
      %2938 = vmatpush1.msra.mxu0 %v2679
      %2939 = vmatprep.subr.mxu0 %v2682
      %2940 = vmatpush1.msra.mxu0 %v2681
      %2941 = vmatprep.subr.mxu0 %v2684
      %2942 = vmatpush1.msra.mxu0 %v2683
      %2943 = vmatprep.subr.mxu0 %v2686
      %2944 = vmatpush1.msra.mxu0 %v2685
      %2945 = vmatprep.subr.mxu0 %v2688
      %2946 = vmatpush1.msra.mxu0 %v2687
      %2947 = vmatprep.subr.mxu0 %v2690
      %2948 = vmatpush1.msra.mxu0 %v2689
      %2949 = vmatprep.subr.mxu0 %v2692
      %2950 = vmatpush1.msra.mxu0 %v2691
      %2951 = vmatprep.subr.mxu0 %v2694
      %2952 = vmatpush1.msra.mxu0 %v2693
      %2953 = vmatprep.subr.mxu0 %v2696
      %2954 = vmatpush1.msra.mxu0 %v2695
      %2955 = vmatprep.subr.mxu0 %v2698
      %2956 = vmatpush1.msra.mxu0 %v2697
      %2957 = vmatprep.subr.mxu0 %v2700
      %2958 = vmatpush1.msra.mxu0 %v2699
      %2959 = vmatprep.mubr.f32.mxu0 %v2031
      %2960 = vmatmul.mubr.f32.gmra.mrb[0].mxu0 %v2030
      %v2961 = vpop.f32.mrb[0].mxu0
      %v2962 = vadd.f32 %v2891, %v2961
      %v2963 = vpop.f32.mrb[0].mxu0
      %v2964 = vadd.f32 %v2893, %v2963
      %2965 = vdwg.mxu0
      %2966 = vmatprep.subr.mxu0 %v2702
      %2967 = vmatpush1.msra.mxu0 %v2701
      %2968 = vmatprep.subr.mxu0 %v2704
      %2969 = vmatpush1.msra.mxu0 %v2703
      %2970 = vmatprep.subr.mxu0 %v2706
      %2971 = vmatpush1.msra.mxu0 %v2705
      %2972 = vmatprep.subr.mxu0 %v2708
      %2973 = vmatpush1.msra.mxu0 %v2707
      %2974 = vmatprep.subr.mxu0 %v2710
      %2975 = vmatpush1.msra.mxu0 %v2709
      %2976 = vmatprep.subr.mxu0 %v2712
      %2977 = vmatpush1.msra.mxu0 %v2711
      %2978 = vmatprep.subr.mxu0 %v2714
      %2979 = vmatpush1.msra.mxu0 %v2713
      %2980 = vmatprep.subr.mxu0 %v2716
      %2981 = vmatpush1.msra.mxu0 %v2715
      %2982 = vmatprep.subr.mxu0 %v2718
      %2983 = vmatpush1.msra.mxu0 %v2717
      %2984 = vmatprep.subr.mxu0 %v2720
      %2985 = vmatpush1.msra.mxu0 %v2719
      %2986 = vmatprep.subr.mxu0 %v2722
      %2987 = vmatpush1.msra.mxu0 %v2721
      %2988 = vmatprep.subr.mxu0 %v2724
      %2989 = vmatpush1.msra.mxu0 %v2723
      %2990 = vmatprep.subr.mxu0 %v2726
      %2991 = vmatpush1.msra.mxu0 %v2725
      %2992 = vmatprep.subr.mxu0 %v2728
      %2993 = vmatpush1.msra.mxu0 %v2727
      %2994 = vmatprep.subr.mxu0 %v2730
      %2995 = vmatpush1.msra.mxu0 %v2729
      %2996 = vmatprep.subr.mxu0 %v2732
      %2997 = vmatpush1.msra.mxu0 %v2731
      %2998 = vmatprep.subr.mxu0 %v2734
      %2999 = vmatpush1.msra.mxu0 %v2733
      %3000 = vmatprep.subr.mxu0 %v2736
      %3001 = vmatpush1.msra.mxu0 %v2735
      %3002 = vmatprep.subr.mxu0 %v2738
      %3003 = vmatpush1.msra.mxu0 %v2737
      %3004 = vmatprep.subr.mxu0 %v2740
      %3005 = vmatpush1.msra.mxu0 %v2739
      %3006 = vmatprep.subr.mxu0 %v2742
      %3007 = vmatpush1.msra.mxu0 %v2741
      %3008 = vmatprep.subr.mxu0 %v2744
      %3009 = vmatpush1.msra.mxu0 %v2743
      %3010 = vmatprep.subr.mxu0 %v2746
      %3011 = vmatpush1.msra.mxu0 %v2745
      %3012 = vmatprep.subr.mxu0 %v2748
      %3013 = vmatpush1.msra.mxu0 %v2747
      %3014 = vmatprep.subr.mxu0 %v2750
      %3015 = vmatpush1.msra.mxu0 %v2749
      %3016 = vmatprep.subr.mxu0 %v2752
      %3017 = vmatpush1.msra.mxu0 %v2751
      %3018 = vmatprep.subr.mxu0 %v2754
      %3019 = vmatpush1.msra.mxu0 %v2753
      %3020 = vmatprep.subr.mxu0 %v2756
      %3021 = vmatpush1.msra.mxu0 %v2755
      %3022 = vmatprep.subr.mxu0 %v2758
      %3023 = vmatpush1.msra.mxu0 %v2757
      %3024 = vmatprep.subr.mxu0 %v2760
      %3025 = vmatpush1.msra.mxu0 %v2759
      %3026 = vmatprep.subr.mxu0 %v2762
      %3027 = vmatpush1.msra.mxu0 %v2761
      %3028 = vmatprep.subr.mxu0 %v2764
      %3029 = vmatpush1.msra.mxu0 %v2763
      %3030 = vmatprep.mubr.f32.mxu0 %v2033
      %3031 = vmatmul.mubr.f32.gmra.mrb[0].mxu0 %v2032
      %v3032 = vpop.f32.mrb[0].mxu0
      %v3033 = vadd.f32 %v2962, %v3032
      %v3034 = vpop.f32.mrb[0].mxu0
      %v3035 = vadd.f32 %v2964, %v3034
      %3036 = vdwg.mxu0
      %3037 = vmatprep.subr.mxu0 %v2766
      %3038 = vmatpush1.msra.mxu0 %v2765
      %3039 = vmatprep.subr.mxu0 %v2768
      %3040 = vmatpush1.msra.mxu0 %v2767
      %3041 = vmatprep.subr.mxu0 %v2770
      %3042 = vmatpush1.msra.mxu0 %v2769
      %3043 = vmatprep.subr.mxu0 %v2772
      %3044 = vmatpush1.msra.mxu0 %v2771
      %3045 = vmatprep.subr.mxu0 %v2774
      %3046 = vmatpush1.msra.mxu0 %v2773
      %3047 = vmatprep.subr.mxu0 %v2776
      %3048 = vmatpush1.msra.mxu0 %v2775
      %3049 = vmatprep.subr.mxu0 %v2778
      %3050 = vmatpush1.msra.mxu0 %v2777
      %3051 = vmatprep.subr.mxu0 %v2780
      %3052 = vmatpush1.msra.mxu0 %v2779
      %3053 = vmatprep.subr.mxu0 %v2782
      %3054 = vmatpush1.msra.mxu0 %v2781
      %3055 = vmatprep.subr.mxu0 %v2784
      %3056 = vmatpush1.msra.mxu0 %v2783
      %3057 = vmatprep.subr.mxu0 %v2786
      %3058 = vmatpush1.msra.mxu0 %v2785
      %3059 = vmatprep.subr.mxu0 %v2788
      %3060 = vmatpush1.msra.mxu0 %v2787
      %3061 = vmatprep.subr.mxu0 %v2790
      %3062 = vmatpush1.msra.mxu0 %v2789
      %3063 = vmatprep.subr.mxu0 %v2792
      %3064 = vmatpush1.msra.mxu0 %v2791
      %3065 = vmatprep.subr.mxu0 %v2794
      %3066 = vmatpush1.msra.mxu0 %v2793
      %3067 = vmatprep.subr.mxu0 %v2796
      %3068 = vmatpush1.msra.mxu0 %v2795
      %3069 = vmatprep.subr.mxu0 %v2798
      %3070 = vmatpush1.msra.mxu0 %v2797
      %3071 = vmatprep.subr.mxu0 %v2800
      %3072 = vmatpush1.msra.mxu0 %v2799
      %3073 = vmatprep.subr.mxu0 %v2802
      %3074 = vmatpush1.msra.mxu0 %v2801
      %3075 = vmatprep.subr.mxu0 %v2804
      %3076 = vmatpush1.msra.mxu0 %v2803
      %3077 = vmatprep.subr.mxu0 %v2806
      %3078 = vmatpush1.msra.mxu0 %v2805
      %3079 = vmatprep.subr.mxu0 %v2808
      %3080 = vmatpush1.msra.mxu0 %v2807
      %3081 = vmatprep.subr.mxu0 %v2810
      %3082 = vmatpush1.msra.mxu0 %v2809
      %3083 = vmatprep.subr.mxu0 %v2812
      %3084 = vmatpush1.msra.mxu0 %v2811
      %3085 = vmatprep.subr.mxu0 %v2822
      %3086 = vmatpush1.msra.mxu0 %v2819
      %3087 = vmatprep.subr.mxu0 0.0
      %3088 = vmatpush1.msra.mxu0 0.0
      %3089 = vmatprep.subr.mxu0 0.0
      %3090 = vmatpush1.msra.mxu0 0.0
      %3091 = vmatprep.subr.mxu0 0.0
      %3092 = vmatpush1.msra.mxu0 0.0
      %3093 = vmatprep.subr.mxu0 0.0
      %3094 = vmatpush1.msra.mxu0 0.0
      %3095 = vmatprep.subr.mxu0 0.0
      %3096 = vmatpush1.msra.mxu0 0.0
      %3097 = vmatprep.subr.mxu0 0.0
      %3098 = vmatpush1.msra.mxu0 0.0
      %3099 = vmatprep.subr.mxu0 0.0
      %3100 = vmatpush1.msra.mxu0 0.0
      %3101 = vmatprep.mubr.f32.mxu0 %v2816
      %3102 = vmatmul.mubr.f32.gmra.mrb[0].mxu0 %v2034
      %v3103 = vpop.f32.mrb[0].mxu0
      %v3104 = vadd.f32 %v3033, %v3103
      %v3105 = vpop.f32.mrb[0].mxu0
      %v3106 = vadd.f32 %v3035, %v3105
      %3107 = vdwg.mxu0
      %v3108 = vsub.f32 %v2569, %v3104
      %v3109 = vsub.f32 %v2571, %v3106
      %v3110 = vmul.f32 %v3108, 0.0010405828
      %v3111 = vmul.f32 %v3109, 0.0010405828
      %v3112 = vld [vmem:[%s7] sm:$0x7]
      %3114 = vset.pattern.permute.xlu0 0
      %3115 = vperm.xlu0 %3114, %v3112
      %v3116 = vpop.permute.xlu0 %3115
      %v3118 = vadd.f32 %v3110, %v3116
      %v3119 = vadd.f32 %v3111, %v3116
      %v3122 = vcombine.low %v3118, %v3119
      %3124 = vst [vmem:[%s305] sm:$0x77] %v3122
      %p3125 = scmp.lt.s32.totalorder %s19, 1
      %s3126 = scalar_select %p3125, %s19, 1
      %s3127 = smul.addr %s3126, 2
      %s3128 = smul.addr %s3127, 4
      %s3129 = scalar_lea.vmem %s8, %s3128
      // Predicated region
      $region53: #{tpu_custom_call.1} parent=51 // pred_check
        %p3130 = pneg %p210
      $region54: #{tpu_custom_call.1} parent=51 // pred_check_branch
        %3132 = sbr.rel (%p3130) target = $region56
      $region55: #{tpu_custom_call.1} parent=51 // pred_region
        _
      $region56: #{tpu_custom_call.1} parent=51 // pred_fallthru
        _
    $region52: #{tpu_custom_call.1} parent=5 // pred_fallthru
      _
    %p3133 = scmp.le.s32.totalorder 2, %s14
    // Predicated region
    $region57: #{tpu_custom_call.1} parent=5 // pred_check
      %p3134 = pneg %p3133
    $region58: #{tpu_custom_call.1} parent=5 // pred_check_branch
      %3136 = sbr.rel (%p3134) target = $region60
    $region59: #{tpu_custom_call.1} parent=5 // pred_region
      %s3137 = ssub.s32 %s14, 2
      // Predicated region
      $region61: #{tpu_custom_call.1} parent=59 // pred_check
        %p3138 = pneg %p216
      $region62: #{tpu_custom_call.1} parent=59 // pred_check_branch
        %3140 = sbr.rel (%p3138) target = $region64
      $region63: #{tpu_custom_call.1} parent=59 // pred_region
        %p3141 = scmp.lt.s32.totalorder %s20, 1
        %s3142 = scalar_select %p3141, %s20, 1
        %s3143 = smul.addr %s3142, 2
        %s3144 = smul.addr %s3143, 4
        %s3145 = scalar_lea.vmem %s8, %s3144
      $region64: #{tpu_custom_call.1} parent=59 // pred_fallthru
        _
    $region60: #{tpu_custom_call.1} parent=5 // pred_fallthru
      _
  $region6: #{tpu_custom_call.1} parent=0 // loop_footer
    %s18 = sadd.s32 1, %s14
  $region7: #{tpu_custom_call.1} parent=0 // loop_footer_branch
    %13 = sbr.rel target = $region3
  $region8: #{tpu_custom_call.1} parent=0 // loop_exit
    _

</llo_original>
